<compile_context>
chip_gen: v5e
topology: v5e:2x2
jax: 0.10.0
libtpu: 0.0.40
codegen_flags: <defaults>
</compile_context>

<pallas_src>
import functools
import numpy as np
import jax
import jax.numpy as jnp
from jax.experimental import pallas as pl
from jax.experimental.pallas import tpu as pltpu

C_IN = 1024              # ELMo representation dim (fixed by the module)
C_OUT = 16               # conv1 out channels
KSIZE = 3                # conv1 kernel size
TAPW = 128               # lane-group width per conv tap (vreg-aligned tap slices)
POOL_OUT = 128           # AdaptiveMaxPool1d output size
FLAT = C_OUT * POOL_OUT  # 2048
_POOL_CHUNK = 8          # rows of the masked-pool intermediate kept live at once


def _fused_kernel(x_ref, w2d_ref, bconv_ref, negmask_ref, wlin_ref, blin_ref,
                  o_ref, pooled_scr, *scratch_rest, l_out, bb, t_pad, pool_win):
    # x_ref:      (bb*t_pad, C_IN)          bf16  (batch rows stacked along axis 0)
    # w2d_ref:    (C_IN, KSIZE*TAPW)        bf16  w2d[ci, k*128+o] = w_conv[o, ci, k]
    # bconv_ref:  (1, TAPW)                 f32   conv bias, zero-padded to 128 lanes
    # negmask_ref:(neg_rows, POOL_OUT)      f32   0 inside pool window, -1e30 outside
    # wlin_ref:   (C_OUT, POOL_OUT, LPAD)   f32   wlin[c, p, l] = w_lin[l, c*128+p]
    # blin_ref:   (1, LPAD)                 f32
    # o_ref:      (1, bb, LPAD)             f32
    # pooled_scr: (C_OUT, bb, POOL_OUT)     f32 scratch (contiguous (bb,128) per channel)
    # scratch_rest: optional (l_out, TAPW)  f32 scratch (fast pool path only)
    lpad = wlin_ref.shape[-1]
    acc_scr = scratch_rest[0] if pool_win is not None else None
    negmask = negmask_ref[...] if pool_win is None else None
    bconv = bconv_ref[...]

    # ---- Conv1d(1024->16, k=3): ONE batched MXU matmul for all rows & taps ----
    y = jnp.dot(x_ref[...], w2d_ref[...],
                preferred_element_type=jnp.float32)          # (bb*t_pad, 3*128) f32

    for bi in range(bb):                                     # bb is small (<= 8)
        r0 = bi * t_pad
        # Tap sum with whole-128-lane-group slices, then ReLU6.
        acc = (y[r0 + 0:r0 + l_out, 0:TAPW]
               + y[r0 + 1:r0 + 1 + l_out, TAPW:2 * TAPW]
               + y[r0 + 2:r0 + 2 + l_out, 2 * TAPW:3 * TAPW]) + bconv
        acc = jnp.clip(acc, 0.0, 6.0)                        # (l_out, 128); lanes>=16 stay 0

        if pool_win is not None:
            # Fast exact AdaptiveMaxPool1d: l_out % 128 == 0 -> 128 disjoint equal
            # windows of size pool_win. Window p's elements are rows {p*win + j};
            # a stride-`win` read gathers element j of every window at once.
            acc_scr[...] = acc
            pooled_t = acc_scr[pl.ds(0, POOL_OUT, stride=pool_win), :]
            for j in range(1, pool_win):
                pooled_t = jnp.maximum(
                    pooled_t, acc_scr[pl.ds(j, POOL_OUT, stride=pool_win), :])
            # (POOL_OUT, 128ch) -> (16ch, POOL_OUT): lane-dense layout for the linear.
            pooled_scr[:, bi, :] = jnp.transpose(pooled_t)[0:C_OUT, :]
        else:
            # General exact path (short / irregular l_out): masked max against the
            # host-precomputed window mask. Safe because ReLU6 guarantees acc >= 0,
            # so the -1e30 sentinel never leaks into a window max.
            # TODO(synk): for large l_out not a multiple of 128, a boundary-corrected
            # segmented reduction would cut the VPU work ~128x vs this masked form.
            pooled = jnp.full((C_OUT, POOL_OUT), -1e30, jnp.float32)
            for t0 in range(0, l_out, _POOL_CHUNK):
                t1 = min(t0 + _POOL_CHUNK, l_out)
                blk = acc[t0:t1, 0:C_OUT][:, :, None] + negmask[t0:t1, None, :]
                pooled = jnp.maximum(pooled, jnp.max(blk, axis=0))
            pooled_scr[:, bi, :] = pooled

    # ---- hidden2label: logits[b,l] = sum_{c,p} pooled[c,b,p] * w_lin[l, c*128+p] ----
    # Kept in f32 (f32 LHS/RHS, f32 accumulation); no bf16 casts of pooled.
    logits = jnp.zeros((bb, lpad), jnp.float32)
    for c in range(C_OUT):
        logits = logits + jnp.dot(pooled_scr[c], wlin_ref[c],
                                  preferred_element_type=jnp.float32)
    o_ref[0] = logits + blin_ref[...]


def simple_elmo_classifier_forward(elmo_repr, w_conv, b_conv, w_lin, b_lin):
    """elmo_repr: (B, T, 1024) float32 -> logits (B, label_size)."""
    B, T, cin = elmo_repr.shape
    assert cin == C_IN
    l_out = T - KSIZE + 1
    assert l_out >= 1, "sequence length must be >= kernel_size (3) for valid Conv1d"
    label_size = w_lin.shape[0]
    lpad = ((label_size + 127) // 128) * 128          # lane-dense logits output
    t_pad = ((T + 7) // 8) * 8                        # sublane-aligned rows per batch row

    use_fast_pool = (l_out >= POOL_OUT) and (l_out % POOL_OUT == 0)
    pool_win = (l_out // POOL_OUT) if use_fast_pool else None

    # --- batch blocking -------------------------------------------------------
    # Largest bb that (a) keeps >= 2 grid steps when B allows (megacore sharding
    # of the "parallel" axis on v7x) and (b) fits the default 32 MiB scoped VMEM
    # with the double-buffered bf16 x block plus the f32 conv intermediates.
    bb = min(8, max(1, B // 2))
    per_row_bytes = t_pad * (C_IN * 2 * 2 + KSIZE * TAPW * 4) + l_out * TAPW * 4
    bb = max(1, min(bb, int((20 * 2**20) // per_row_bytes)))
    nblk = pl.cdiv(B, bb)
    b_pad = nblk * bb

    # --- glue: dtype cast + parameter re-layout (no compute) ------------------
    x = elmo_repr.astype(jnp.bfloat16)                # halves HBM traffic; bf16 MXU path
    x = jnp.pad(x, ((0, b_pad - B), (0, t_pad - T), (0, 0)))
    x = x.reshape(b_pad * t_pad, C_IN)                # rows stacked -> one 2-D MXU matmul

    # conv weight: (1024, 3*128); tap k occupies its own 128-lane group.
    w2d = jnp.transpose(w_conv, (1, 2, 0))            # (1024, 3, 16)
    w2d = jnp.pad(w2d, ((0, 0), (0, 0), (0, TAPW - C_OUT)))
    w2d = w2d.reshape(C_IN, KSIZE * TAPW).astype(jnp.bfloat16)
    bconv2 = jnp.pad(b_conv.reshape(1, C_OUT).astype(jnp.float32),
                     ((0, 0), (0, TAPW - C_OUT)))

    # hidden2label weight: wlin3d[c, p, l] = w_lin[l, c*128+p]  (kept in f32).
    wlin3d = jnp.transpose(w_lin).reshape(C_OUT, POOL_OUT, label_size)
    wlin3d = jnp.pad(wlin3d, ((0, 0), (0, 0), (0, lpad - label_size))).astype(jnp.float32)
    blin2 = jnp.pad(b_lin.reshape(1, label_size).astype(jnp.float32),
                    ((0, 0), (0, lpad - label_size)))

    # AdaptiveMaxPool1d window mask (general path only) — static, host-precomputed,
    # lane-dense.  PyTorch: start = floor(i*L/128), end = ceil((i+1)*L/128).
    if use_fast_pool:
        negmask = jnp.zeros((1, POOL_OUT), jnp.float32)      # unused dummy
    else:
        t = np.arange(l_out)[:, None]
        i = np.arange(POOL_OUT)[None, :]
        start = (i * l_out) // POOL_OUT
        end = -(-((i + 1) * l_out) // POOL_OUT)
        negmask = jnp.asarray(
            np.where((t >= start) & (t < end), 0.0, -1e30).astype(np.float32))
    neg_rows = negmask.shape[0]

    scratch = [pltpu.VMEM((C_OUT, bb, POOL_OUT), jnp.float32)]
    if use_fast_pool:
        scratch.append(pltpu.VMEM((l_out, TAPW), jnp.float32))

    # Advisory cost estimate so XLA schedules the wrapper-side cast/pad/reshape
    # around the kernel instead of serializing on it.
    flops = 2 * b_pad * t_pad * C_IN * (KSIZE * TAPW) + 2 * b_pad * FLAT * lpad
    bytes_accessed = (b_pad * t_pad * C_IN * 2 + b_pad * lpad * 4
                      + C_IN * KSIZE * TAPW * 2 + C_OUT * POOL_OUT * lpad * 4
                      + neg_rows * POOL_OUT * 4)
    cost = pl.CostEstimate(flops=flops, transcendentals=0,
                           bytes_accessed=bytes_accessed)

    # NOTE: w2d/bconv/negmask/wlin3d/blin are grid-invariant (constant index_map,
    # fetched once); when VMEM-bound they can additionally be single-buffered via
    # pl.BlockSpec(..., pipeline_mode=pl.Buffered(1)).
    # TODO(synk): for very long T add a second ("arbitrary") grid axis over T tiles
    # with a 2-row halo and a running pool max, and tile the label dim for very
    # large label_size, to bound VMEM on v7x (64 MiB).
    out = pl.pallas_call(
        functools.partial(_fused_kernel, l_out=l_out, bb=bb, t_pad=t_pad,
                          pool_win=pool_win),
        out_shape=jax.ShapeDtypeStruct((nblk, bb, lpad), jnp.float32),
        grid=(nblk,),
        in_specs=[
            pl.BlockSpec((bb * t_pad, C_IN), lambda b: (b, 0)),
            pl.BlockSpec((C_IN, KSIZE * TAPW), lambda b: (0, 0)),
            pl.BlockSpec((1, TAPW), lambda b: (0, 0)),
            pl.BlockSpec((neg_rows, POOL_OUT), lambda b: (0, 0)),
            pl.BlockSpec((C_OUT, POOL_OUT, lpad), lambda b: (0, 0, 0)),
            pl.BlockSpec((1, lpad), lambda b: (0, 0)),
        ],
        out_specs=pl.BlockSpec((1, bb, lpad), lambda b: (b, 0, 0)),
        scratch_shapes=scratch,
        compiler_params=pltpu.CompilerParams(dimension_semantics=("parallel",)),
        cost_estimate=cost,
    )(x, w2d, bconv2, negmask, wlin3d, blin2)

    # TODO(synk): nn.Dropout is identity at inference time; training-mode dropout omitted.
    return out.reshape(b_pad, lpad)[:B, :label_size]


def _reference(elmo_repr, w_conv, b_conv, w_lin, b_lin):
    """Pure-JAX reference (high precision) of the same forward pass."""
    B, T, _ = elmo_repr.shape
    L = T - KSIZE + 1
    y = jnp.zeros((B, C_OUT, L), jnp.float32)
    for k in range(KSIZE):
        y = y + jnp.einsum('btc,oc->bot', elmo_repr[:, k:k + L, :], w_conv[:, :, k],
                           precision=jax.lax.Precision.HIGHEST)
    y = y + b_conv[None, :, None]
    y = jnp.clip(y, 0.0, 6.0)
    cols = []
    for i in range(POOL_OUT):
        s = (i * L) // POOL_OUT
        e = -(-((i + 1) * L) // POOL_OUT)
        cols.append(jnp.max(y[:, :, s:e], axis=-1))
    pooled = jnp.stack(cols, axis=-1)                  # (B, 16, 128)
    flat = pooled.reshape(B, FLAT)
    return jnp.dot(flat, w_lin.T, precision=jax.lax.Precision.HIGHEST) + b_lin


if __name__ == "__main__":
    B, T, label_size = 2, 18, 4

    key = jax.random.PRNGKey(0)
    kx, kc, kl = jax.random.split(key, 3)

    # TODO(synk): the pretrained ELMo encoder (external hdf5 weights) has no Pallas
    # equivalent here; its 1024-dim output representation is the kernel input.
    elmo_repr = jax.random.normal(kx, (B, T, C_IN), jnp.float32)

    # Deterministic xavier_uniform-style init (matches init_weights() intent).
    lim_c = float(np.sqrt(6.0 / (C_IN * KSIZE + C_OUT * KSIZE)))
    w_conv = jax.random.uniform(kc, (C_OUT, C_IN, KSIZE), jnp.float32, -lim_c, lim_c)
    b_conv = jnp.zeros((C_OUT,), jnp.float32)
    lim_l = float(np.sqrt(6.0 / (FLAT + label_size)))
    w_lin = jax.random.uniform(kl, (label_size, FLAT), jnp.float32, -lim_l, lim_l)
    b_lin = jnp.zeros((label_size,), jnp.float32)

    out = simple_elmo_classifier_forward(elmo_repr, w_conv, b_conv, w_lin, b_lin)
    out = jax.block_until_ready(out)
    assert out.shape == (B, label_size)

    ref = _reference(elmo_repr, w_conv, b_conv, w_lin, b_lin)
    np.testing.assert_allclose(np.asarray(out), np.asarray(ref), rtol=5e-2, atol=5e-2)

    print("KERNEL_OK")
</pallas_src>

<mosaic_0001>
module attributes {stable_mosaic.version = 11 : i64} {
  func.func @_fused_kernel(%arg0: i32, %arg1: memref<24x1024xbf16, #tpu.memory_space<vmem>>, %arg2: memref<1024x384xbf16, #tpu.memory_space<vmem>>, %arg3: memref<1x128xf32, #tpu.memory_space<vmem>>, %arg4: memref<16x128xf32, #tpu.memory_space<vmem>>, %arg5: memref<16x128x128xf32, #tpu.memory_space<vmem>>, %arg6: memref<1x128xf32, #tpu.memory_space<vmem>>, %arg7: memref<1x1x128xf32, #tpu.memory_space<vmem>>, %arg8: memref<16x1x128xf32, #tpu.memory_space<vmem>>) attributes {dimension_semantics = [#tpu.dimension_semantics<parallel>], iteration_bounds = array<i64: 2>, scalar_prefetch = 0 : i64, scratch_operands = 1 : i64, tpu.core_type = #tpu.core_type<tc>, window_params = [{transform_indices = @transform_0, window_bounds = array<i64: 24, 1024>}, {pipeline_mode = #tpu.pipeline_mode<synchronous>, transform_indices = @transform_1, window_bounds = array<i64: 1024, 384>}, {pipeline_mode = #tpu.pipeline_mode<synchronous>, transform_indices = @transform_2, window_bounds = array<i64: 1, 128>}, {pipeline_mode = #tpu.pipeline_mode<synchronous>, transform_indices = @transform_3, window_bounds = array<i64: 16, 128>}, {pipeline_mode = #tpu.pipeline_mode<synchronous>, transform_indices = @transform_4, window_bounds = array<i64: 16, 128, 128>}, {pipeline_mode = #tpu.pipeline_mode<synchronous>, transform_indices = @transform_5, window_bounds = array<i64: 1, 128>}, {transform_indices = @transform_6, window_bounds = array<i64: 1, 1, 128>}]} {
    %c0 = arith.constant 0 : index
    %c0_0 = arith.constant 0 : index
    %0 = vector.load %arg4[%c0, %c0_0] : memref<16x128xf32, #tpu.memory_space<vmem>>, vector<16x128xf32>
    %c0_1 = arith.constant 0 : index
    %c0_2 = arith.constant 0 : index
    %1 = vector.load %arg3[%c0_1, %c0_2] : memref<1x128xf32, #tpu.memory_space<vmem>>, vector<1x128xf32>
    %c0_3 = arith.constant 0 : index
    %c0_4 = arith.constant 0 : index
    %2 = vector.load %arg1[%c0_3, %c0_4] : memref<24x1024xbf16, #tpu.memory_space<vmem>>, vector<24x1024xbf16>
    %c0_5 = arith.constant 0 : index
    %c0_6 = arith.constant 0 : index
    %3 = vector.load %arg2[%c0_5, %c0_6] : memref<1024x384xbf16, #tpu.memory_space<vmem>>, vector<1024x384xbf16>
    %cst = arith.constant dense<0.000000e+00> : vector<24x384xf32>
    %4 = tpu.matmul %2, %3, %cst {dimension_numbers = #tpu.dot_dimension_numbers<[1], [0], [0], [1], [0, 0, 1, 1], [], []>} : vector<24x1024xbf16>, vector<1024x384xbf16>, vector<24x384xf32> -> vector<24x384xf32>
    %5 = vector.extract_strided_slice %4 {offsets = [0, 0], sizes = [16, 128], strides = [1, 1]} : vector<24x384xf32> to vector<16x128xf32>
    %6 = vector.extract_strided_slice %4 {offsets = [1, 128], sizes = [16, 128], strides = [1, 1]} : vector<24x384xf32> to vector<16x128xf32>
    %7 = arith.addf %5, %6 : vector<16x128xf32>
    %8 = vector.extract_strided_slice %4 {offsets = [2, 256], sizes = [16, 128], strides = [1, 1]} : vector<24x384xf32> to vector<16x128xf32>
    %9 = arith.addf %7, %8 : vector<16x128xf32>
    %10 = vector.broadcast %1 : vector<1x128xf32> to vector<16x128xf32>
    %11 = arith.addf %9, %10 : vector<16x128xf32>
    %cst_7 = arith.constant 0.000000e+00 : f32
    %cst_8 = arith.constant 6.000000e+00 : f32
    %12 = vector.broadcast %cst_7 : f32 to vector<16x128xf32>
    %13 = arith.maximumf %12, %11 : vector<16x128xf32>
    %14 = vector.broadcast %cst_8 : f32 to vector<16x128xf32>
    %15 = arith.minimumf %14, %13 : vector<16x128xf32>
    %cst_9 = arith.constant -1.000000e+30 : f32
    %16 = vector.broadcast %cst_9 : f32 to vector<16x128xf32>
    %17 = vector.extract_strided_slice %15 {offsets = [0, 0], sizes = [8, 16], strides = [1, 1]} : vector<16x128xf32> to vector<8x16xf32>
    %18 = vector.shape_cast %17 : vector<8x16xf32> to vector<8x16x1xf32>
    %19 = vector.extract_strided_slice %0 {offsets = [0, 0], sizes = [8, 128], strides = [1, 1]} : vector<16x128xf32> to vector<8x128xf32>
    %20 = vector.shape_cast %19 : vector<8x128xf32> to vector<8x1x128xf32>
    %21 = vector.broadcast %18 : vector<8x16x1xf32> to vector<8x16x128xf32>
    %22 = vector.broadcast %20 : vector<8x1x128xf32> to vector<8x16x128xf32>
    %23 = arith.addf %21, %22 : vector<8x16x128xf32>
    %cst_10 = arith.constant dense<0xFF800000> : vector<16x128xf32>
    %24 = vector.multi_reduction <maximumf>, %23, %cst_10 [0] : vector<8x16x128xf32> to vector<16x128xf32>
    %25 = arith.maximumf %16, %24 : vector<16x128xf32>
    %26 = vector.extract_strided_slice %15 {offsets = [8, 0], sizes = [8, 16], strides = [1, 1]} : vector<16x128xf32> to vector<8x16xf32>
    %27 = vector.shape_cast %26 : vector<8x16xf32> to vector<8x16x1xf32>
    %28 = vector.extract_strided_slice %0 {offsets = [8, 0], sizes = [8, 128], strides = [1, 1]} : vector<16x128xf32> to vector<8x128xf32>
    %29 = vector.shape_cast %28 : vector<8x128xf32> to vector<8x1x128xf32>
    %30 = vector.broadcast %27 : vector<8x16x1xf32> to vector<8x16x128xf32>
    %31 = vector.broadcast %29 : vector<8x1x128xf32> to vector<8x16x128xf32>
    %32 = arith.addf %30, %31 : vector<8x16x128xf32>
    %cst_11 = arith.constant dense<0xFF800000> : vector<16x128xf32>
    %33 = vector.multi_reduction <maximumf>, %32, %cst_11 [0] : vector<8x16x128xf32> to vector<16x128xf32>
    %34 = arith.maximumf %25, %33 : vector<16x128xf32>
    %c0_12 = arith.constant 0 : index
    %c0_13 = arith.constant 0 : index
    %c0_14 = arith.constant 0 : index
    %35 = vector.load %arg8[%c0_12, %c0_13, %c0_14] : memref<16x1x128xf32, #tpu.memory_space<vmem>>, vector<16x1x128xf32>
    %36 = vector.shape_cast %35 : vector<16x1x128xf32> to vector<16x128xf32>
    %37 = vector.shape_cast %34 : vector<16x128xf32> to vector<16x1x128xf32>
    tpu.vector_store %arg8[%c0_12, %c0_13, %c0_14], %37 {strides = array<i32>} : memref<16x1x128xf32, #tpu.memory_space<vmem>>, vector<16x1x128xf32>,
    %cst_15 = arith.constant 0.000000e+00 : f32
    %38 = vector.broadcast %cst_15 : f32 to vector<1x128xf32>
    %c0_16 = arith.constant 0 : index
    %c0_17 = arith.constant 0 : index
    %c0_18 = arith.constant 0 : index
    %39 = vector.load %arg8[%c0_16, %c0_17, %c0_18] : memref<16x1x128xf32, #tpu.memory_space<vmem>>, vector<1x1x128xf32>
    %40 = vector.shape_cast %39 : vector<1x1x128xf32> to vector<1x128xf32>
    %c0_19 = arith.constant 0 : index
    %c0_20 = arith.constant 0 : index
    %c0_21 = arith.constant 0 : index
    %41 = vector.load %arg5[%c0_19, %c0_20, %c0_21] : memref<16x128x128xf32, #tpu.memory_space<vmem>>, vector<1x128x128xf32>
    %42 = vector.shape_cast %41 : vector<1x128x128xf32> to vector<128x128xf32>
    %cst_22 = arith.constant dense<0.000000e+00> : vector<1x128xf32>
    %43 = tpu.matmul %40, %42, %cst_22 {dimension_numbers = #tpu.dot_dimension_numbers<[1], [0], [0], [1], [0, 0, 1, 1], [], []>} : vector<1x128xf32>, vector<128x128xf32>, vector<1x128xf32> -> vector<1x128xf32>
    %44 = arith.addf %38, %43 : vector<1x128xf32>
    %c1 = arith.constant 1 : index
    %c0_23 = arith.constant 0 : index
    %c0_24 = arith.constant 0 : index
    %45 = vector.load %arg8[%c1, %c0_23, %c0_24] : memref<16x1x128xf32, #tpu.memory_space<vmem>>, vector<1x1x128xf32>
    %46 = vector.shape_cast %45 : vector<1x1x128xf32> to vector<1x128xf32>
    %c1_25 = arith.constant 1 : index
    %c0_26 = arith.constant 0 : index
    %c0_27 = arith.constant 0 : index
    %47 = vector.load %arg5[%c1_25, %c0_26, %c0_27] : memref<16x128x128xf32, #tpu.memory_space<vmem>>, vector<1x128x128xf32>
    %48 = vector.shape_cast %47 : vector<1x128x128xf32> to vector<128x128xf32>
    %cst_28 = arith.constant dense<0.000000e+00> : vector<1x128xf32>
    %49 = tpu.matmul %46, %48, %cst_28 {dimension_numbers = #tpu.dot_dimension_numbers<[1], [0], [0], [1], [0, 0, 1, 1], [], []>} : vector<1x128xf32>, vector<128x128xf32>, vector<1x128xf32> -> vector<1x128xf32>
    %50 = arith.addf %44, %49 : vector<1x128xf32>
    %c2 = arith.constant 2 : index
    %c0_29 = arith.constant 0 : index
    %c0_30 = arith.constant 0 : index
    %51 = vector.load %arg8[%c2, %c0_29, %c0_30] : memref<16x1x128xf32, #tpu.memory_space<vmem>>, vector<1x1x128xf32>
    %52 = vector.shape_cast %51 : vector<1x1x128xf32> to vector<1x128xf32>
    %c2_31 = arith.constant 2 : index
    %c0_32 = arith.constant 0 : index
    %c0_33 = arith.constant 0 : index
    %53 = vector.load %arg5[%c2_31, %c0_32, %c0_33] : memref<16x128x128xf32, #tpu.memory_space<vmem>>, vector<1x128x128xf32>
    %54 = vector.shape_cast %53 : vector<1x128x128xf32> to vector<128x128xf32>
    %cst_34 = arith.constant dense<0.000000e+00> : vector<1x128xf32>
    %55 = tpu.matmul %52, %54, %cst_34 {dimension_numbers = #tpu.dot_dimension_numbers<[1], [0], [0], [1], [0, 0, 1, 1], [], []>} : vector<1x128xf32>, vector<128x128xf32>, vector<1x128xf32> -> vector<1x128xf32>
    %56 = arith.addf %50, %55 : vector<1x128xf32>
    %c3 = arith.constant 3 : index
    %c0_35 = arith.constant 0 : index
    %c0_36 = arith.constant 0 : index
    %57 = vector.load %arg8[%c3, %c0_35, %c0_36] : memref<16x1x128xf32, #tpu.memory_space<vmem>>, vector<1x1x128xf32>
    %58 = vector.shape_cast %57 : vector<1x1x128xf32> to vector<1x128xf32>
    %c3_37 = arith.constant 3 : index
    %c0_38 = arith.constant 0 : index
    %c0_39 = arith.constant 0 : index
    %59 = vector.load %arg5[%c3_37, %c0_38, %c0_39] : memref<16x128x128xf32, #tpu.memory_space<vmem>>, vector<1x128x128xf32>
    %60 = vector.shape_cast %59 : vector<1x128x128xf32> to vector<128x128xf32>
    %cst_40 = arith.constant dense<0.000000e+00> : vector<1x128xf32>
    %61 = tpu.matmul %58, %60, %cst_40 {dimension_numbers = #tpu.dot_dimension_numbers<[1], [0], [0], [1], [0, 0, 1, 1], [], []>} : vector<1x128xf32>, vector<128x128xf32>, vector<1x128xf32> -> vector<1x128xf32>
    %62 = arith.addf %56, %61 : vector<1x128xf32>
    %c4 = arith.constant 4 : index
    %c0_41 = arith.constant 0 : index
    %c0_42 = arith.constant 0 : index
    %63 = vector.load %arg8[%c4, %c0_41, %c0_42] : memref<16x1x128xf32, #tpu.memory_space<vmem>>, vector<1x1x128xf32>
    %64 = vector.shape_cast %63 : vector<1x1x128xf32> to vector<1x128xf32>
    %c4_43 = arith.constant 4 : index
    %c0_44 = arith.constant 0 : index
    %c0_45 = arith.constant 0 : index
    %65 = vector.load %arg5[%c4_43, %c0_44, %c0_45] : memref<16x128x128xf32, #tpu.memory_space<vmem>>, vector<1x128x128xf32>
    %66 = vector.shape_cast %65 : vector<1x128x128xf32> to vector<128x128xf32>
    %cst_46 = arith.constant dense<0.000000e+00> : vector<1x128xf32>
    %67 = tpu.matmul %64, %66, %cst_46 {dimension_numbers = #tpu.dot_dimension_numbers<[1], [0], [0], [1], [0, 0, 1, 1], [], []>} : vector<1x128xf32>, vector<128x128xf32>, vector<1x128xf32> -> vector<1x128xf32>
    %68 = arith.addf %62, %67 : vector<1x128xf32>
    %c5 = arith.constant 5 : index
    %c0_47 = arith.constant 0 : index
    %c0_48 = arith.constant 0 : index
    %69 = vector.load %arg8[%c5, %c0_47, %c0_48] : memref<16x1x128xf32, #tpu.memory_space<vmem>>, vector<1x1x128xf32>
    %70 = vector.shape_cast %69 : vector<1x1x128xf32> to vector<1x128xf32>
    %c5_49 = arith.constant 5 : index
    %c0_50 = arith.constant 0 : index
    %c0_51 = arith.constant 0 : index
    %71 = vector.load %arg5[%c5_49, %c0_50, %c0_51] : memref<16x128x128xf32, #tpu.memory_space<vmem>>, vector<1x128x128xf32>
    %72 = vector.shape_cast %71 : vector<1x128x128xf32> to vector<128x128xf32>
    %cst_52 = arith.constant dense<0.000000e+00> : vector<1x128xf32>
    %73 = tpu.matmul %70, %72, %cst_52 {dimension_numbers = #tpu.dot_dimension_numbers<[1], [0], [0], [1], [0, 0, 1, 1], [], []>} : vector<1x128xf32>, vector<128x128xf32>, vector<1x128xf32> -> vector<1x128xf32>
    %74 = arith.addf %68, %73 : vector<1x128xf32>
    %c6 = arith.constant 6 : index
    %c0_53 = arith.constant 0 : index
    %c0_54 = arith.constant 0 : index
    %75 = vector.load %arg8[%c6, %c0_53, %c0_54] : memref<16x1x128xf32, #tpu.memory_space<vmem>>, vector<1x1x128xf32>
    %76 = vector.shape_cast %75 : vector<1x1x128xf32> to vector<1x128xf32>
    %c6_55 = arith.constant 6 : index
    %c0_56 = arith.constant 0 : index
    %c0_57 = arith.constant 0 : index
    %77 = vector.load %arg5[%c6_55, %c0_56, %c0_57] : memref<16x128x128xf32, #tpu.memory_space<vmem>>, vector<1x128x128xf32>
    %78 = vector.shape_cast %77 : vector<1x128x128xf32> to vector<128x128xf32>
    %cst_58 = arith.constant dense<0.000000e+00> : vector<1x128xf32>
    %79 = tpu.matmul %76, %78, %cst_58 {dimension_numbers = #tpu.dot_dimension_numbers<[1], [0], [0], [1], [0, 0, 1, 1], [], []>} : vector<1x128xf32>, vector<128x128xf32>, vector<1x128xf32> -> vector<1x128xf32>
    %80 = arith.addf %74, %79 : vector<1x128xf32>
    %c7 = arith.constant 7 : index
    %c0_59 = arith.constant 0 : index
    %c0_60 = arith.constant 0 : index
    %81 = vector.load %arg8[%c7, %c0_59, %c0_60] : memref<16x1x128xf32, #tpu.memory_space<vmem>>, vector<1x1x128xf32>
    %82 = vector.shape_cast %81 : vector<1x1x128xf32> to vector<1x128xf32>
    %c7_61 = arith.constant 7 : index
    %c0_62 = arith.constant 0 : index
    %c0_63 = arith.constant 0 : index
    %83 = vector.load %arg5[%c7_61, %c0_62, %c0_63] : memref<16x128x128xf32, #tpu.memory_space<vmem>>, vector<1x128x128xf32>
    %84 = vector.shape_cast %83 : vector<1x128x128xf32> to vector<128x128xf32>
    %cst_64 = arith.constant dense<0.000000e+00> : vector<1x128xf32>
    %85 = tpu.matmul %82, %84, %cst_64 {dimension_numbers = #tpu.dot_dimension_numbers<[1], [0], [0], [1], [0, 0, 1, 1], [], []>} : vector<1x128xf32>, vector<128x128xf32>, vector<1x128xf32> -> vector<1x128xf32>
    %86 = arith.addf %80, %85 : vector<1x128xf32>
    %c8 = arith.constant 8 : index
    %c0_65 = arith.constant 0 : index
    %c0_66 = arith.constant 0 : index
    %87 = vector.load %arg8[%c8, %c0_65, %c0_66] : memref<16x1x128xf32, #tpu.memory_space<vmem>>, vector<1x1x128xf32>
    %88 = vector.shape_cast %87 : vector<1x1x128xf32> to vector<1x128xf32>
    %c8_67 = arith.constant 8 : index
    %c0_68 = arith.constant 0 : index
    %c0_69 = arith.constant 0 : index
    %89 = vector.load %arg5[%c8_67, %c0_68, %c0_69] : memref<16x128x128xf32, #tpu.memory_space<vmem>>, vector<1x128x128xf32>
    %90 = vector.shape_cast %89 : vector<1x128x128xf32> to vector<128x128xf32>
    %cst_70 = arith.constant dense<0.000000e+00> : vector<1x128xf32>
    %91 = tpu.matmul %88, %90, %cst_70 {dimension_numbers = #tpu.dot_dimension_numbers<[1], [0], [0], [1], [0, 0, 1, 1], [], []>} : vector<1x128xf32>, vector<128x128xf32>, vector<1x128xf32> -> vector<1x128xf32>
    %92 = arith.addf %86, %91 : vector<1x128xf32>
    %c9 = arith.constant 9 : index
    %c0_71 = arith.constant 0 : index
    %c0_72 = arith.constant 0 : index
    %93 = vector.load %arg8[%c9, %c0_71, %c0_72] : memref<16x1x128xf32, #tpu.memory_space<vmem>>, vector<1x1x128xf32>
    %94 = vector.shape_cast %93 : vector<1x1x128xf32> to vector<1x128xf32>
    %c9_73 = arith.constant 9 : index
    %c0_74 = arith.constant 0 : index
    %c0_75 = arith.constant 0 : index
    %95 = vector.load %arg5[%c9_73, %c0_74, %c0_75] : memref<16x128x128xf32, #tpu.memory_space<vmem>>, vector<1x128x128xf32>
    %96 = vector.shape_cast %95 : vector<1x128x128xf32> to vector<128x128xf32>
    %cst_76 = arith.constant dense<0.000000e+00> : vector<1x128xf32>
    %97 = tpu.matmul %94, %96, %cst_76 {dimension_numbers = #tpu.dot_dimension_numbers<[1], [0], [0], [1], [0, 0, 1, 1], [], []>} : vector<1x128xf32>, vector<128x128xf32>, vector<1x128xf32> -> vector<1x128xf32>
    %98 = arith.addf %92, %97 : vector<1x128xf32>
    %c10 = arith.constant 10 : index
    %c0_77 = arith.constant 0 : index
    %c0_78 = arith.constant 0 : index
    %99 = vector.load %arg8[%c10, %c0_77, %c0_78] : memref<16x1x128xf32, #tpu.memory_space<vmem>>, vector<1x1x128xf32>
    %100 = vector.shape_cast %99 : vector<1x1x128xf32> to vector<1x128xf32>
    %c10_79 = arith.constant 10 : index
    %c0_80 = arith.constant 0 : index
    %c0_81 = arith.constant 0 : index
    %101 = vector.load %arg5[%c10_79, %c0_80, %c0_81] : memref<16x128x128xf32, #tpu.memory_space<vmem>>, vector<1x128x128xf32>
    %102 = vector.shape_cast %101 : vector<1x128x128xf32> to vector<128x128xf32>
    %cst_82 = arith.constant dense<0.000000e+00> : vector<1x128xf32>
    %103 = tpu.matmul %100, %102, %cst_82 {dimension_numbers = #tpu.dot_dimension_numbers<[1], [0], [0], [1], [0, 0, 1, 1], [], []>} : vector<1x128xf32>, vector<128x128xf32>, vector<1x128xf32> -> vector<1x128xf32>
    %104 = arith.addf %98, %103 : vector<1x128xf32>
    %c11 = arith.constant 11 : index
    %c0_83 = arith.constant 0 : index
    %c0_84 = arith.constant 0 : index
    %105 = vector.load %arg8[%c11, %c0_83, %c0_84] : memref<16x1x128xf32, #tpu.memory_space<vmem>>, vector<1x1x128xf32>
    %106 = vector.shape_cast %105 : vector<1x1x128xf32> to vector<1x128xf32>
    %c11_85 = arith.constant 11 : index
    %c0_86 = arith.constant 0 : index
    %c0_87 = arith.constant 0 : index
    %107 = vector.load %arg5[%c11_85, %c0_86, %c0_87] : memref<16x128x128xf32, #tpu.memory_space<vmem>>, vector<1x128x128xf32>
    %108 = vector.shape_cast %107 : vector<1x128x128xf32> to vector<128x128xf32>
    %cst_88 = arith.constant dense<0.000000e+00> : vector<1x128xf32>
    %109 = tpu.matmul %106, %108, %cst_88 {dimension_numbers = #tpu.dot_dimension_numbers<[1], [0], [0], [1], [0, 0, 1, 1], [], []>} : vector<1x128xf32>, vector<128x128xf32>, vector<1x128xf32> -> vector<1x128xf32>
    %110 = arith.addf %104, %109 : vector<1x128xf32>
    %c12 = arith.constant 12 : index
    %c0_89 = arith.constant 0 : index
    %c0_90 = arith.constant 0 : index
    %111 = vector.load %arg8[%c12, %c0_89, %c0_90] : memref<16x1x128xf32, #tpu.memory_space<vmem>>, vector<1x1x128xf32>
    %112 = vector.shape_cast %111 : vector<1x1x128xf32> to vector<1x128xf32>
    %c12_91 = arith.constant 12 : index
    %c0_92 = arith.constant 0 : index
    %c0_93 = arith.constant 0 : index
    %113 = vector.load %arg5[%c12_91, %c0_92, %c0_93] : memref<16x128x128xf32, #tpu.memory_space<vmem>>, vector<1x128x128xf32>
    %114 = vector.shape_cast %113 : vector<1x128x128xf32> to vector<128x128xf32>
    %cst_94 = arith.constant dense<0.000000e+00> : vector<1x128xf32>
    %115 = tpu.matmul %112, %114, %cst_94 {dimension_numbers = #tpu.dot_dimension_numbers<[1], [0], [0], [1], [0, 0, 1, 1], [], []>} : vector<1x128xf32>, vector<128x128xf32>, vector<1x128xf32> -> vector<1x128xf32>
    %116 = arith.addf %110, %115 : vector<1x128xf32>
    %c13 = arith.constant 13 : index
    %c0_95 = arith.constant 0 : index
    %c0_96 = arith.constant 0 : index
    %117 = vector.load %arg8[%c13, %c0_95, %c0_96] : memref<16x1x128xf32, #tpu.memory_space<vmem>>, vector<1x1x128xf32>
    %118 = vector.shape_cast %117 : vector<1x1x128xf32> to vector<1x128xf32>
    %c13_97 = arith.constant 13 : index
    %c0_98 = arith.constant 0 : index
    %c0_99 = arith.constant 0 : index
    %119 = vector.load %arg5[%c13_97, %c0_98, %c0_99] : memref<16x128x128xf32, #tpu.memory_space<vmem>>, vector<1x128x128xf32>
    %120 = vector.shape_cast %119 : vector<1x128x128xf32> to vector<128x128xf32>
    %cst_100 = arith.constant dense<0.000000e+00> : vector<1x128xf32>
    %121 = tpu.matmul %118, %120, %cst_100 {dimension_numbers = #tpu.dot_dimension_numbers<[1], [0], [0], [1], [0, 0, 1, 1], [], []>} : vector<1x128xf32>, vector<128x128xf32>, vector<1x128xf32> -> vector<1x128xf32>
    %122 = arith.addf %116, %121 : vector<1x128xf32>
    %c14 = arith.constant 14 : index
    %c0_101 = arith.constant 0 : index
    %c0_102 = arith.constant 0 : index
    %123 = vector.load %arg8[%c14, %c0_101, %c0_102] : memref<16x1x128xf32, #tpu.memory_space<vmem>>, vector<1x1x128xf32>
    %124 = vector.shape_cast %123 : vector<1x1x128xf32> to vector<1x128xf32>
    %c14_103 = arith.constant 14 : index
    %c0_104 = arith.constant 0 : index
    %c0_105 = arith.constant 0 : index
    %125 = vector.load %arg5[%c14_103, %c0_104, %c0_105] : memref<16x128x128xf32, #tpu.memory_space<vmem>>, vector<1x128x128xf32>
    %126 = vector.shape_cast %125 : vector<1x128x128xf32> to vector<128x128xf32>
    %cst_106 = arith.constant dense<0.000000e+00> : vector<1x128xf32>
    %127 = tpu.matmul %124, %126, %cst_106 {dimension_numbers = #tpu.dot_dimension_numbers<[1], [0], [0], [1], [0, 0, 1, 1], [], []>} : vector<1x128xf32>, vector<128x128xf32>, vector<1x128xf32> -> vector<1x128xf32>
    %128 = arith.addf %122, %127 : vector<1x128xf32>
    %c15 = arith.constant 15 : index
    %c0_107 = arith.constant 0 : index
    %c0_108 = arith.constant 0 : index
    %129 = vector.load %arg8[%c15, %c0_107, %c0_108] : memref<16x1x128xf32, #tpu.memory_space<vmem>>, vector<1x1x128xf32>
    %130 = vector.shape_cast %129 : vector<1x1x128xf32> to vector<1x128xf32>
    %c15_109 = arith.constant 15 : index
    %c0_110 = arith.constant 0 : index
    %c0_111 = arith.constant 0 : index
    %131 = vector.load %arg5[%c15_109, %c0_110, %c0_111] : memref<16x128x128xf32, #tpu.memory_space<vmem>>, vector<1x128x128xf32>
    %132 = vector.shape_cast %131 : vector<1x128x128xf32> to vector<128x128xf32>
    %cst_112 = arith.constant dense<0.000000e+00> : vector<1x128xf32>
    %133 = tpu.matmul %130, %132, %cst_112 {dimension_numbers = #tpu.dot_dimension_numbers<[1], [0], [0], [1], [0, 0, 1, 1], [], []>} : vector<1x128xf32>, vector<128x128xf32>, vector<1x128xf32> -> vector<1x128xf32>
    %134 = arith.addf %128, %133 : vector<1x128xf32>
    %c0_113 = arith.constant 0 : index
    %c0_114 = arith.constant 0 : index
    %135 = vector.load %arg6[%c0_113, %c0_114] : memref<1x128xf32, #tpu.memory_space<vmem>>, vector<1x128xf32>
    %136 = arith.addf %134, %135 : vector<1x128xf32>
    %c0_115 = arith.constant 0 : index
    %c0_116 = arith.constant 0 : index
    %c0_117 = arith.constant 0 : index
    %137 = vector.load %arg7[%c0_115, %c0_116, %c0_117] : memref<1x1x128xf32, #tpu.memory_space<vmem>>, vector<1x1x128xf32>
    %138 = vector.shape_cast %137 : vector<1x1x128xf32> to vector<1x128xf32>
    %139 = vector.shape_cast %136 : vector<1x128xf32> to vector<1x1x128xf32>
    tpu.vector_store %arg7[%c0_115, %c0_116, %c0_117], %139 {strides = array<i32>} : memref<1x1x128xf32, #tpu.memory_space<vmem>>, vector<1x1x128xf32>,
    return
  }
  func.func @transform_0(%arg0: i32) -> (i32, i32) {
    %c0_i32 = arith.constant 0 : i32
    %c0_i32_0 = arith.constant 0 : i32
    return %arg0, %c0_i32 : i32, i32
  }
  func.func @transform_1(%arg0: i32) -> (i32, i32) {
    %c0_i32 = arith.constant 0 : i32
    %c0_i32_0 = arith.constant 0 : i32
    %c0_i32_1 = arith.constant 0 : i32
    return %c0_i32, %c0_i32_0 : i32, i32
  }
  func.func @transform_2(%arg0: i32) -> (i32, i32) {
    %c0_i32 = arith.constant 0 : i32
    %c0_i32_0 = arith.constant 0 : i32
    %c0_i32_1 = arith.constant 0 : i32
    return %c0_i32, %c0_i32_0 : i32, i32
  }
  func.func @transform_3(%arg0: i32) -> (i32, i32) {
    %c0_i32 = arith.constant 0 : i32
    %c0_i32_0 = arith.constant 0 : i32
    %c0_i32_1 = arith.constant 0 : i32
    return %c0_i32, %c0_i32_0 : i32, i32
  }
  func.func @transform_4(%arg0: i32) -> (i32, i32, i32) {
    %c0_i32 = arith.constant 0 : i32
    %c0_i32_0 = arith.constant 0 : i32
    %c0_i32_1 = arith.constant 0 : i32
    %c0_i32_2 = arith.constant 0 : i32
    return %c0_i32, %c0_i32_0, %c0_i32_1 : i32, i32, i32
  }
  func.func @transform_5(%arg0: i32) -> (i32, i32) {
    %c0_i32 = arith.constant 0 : i32
    %c0_i32_0 = arith.constant 0 : i32
    %c0_i32_1 = arith.constant 0 : i32
    return %c0_i32, %c0_i32_0 : i32, i32
  }
  func.func @transform_6(%arg0: i32) -> (i32, i32, i32) {
    %c0_i32 = arith.constant 0 : i32
    %c0_i32_0 = arith.constant 0 : i32
    %c0_i32_1 = arith.constant 0 : i32
    return %arg0, %c0_i32, %c0_i32_0 : i32, i32, i32
  }
}

</mosaic_0001>

<llo_original>
// kernel: tpu_custom_call.1
$region0: #{tpu_custom_call.1}
  #allocation0 [shape = 'u32[]', space=smem, size = 0x4, offset = 0x4, fixed_abs, tag = 'smem constant byte address 0x4 - core index']
  #allocation1 [shape = 'u32[72,128]{1,0:T(1,128)}', space=vmem, size = 0x9000, scoped, tag = 'internal scratch']
  #allocation2 [shape = 'f32[16,1,128]{2,1,0:T(1,128)}', space=vmem, size = 0x2000, scoped, tag = 'scratch operand']
  %s0 = inlined_call_operand.hbm [shape: bf16[48,1024], index: 0, kind: input, shape index: {}]
  %s1 = inlined_call_operand.hbm [shape: bf16[1024,384], index: 1, kind: input, shape index: {}]
  %s2 = inlined_call_operand.vmem [shape: f32[1,128], index: 2, kind: input, shape index: {}]
  %s3 = inlined_call_operand.hbm [shape: f32[16,128], index: 3, kind: input, shape index: {}]
  %s4 = inlined_call_operand.hbm [shape: f32[16,128,128], index: 4, kind: input, shape index: {}]
  %s5 = inlined_call_operand.vmem [shape: f32[1,128], index: 5, kind: input, shape index: {}]
  %s6 = inlined_call_operand.hbm [shape: f32[2,1,128], index: 6, kind: output, shape index: {}]
  %s7 = sld [smem:[#allocation0]]
  $region73: #{tpu_custom_call.1} parent=0
    _
  %s9 = ssub.s32 1, %s7
  %s10 = scalar_select 0, %s9, %s7
  $region1: #{tpu_custom_call.1} parent=0
    #allocation3 [shape = 'u8[98304]{0}', space=vmem, size = 0x18000, scoped, tag = 'input window, operand 0']
    #allocation4 [shape = 's32[2]{0}', space=sflag, size = 0x8, scoped, tag = 'scoped memory for tpu_custom_call.1']
    #allocation5 [shape = 's32[2]{0}', space=sflag, size = 0x8, scoped, tag = 'scoped memory for tpu_custom_call.1']
    #allocation6 [shape = 'u8[786432]{0}', space=vmem, size = 0xc0000, scoped, tag = 'input window, operand 1, single buffered']
    #allocation7 [shape = 's32[1]{0}', space=sflag, size = 0x4, scoped, tag = 'scoped memory for tpu_custom_call.1']
    #allocation8 [shape = 'u8[8192]{0}', space=vmem, size = 0x2000, scoped, tag = 'input window, operand 3, single buffered']
    #allocation9 [shape = 'u8[1048576]{0}', space=vmem, size = 0x100000, scoped, tag = 'input window, operand 4, single buffered']
    #allocation10 [shape = 's32[1]{0}', space=sflag, size = 0x4, scoped, tag = 'scoped memory for tpu_custom_call.1']
    #allocation11 [shape = 'u8[1024]{0}', space=vmem, size = 0x400, scoped, tag = 'output window, operand 0']
    %11 = vsyncpa [#allocation4], 0
    %s12 = scalar_lea.sflag [#allocation4], 1
    %13 = vsyncpa %s12, 0
    %14 = vsyncpa [#allocation7], 0
    %15 = vsyncpa [#allocation10], 0
    %16 = vsyncpa [#allocation5], 0
    %s17 = scalar_lea.sflag [#allocation5], 1
    %18 = vsyncpa %s17, 0
    loop: start=0, step=1, limit=4
    $region2: #{tpu_custom_call.1} parent=1 // loop_pre_header
      _
    $region3: #{tpu_custom_call.1} parent=1 // loop_header
      %s20 = sphi 0, %s24
      %p21 = scmp.ge.s32.totalorder %s20, 4
      %s30 = sphi 0, %s32
      %s33 = sphi 0, %s30
      %s34 = sphi 0, %s33
      %s50 = sphi 0, %s34
      %s54 = sphi 0, %s54
      %s56 = sphi 0, %s54
      %s57 = sphi 0, %s56
      %s71 = sphi 0, %s57
      %s75 = sphi 0, %s75
      %s77 = sphi 0, %s75
      %s78 = sphi 0, %s77
      %s92 = sphi 0, %s78
      %s96 = sphi 0, %s96
      %s98 = sphi 0, %s96
      %s99 = sphi 0, %s98
      %s113 = sphi 0, %s99
      %s117 = sphi 0, %s117
      %s119 = sphi 0, %s117
      %s120 = sphi 0, %s119
      %s134 = sphi 0, %s120
      %s138 = sphi 0, %s138
      %s140 = sphi 0, %s138
      %s141 = sphi 0, %s140
      %s155 = sphi 0, %s141
      %s161 = sphi 0, %s163
      %s164 = sphi 0, %s161
      %s165 = sphi 0, %s164
      %s181 = sphi 0, %s165
    $region4: #{tpu_custom_call.1} parent=1 // loop_header_branch
      %23 = sbr.rel (%p21) target = $region8
    $region5: #{tpu_custom_call.1} parent=1 // loop_body
      %s25 = ssub.s32 %s20, 1
      %s26 = ssub.s32 %s20, 2
      %s27 = sadd.s32 %s20, 1
      %s28 = ssub.s32 %s20, %s27
      %p29 = scmp.eq.s32.totalorder %s28, 0
      %s31 = sadd.s32 %s30, 1
      %s32 = scalar_select %p29, %s30, %s31
      %p35 = pneg %p29
      %p36 = scmp.eq.s32.totalorder %s20, 1
      %p37 = por %p35, %p36
      %p38 = scmp.ne.s32.totalorder %s30, %s33
      %p39 = scmp.eq.s32.totalorder %s20, 0
      %p40 = por %p38, %p39
      %p41 = scmp.ne.s32.totalorder %s30, %s33
      %p42 = scmp.eq.s32.totalorder %s25, 1
      %p43 = por %p41, %p42
      %p44 = scmp.ne.s32.totalorder %s33, %s34
      %p45 = scmp.eq.s32.totalorder %s25, 0
      %p46 = por %p44, %p45
      %p47 = scmp.ne.s32.totalorder %s33, %s34
      %p48 = scmp.eq.s32.totalorder %s26, 1
      %p49 = por %p47, %p48
      %p51 = scmp.ne.s32.totalorder %s34, %s50
      %p52 = scmp.eq.s32.totalorder %s26, 0
      %p53 = por %p51, %p52
      %s55 = sadd.s32 %s54, 1
      %p58 = scmp.eq.s32.totalorder %s20, 1
      %p59 = scmp.ne.s32.totalorder %s54, %s56
      %p60 = scmp.eq.s32.totalorder %s20, 0
      %p61 = por %p59, %p60
      %p62 = scmp.ne.s32.totalorder %s54, %s56
      %p63 = scmp.eq.s32.totalorder %s25, 1
      %p64 = por %p62, %p63
      %p65 = scmp.ne.s32.totalorder %s56, %s57
      %p66 = scmp.eq.s32.totalorder %s25, 0
      %p67 = por %p65, %p66
      %p68 = scmp.ne.s32.totalorder %s56, %s57
      %p69 = scmp.eq.s32.totalorder %s26, 1
      %p70 = por %p68, %p69
      %p72 = scmp.ne.s32.totalorder %s57, %s71
      %p73 = scmp.eq.s32.totalorder %s26, 0
      %p74 = por %p72, %p73
      %s76 = sadd.s32 %s75, 1
      %p79 = scmp.eq.s32.totalorder %s20, 1
      %p80 = scmp.ne.s32.totalorder %s75, %s77
      %p81 = scmp.eq.s32.totalorder %s20, 0
      %p82 = por %p80, %p81
      %p83 = scmp.ne.s32.totalorder %s75, %s77
      %p84 = scmp.eq.s32.totalorder %s25, 1
      %p85 = por %p83, %p84
      %p86 = scmp.ne.s32.totalorder %s77, %s78
      %p87 = scmp.eq.s32.totalorder %s25, 0
      %p88 = por %p86, %p87
      %p89 = scmp.ne.s32.totalorder %s77, %s78
      %p90 = scmp.eq.s32.totalorder %s26, 1
      %p91 = por %p89, %p90
      %p93 = scmp.ne.s32.totalorder %s78, %s92
      %p94 = scmp.eq.s32.totalorder %s26, 0
      %p95 = por %p93, %p94
      %s97 = sadd.s32 %s96, 1
      %p100 = scmp.eq.s32.totalorder %s20, 1
      %p101 = scmp.ne.s32.totalorder %s96, %s98
      %p102 = scmp.eq.s32.totalorder %s20, 0
      %p103 = por %p101, %p102
      %p104 = scmp.ne.s32.totalorder %s96, %s98
      %p105 = scmp.eq.s32.totalorder %s25, 1
      %p106 = por %p104, %p105
      %p107 = scmp.ne.s32.totalorder %s98, %s99
      %p108 = scmp.eq.s32.totalorder %s25, 0
      %p109 = por %p107, %p108
      %p110 = scmp.ne.s32.totalorder %s98, %s99
      %p111 = scmp.eq.s32.totalorder %s26, 1
      %p112 = por %p110, %p111
      %p114 = scmp.ne.s32.totalorder %s99, %s113
      %p115 = scmp.eq.s32.totalorder %s26, 0
      %p116 = por %p114, %p115
      %s118 = sadd.s32 %s117, 1
      %p121 = scmp.eq.s32.totalorder %s20, 1
      %p122 = scmp.ne.s32.totalorder %s117, %s119
      %p123 = scmp.eq.s32.totalorder %s20, 0
      %p124 = por %p122, %p123
      %p125 = scmp.ne.s32.totalorder %s117, %s119
      %p126 = scmp.eq.s32.totalorder %s25, 1
      %p127 = por %p125, %p126
      %p128 = scmp.ne.s32.totalorder %s119, %s120
      %p129 = scmp.eq.s32.totalorder %s25, 0
      %p130 = por %p128, %p129
      %p131 = scmp.ne.s32.totalorder %s119, %s120
      %p132 = scmp.eq.s32.totalorder %s26, 1
      %p133 = por %p131, %p132
      %p135 = scmp.ne.s32.totalorder %s120, %s134
      %p136 = scmp.eq.s32.totalorder %s26, 0
      %p137 = por %p135, %p136
      %s139 = sadd.s32 %s138, 1
      %p142 = scmp.eq.s32.totalorder %s20, 1
      %p143 = scmp.ne.s32.totalorder %s138, %s140
      %p144 = scmp.eq.s32.totalorder %s20, 0
      %p145 = por %p143, %p144
      %p146 = scmp.ne.s32.totalorder %s138, %s140
      %p147 = scmp.eq.s32.totalorder %s25, 1
      %p148 = por %p146, %p147
      %p149 = scmp.ne.s32.totalorder %s140, %s141
      %p150 = scmp.eq.s32.totalorder %s25, 0
      %p151 = por %p149, %p150
      %p152 = scmp.ne.s32.totalorder %s140, %s141
      %p153 = scmp.eq.s32.totalorder %s26, 1
      %p154 = por %p152, %p153
      %p156 = scmp.ne.s32.totalorder %s141, %s155
      %p157 = scmp.eq.s32.totalorder %s26, 0
      %p158 = por %p156, %p157
      %s159 = ssub.s32 %s20, %s27
      %p160 = scmp.eq.s32.totalorder %s159, 0
      %s162 = sadd.s32 %s161, 1
      %s163 = scalar_select %p160, %s161, %s162
      %p166 = pneg %p160
      %p167 = scmp.eq.s32.totalorder %s20, 1
      %p168 = por %p166, %p167
      %p169 = scmp.ne.s32.totalorder %s161, %s164
      %p170 = scmp.eq.s32.totalorder %s20, 0
      %p171 = por %p169, %p170
      %p172 = scmp.ne.s32.totalorder %s161, %s164
      %p173 = scmp.eq.s32.totalorder %s25, 1
      %p174 = por %p172, %p173
      %p175 = scmp.ne.s32.totalorder %s164, %s165
      %p176 = scmp.eq.s32.totalorder %s25, 0
      %p177 = por %p175, %p176
      %p178 = scmp.ne.s32.totalorder %s164, %s165
      %p179 = scmp.eq.s32.totalorder %s26, 1
      %p180 = por %p178, %p179
      %p182 = scmp.ne.s32.totalorder %s165, %s181
      %p183 = scmp.eq.s32.totalorder %s26, 0
      %p184 = por %p182, %p183
      %p185 = scmp.le.s32.totalorder 1, %s20
      %p186 = scmp.lt.s32.totalorder %s20, 3
      %p187 = pnand %p185, %p186
      %p188 = pneg %p187
      // Predicated region
      $region9: #{tpu_custom_call.1} parent=5 // pred_check
        _
      $region10: #{tpu_custom_call.1} parent=5 // pred_check_branch
        %190 = sbr.rel (%p187) target = $region12
      $region11: #{tpu_custom_call.1} parent=5 // pred_region
        %s191 = ssub.s32 %s20, 1
        // Predicated region
        $region13: #{tpu_custom_call.1} parent=11 // pred_check
          %p192 = pneg %p67
        $region14: #{tpu_custom_call.1} parent=11 // pred_check_branch
          %194 = sbr.rel (%p192) target = $region16
        $region15: #{tpu_custom_call.1} parent=11 // pred_region
          %196 = vsyncadd [#allocation7], 0
          %s197 = sshll.u32 %s1, 4
          %s198 = int_to_ptr.hbm [resolvable:$true] %s197
          %s199 = sshll.u32 [#allocation6], 4
          %s200 = int_to_ptr.vmem [resolvable:$true] %s199
          %205 = dma.hbm_to_vmem [thread:$0]  %s198, 24576, %s200, [#allocation7], 192, 192, 12
        $region16: #{tpu_custom_call.1} parent=11 // pred_fallthru
          _
        // Predicated region
        $region17: #{tpu_custom_call.1} parent=11 // pred_check
          %p206 = pneg %p88
        $region18: #{tpu_custom_call.1} parent=11 // pred_check_branch
          %208 = sbr.rel (%p206) target = $region20
        $region19: #{tpu_custom_call.1} parent=11 // pred_region
          _
        $region20: #{tpu_custom_call.1} parent=11 // pred_fallthru
          _
        // Predicated region
        $region21: #{tpu_custom_call.1} parent=11 // pred_check
          %p209 = pneg %p109
        $region22: #{tpu_custom_call.1} parent=11 // pred_check_branch
          %211 = sbr.rel (%p209) target = $region24
        $region23: #{tpu_custom_call.1} parent=11 // pred_region
          %213 = vsyncadd [#allocation7], 0
          %s214 = sshll.u32 %s3, 4
          %s215 = int_to_ptr.hbm [resolvable:$true] %s214
          %s216 = sshll.u32 [#allocation8], 4
          %s217 = int_to_ptr.vmem [resolvable:$true] %s216
          %222 = dma.hbm_to_vmem [thread:$0]  %s215, 256, %s217, [#allocation7], 128, 128, 8
        $region24: #{tpu_custom_call.1} parent=11 // pred_fallthru
          _
        // Predicated region
        $region25: #{tpu_custom_call.1} parent=11 // pred_check
          %p223 = pneg %p130
        $region26: #{tpu_custom_call.1} parent=11 // pred_check_branch
          %225 = sbr.rel (%p223) target = $region28
        $region27: #{tpu_custom_call.1} parent=11 // pred_region
          %227 = vsyncadd [#allocation10], 0
          %s228 = sshll.u32 %s4, 4
          %s229 = int_to_ptr.hbm [resolvable:$true] %s228
          %s230 = sshll.u32 [#allocation9], 4
          %s231 = int_to_ptr.vmem [resolvable:$true] %s230
          %236 = dma.hbm_to_vmem [thread:$0]  %s229, 32768, %s231, [#allocation10], 128, 128, 8
        $region28: #{tpu_custom_call.1} parent=11 // pred_fallthru
          _
        // Predicated region
        $region29: #{tpu_custom_call.1} parent=11 // pred_check
          %p237 = pneg %p151
        $region30: #{tpu_custom_call.1} parent=11 // pred_check_branch
          %239 = sbr.rel (%p237) target = $region32
        $region31: #{tpu_custom_call.1} parent=11 // pred_region
          _
        $region32: #{tpu_custom_call.1} parent=11 // pred_fallthru
          _
      $region12: #{tpu_custom_call.1} parent=5 // pred_fallthru
        _
      %p240 = scmp.lt.s32.totalorder %s20, 2
      // Predicated region
      $region33: #{tpu_custom_call.1} parent=5 // pred_check
        %p241 = pneg %p240
      $region34: #{tpu_custom_call.1} parent=5 // pred_check_branch
        %243 = sbr.rel (%p241) target = $region36
      $region35: #{tpu_custom_call.1} parent=5 // pred_region
        // Predicated region
        $region37: #{tpu_custom_call.1} parent=35 // pred_check
          %p244 = pneg %p40
        $region38: #{tpu_custom_call.1} parent=35 // pred_check_branch
          %246 = sbr.rel (%p244) target = $region40
        $region39: #{tpu_custom_call.1} parent=35 // pred_region
          %s247 = sand.u32 %s30, 1
          %s248 = scalar_lea.sflag [#allocation4], %s247
          %s249 = sand.u32 %s30, 1
          %s250 = smul.addr %s249, 96
          %s251 = scalar_lea.vmem [#allocation3], %s250
          %s252 = smul.u32 3, %s20
          %254 = vsyncadd %s248, 0
          %s255 = smul.addr %s252, 8
          %s256 = smul.addr %s255, 4
          %s257 = scalar_lea.hbm %s0, %s256
          %s258 = sshll.u32 %s257, 4
          %s259 = int_to_ptr.hbm [resolvable:$true] %s258
          %s260 = sshll.u32 %s251, 4
          %s261 = int_to_ptr.vmem [resolvable:$true] %s260
          %266 = dma.hbm_to_vmem [thread:$0]  %s259, 1536, %s261, %s248, 512, 512, 32
        $region40: #{tpu_custom_call.1} parent=35 // pred_fallthru
          _
      $region36: #{tpu_custom_call.1} parent=5 // pred_fallthru
        _
      %p267 = scmp.le.s32.totalorder 1, %s20
      %p268 = scmp.lt.s32.totalorder %s20, 3
      %p269 = pnand %p267, %p268
      %p270 = pneg %p269
      // Predicated region
      $region41: #{tpu_custom_call.1} parent=5 // pred_check
        _
      $region42: #{tpu_custom_call.1} parent=5 // pred_check_branch
        %272 = sbr.rel (%p269) target = $region44
      $region43: #{tpu_custom_call.1} parent=5 // pred_region
        %s273 = ssub.s32 %s20, 1
        %s274 = sand.u32 %s33, 1
        %s275 = scalar_lea.sflag [#allocation4], %s274
        %s276 = sand.u32 %s33, 1
        %s277 = smul.addr %s276, 96
        %s278 = scalar_lea.vmem [#allocation3], %s277
        // Predicated region
        $region45: #{tpu_custom_call.1} parent=43 // pred_check
          %p279 = pneg %p46
        $region46: #{tpu_custom_call.1} parent=43 // pred_check_branch
          %281 = sbr.rel (%p279) target = $region48
        $region47: #{tpu_custom_call.1} parent=43 // pred_region
          %283 = dma.done %s275, 1536
        $region48: #{tpu_custom_call.1} parent=43 // pred_fallthru
          _
        // Predicated region
        $region49: #{tpu_custom_call.1} parent=43 // pred_check
          %p284 = pneg %p67
        $region50: #{tpu_custom_call.1} parent=43 // pred_check_branch
          %286 = sbr.rel (%p284) target = $region52
        $region51: #{tpu_custom_call.1} parent=43 // pred_region
          %288 = dma.done [#allocation7], 24576
        $region52: #{tpu_custom_call.1} parent=43 // pred_fallthru
          _
        // Predicated region
        $region53: #{tpu_custom_call.1} parent=43 // pred_check
          %p289 = pneg %p109
        $region54: #{tpu_custom_call.1} parent=43 // pred_check_branch
          %291 = sbr.rel (%p289) target = $region56
        $region55: #{tpu_custom_call.1} parent=43 // pred_region
          %293 = dma.done [#allocation7], 256
        $region56: #{tpu_custom_call.1} parent=43 // pred_fallthru
          _
        // Predicated region
        $region57: #{tpu_custom_call.1} parent=43 // pred_check
          %p294 = pneg %p130
        $region58: #{tpu_custom_call.1} parent=43 // pred_check_branch
          %296 = sbr.rel (%p294) target = $region60
        $region59: #{tpu_custom_call.1} parent=43 // pred_region
          %298 = dma.done [#allocation10], 32768
        $region60: #{tpu_custom_call.1} parent=43 // pred_fallthru
          _
        %s299 = sand.u32 %s33, 1
        %s300 = scalar_lea.sflag [#allocation4], %s299
        %s301 = sand.u32 %s33, 1
        %s302 = smul.addr %s301, 96
        %s303 = scalar_lea.vmem [#allocation3], %s302
        %p304 = pneg %p46
        %p305 = pneg %p43
        %p306 = pneg %p67
        %p307 = pneg %p64
        %p308 = pneg %p88
        %p309 = pneg %p85
        %p310 = pneg %p109
        %p311 = pneg %p106
        %p312 = pneg %p130
        %p313 = pneg %p127
        %p314 = pneg %p151
        %p315 = pneg %p148
        %p316 = pneg %p177
        %p317 = pneg %p174
        %s318 = sand.u32 %s164, 1
        %s319 = scalar_lea.sflag [#allocation5], %s318
        %s320 = sand.u32 %s164, 1
        %s321 = scalar_lea.vmem [#allocation11], %s320
        %s322 = smul.u32 3, %s25
        %v323 = vld [vmem:[#allocation8] sm:$0xff]
        %v324 = vld [vmem:[#allocation8 + $0x8] sm:$0xff]
        %v325 = vld [vmem:[%s2] sm:$0x1]
        %v326 = vld [vmem:[%s278] sm:$0xff]
        %v327 = vld [vmem:[%s278 + $0x8] sm:$0xff]
        %v328 = vld [vmem:[%s278 + $0x10] sm:$0xff]
        %v329 = vld [vmem:[%s278 + $0x18] sm:$0xff]
        %v330 = vld [vmem:[%s278 + $0x20] sm:$0xff]
        %v331 = vld [vmem:[%s278 + $0x28] sm:$0xff]
        %v332 = vld [vmem:[%s278 + $0x30] sm:$0xff]
        %v333 = vld [vmem:[%s278 + $0x38] sm:$0xff]
        %v334 = vld [vmem:[%s278 + $0x40] sm:$0xff]
        %v335 = vld [vmem:[%s278 + $0x48] sm:$0xff]
        %v336 = vld [vmem:[%s278 + $0x50] sm:$0xff]
        %v337 = vld [vmem:[%s278 + $0x58] sm:$0xff]
        %v338 = vld [vmem:[#allocation6] sm:$0xff]
        %v339 = vld [vmem:[#allocation6 + $0x8] sm:$0xf]
        %v340 = vld [vmem:[#allocation6 + $0xc] sm:$0xff]
        %v341 = vld [vmem:[#allocation6 + $0x14] sm:$0xf]
        %v342 = vld [vmem:[#allocation6 + $0x18] sm:$0xff]
        %v343 = vld [vmem:[#allocation6 + $0x20] sm:$0xf]
        %v344 = vld [vmem:[#allocation6 + $0x24] sm:$0xff]
        %v345 = vld [vmem:[#allocation6 + $0x2c] sm:$0xf]
        %v346 = vld [vmem:[#allocation6 + $0x30] sm:$0xff]
        %v347 = vld [vmem:[#allocation6 + $0x38] sm:$0xf]
        %v348 = vld [vmem:[#allocation6 + $0x3c] sm:$0xff]
        %v349 = vld [vmem:[#allocation6 + $0x44] sm:$0xf]
        %v350 = vld [vmem:[#allocation6 + $0x48] sm:$0xff]
        %v351 = vld [vmem:[#allocation6 + $0x50] sm:$0xf]
        %v352 = vld [vmem:[#allocation6 + $0x54] sm:$0xff]
        %v353 = vld [vmem:[#allocation6 + $0x5c] sm:$0xf]
        %v354 = vld [vmem:[#allocation6 + $0x60] sm:$0xff]
        %v355 = vld [vmem:[#allocation6 + $0x68] sm:$0xf]
        %v356 = vld [vmem:[#allocation6 + $0x6c] sm:$0xff]
        %v357 = vld [vmem:[#allocation6 + $0x74] sm:$0xf]
        %v358 = vld [vmem:[#allocation6 + $0x78] sm:$0xff]
        %v359 = vld [vmem:[#allocation6 + $0x80] sm:$0xf]
        %v360 = vld [vmem:[#allocation6 + $0x84] sm:$0xff]
        %v361 = vld [vmem:[#allocation6 + $0x8c] sm:$0xf]
        %v362 = vld [vmem:[#allocation6 + $0x90] sm:$0xff]
        %v363 = vld [vmem:[#allocation6 + $0x98] sm:$0xf]
        %v364 = vld [vmem:[#allocation6 + $0x9c] sm:$0xff]
        %v365 = vld [vmem:[#allocation6 + $0xa4] sm:$0xf]
        %v366 = vld [vmem:[#allocation6 + $0xa8] sm:$0xff]
        %v367 = vld [vmem:[#allocation6 + $0xb0] sm:$0xf]
        %v368 = vld [vmem:[#allocation6 + $0xb4] sm:$0xff]
        %v369 = vld [vmem:[#allocation6 + $0xbc] sm:$0xf]
        %v370 = vld [vmem:[#allocation6 + $0xc0] sm:$0xff]
        %v371 = vld [vmem:[#allocation6 + $0xc8] sm:$0xf]
        %v372 = vld [vmem:[#allocation6 + $0xcc] sm:$0xff]
        %v373 = vld [vmem:[#allocation6 + $0xd4] sm:$0xf]
        %v374 = vld [vmem:[#allocation6 + $0xd8] sm:$0xff]
        %v375 = vld [vmem:[#allocation6 + $0xe0] sm:$0xf]
        %v376 = vld [vmem:[#allocation6 + $0xe4] sm:$0xff]
        %v377 = vld [vmem:[#allocation6 + $0xec] sm:$0xf]
        %v378 = vld [vmem:[#allocation6 + $0xf0] sm:$0xff]
        %v379 = vld [vmem:[#allocation6 + $0xf8] sm:$0xf]
        %v380 = vld [vmem:[#allocation6 + $0xfc] sm:$0xff]
        %v381 = vld [vmem:[#allocation6 + $0x104] sm:$0xf]
        %v382 = vld [vmem:[#allocation6 + $0x108] sm:$0xff]
        %v383 = vld [vmem:[#allocation6 + $0x110] sm:$0xf]
        %v384 = vld [vmem:[#allocation6 + $0x114] sm:$0xff]
        %v385 = vld [vmem:[#allocation6 + $0x11c] sm:$0xf]
        %v386 = vld [vmem:[#allocation6 + $0x120] sm:$0xff]
        %v387 = vld [vmem:[#allocation6 + $0x128] sm:$0xf]
        %v388 = vld [vmem:[#allocation6 + $0x12c] sm:$0xff]
        %v389 = vld [vmem:[#allocation6 + $0x134] sm:$0xf]
        %v390 = vld [vmem:[#allocation6 + $0x138] sm:$0xff]
        %v391 = vld [vmem:[#allocation6 + $0x140] sm:$0xf]
        %v392 = vld [vmem:[#allocation6 + $0x144] sm:$0xff]
        %v393 = vld [vmem:[#allocation6 + $0x14c] sm:$0xf]
        %v394 = vld [vmem:[#allocation6 + $0x150] sm:$0xff]
        %v395 = vld [vmem:[#allocation6 + $0x158] sm:$0xf]
        %v396 = vld [vmem:[#allocation6 + $0x15c] sm:$0xff]
        %v397 = vld [vmem:[#allocation6 + $0x164] sm:$0xf]
        %v398 = vld [vmem:[#allocation6 + $0x168] sm:$0xff]
        %v399 = vld [vmem:[#allocation6 + $0x170] sm:$0xf]
        %v400 = vld [vmem:[#allocation6 + $0x174] sm:$0xff]
        %v401 = vld [vmem:[#allocation6 + $0x17c] sm:$0xf]
        %v402 = vld [vmem:[#allocation6 + $0x180] sm:$0xff]
        %v403 = vld [vmem:[#allocation6 + $0x188] sm:$0xf]
        %v404 = vld [vmem:[#allocation6 + $0x18c] sm:$0xff]
        %v405 = vld [vmem:[#allocation6 + $0x194] sm:$0xf]
        %v406 = vld [vmem:[#allocation6 + $0x198] sm:$0xff]
        %v407 = vld [vmem:[#allocation6 + $0x1a0] sm:$0xf]
        %v408 = vld [vmem:[#allocation6 + $0x1a4] sm:$0xff]
        %v409 = vld [vmem:[#allocation6 + $0x1ac] sm:$0xf]
        %v410 = vld [vmem:[#allocation6 + $0x1b0] sm:$0xff]
        %v411 = vld [vmem:[#allocation6 + $0x1b8] sm:$0xf]
        %v412 = vld [vmem:[#allocation6 + $0x1bc] sm:$0xff]
        %v413 = vld [vmem:[#allocation6 + $0x1c4] sm:$0xf]
        %v414 = vld [vmem:[#allocation6 + $0x1c8] sm:$0xff]
        %v415 = vld [vmem:[#allocation6 + $0x1d0] sm:$0xf]
        %v416 = vld [vmem:[#allocation6 + $0x1d4] sm:$0xff]
        %v417 = vld [vmem:[#allocation6 + $0x1dc] sm:$0xf]
        %v418 = vld [vmem:[#allocation6 + $0x1e0] sm:$0xff]
        %v419 = vld [vmem:[#allocation6 + $0x1e8] sm:$0xf]
        %v420 = vld [vmem:[#allocation6 + $0x1ec] sm:$0xff]
        %v421 = vld [vmem:[#allocation6 + $0x1f4] sm:$0xf]
        %v422 = vld [vmem:[#allocation6 + $0x1f8] sm:$0xff]
        %v423 = vld [vmem:[#allocation6 + $0x200] sm:$0xf]
        %v424 = vld [vmem:[#allocation6 + $0x204] sm:$0xff]
        %v425 = vld [vmem:[#allocation6 + $0x20c] sm:$0xf]
        %v426 = vld [vmem:[#allocation6 + $0x210] sm:$0xff]
        %v427 = vld [vmem:[#allocation6 + $0x218] sm:$0xf]
        %v428 = vld [vmem:[#allocation6 + $0x21c] sm:$0xff]
        %v429 = vld [vmem:[#allocation6 + $0x224] sm:$0xf]
        %v430 = vld [vmem:[#allocation6 + $0x228] sm:$0xff]
        %v431 = vld [vmem:[#allocation6 + $0x230] sm:$0xf]
        %v432 = vld [vmem:[#allocation6 + $0x234] sm:$0xff]
        %v433 = vld [vmem:[#allocation6 + $0x23c] sm:$0xf]
        %v434 = vld [vmem:[#allocation6 + $0x240] sm:$0xff]
        %v435 = vld [vmem:[#allocation6 + $0x248] sm:$0xf]
        %v436 = vld [vmem:[#allocation6 + $0x24c] sm:$0xff]
        %v437 = vld [vmem:[#allocation6 + $0x254] sm:$0xf]
        %v438 = vld [vmem:[#allocation6 + $0x258] sm:$0xff]
        %v439 = vld [vmem:[#allocation6 + $0x260] sm:$0xf]
        %v440 = vld [vmem:[#allocation6 + $0x264] sm:$0xff]
        %v441 = vld [vmem:[#allocation6 + $0x26c] sm:$0xf]
        %v442 = vld [vmem:[#allocation6 + $0x270] sm:$0xff]
        %v443 = vld [vmem:[#allocation6 + $0x278] sm:$0xf]
        %v444 = vld [vmem:[#allocation6 + $0x27c] sm:$0xff]
        %v445 = vld [vmem:[#allocation6 + $0x284] sm:$0xf]
        %v446 = vld [vmem:[#allocation6 + $0x288] sm:$0xff]
        %v447 = vld [vmem:[#allocation6 + $0x290] sm:$0xf]
        %v448 = vld [vmem:[#allocation6 + $0x294] sm:$0xff]
        %v449 = vld [vmem:[#allocation6 + $0x29c] sm:$0xf]
        %v450 = vld [vmem:[#allocation6 + $0x2a0] sm:$0xff]
        %v451 = vld [vmem:[#allocation6 + $0x2a8] sm:$0xf]
        %v452 = vld [vmem:[#allocation6 + $0x2ac] sm:$0xff]
        %v453 = vld [vmem:[#allocation6 + $0x2b4] sm:$0xf]
        %v454 = vld [vmem:[#allocation6 + $0x2b8] sm:$0xff]
        %v455 = vld [vmem:[#allocation6 + $0x2c0] sm:$0xf]
        %v456 = vld [vmem:[#allocation6 + $0x2c4] sm:$0xff]
        %v457 = vld [vmem:[#allocation6 + $0x2cc] sm:$0xf]
        %v458 = vld [vmem:[#allocation6 + $0x2d0] sm:$0xff]
        %v459 = vld [vmem:[#allocation6 + $0x2d8] sm:$0xf]
        %v460 = vld [vmem:[#allocation6 + $0x2dc] sm:$0xff]
        %v461 = vld [vmem:[#allocation6 + $0x2e4] sm:$0xf]
        %v462 = vld [vmem:[#allocation6 + $0x2e8] sm:$0xff]
        %v463 = vld [vmem:[#allocation6 + $0x2f0] sm:$0xf]
        %v464 = vld [vmem:[#allocation6 + $0x2f4] sm:$0xff]
        %v465 = vld [vmem:[#allocation6 + $0x2fc] sm:$0xf]
        %v466 = vld [vmem:[#allocation6 + $0x300] sm:$0xff]
        %v467 = vld [vmem:[#allocation6 + $0x308] sm:$0xf]
        %v468 = vld [vmem:[#allocation6 + $0x30c] sm:$0xff]
        %v469 = vld [vmem:[#allocation6 + $0x314] sm:$0xf]
        %v470 = vld [vmem:[#allocation6 + $0x318] sm:$0xff]
        %v471 = vld [vmem:[#allocation6 + $0x320] sm:$0xf]
        %v472 = vld [vmem:[#allocation6 + $0x324] sm:$0xff]
        %v473 = vld [vmem:[#allocation6 + $0x32c] sm:$0xf]
        %v474 = vld [vmem:[#allocation6 + $0x330] sm:$0xff]
        %v475 = vld [vmem:[#allocation6 + $0x338] sm:$0xf]
        %v476 = vld [vmem:[#allocation6 + $0x33c] sm:$0xff]
        %v477 = vld [vmem:[#allocation6 + $0x344] sm:$0xf]
        %v478 = vld [vmem:[#allocation6 + $0x348] sm:$0xff]
        %v479 = vld [vmem:[#allocation6 + $0x350] sm:$0xf]
        %v480 = vld [vmem:[#allocation6 + $0x354] sm:$0xff]
        %v481 = vld [vmem:[#allocation6 + $0x35c] sm:$0xf]
        %v482 = vld [vmem:[#allocation6 + $0x360] sm:$0xff]
        %v483 = vld [vmem:[#allocation6 + $0x368] sm:$0xf]
        %v484 = vld [vmem:[#allocation6 + $0x36c] sm:$0xff]
        %v485 = vld [vmem:[#allocation6 + $0x374] sm:$0xf]
        %v486 = vld [vmem:[#allocation6 + $0x378] sm:$0xff]
        %v487 = vld [vmem:[#allocation6 + $0x380] sm:$0xf]
        %v488 = vld [vmem:[#allocation6 + $0x384] sm:$0xff]
        %v489 = vld [vmem:[#allocation6 + $0x38c] sm:$0xf]
        %v490 = vld [vmem:[#allocation6 + $0x390] sm:$0xff]
        %v491 = vld [vmem:[#allocation6 + $0x398] sm:$0xf]
        %v492 = vld [vmem:[#allocation6 + $0x39c] sm:$0xff]
        %v493 = vld [vmem:[#allocation6 + $0x3a4] sm:$0xf]
        %v494 = vld [vmem:[#allocation6 + $0x3a8] sm:$0xff]
        %v495 = vld [vmem:[#allocation6 + $0x3b0] sm:$0xf]
        %v496 = vld [vmem:[#allocation6 + $0x3b4] sm:$0xff]
        %v497 = vld [vmem:[#allocation6 + $0x3bc] sm:$0xf]
        %v498 = vld [vmem:[#allocation6 + $0x3c0] sm:$0xff]
        %v499 = vld [vmem:[#allocation6 + $0x3c8] sm:$0xf]
        %v500 = vld [vmem:[#allocation6 + $0x3cc] sm:$0xff]
        %v501 = vld [vmem:[#allocation6 + $0x3d4] sm:$0xf]
        %v502 = vld [vmem:[#allocation6 + $0x3d8] sm:$0xff]
        %v503 = vld [vmem:[#allocation6 + $0x3e0] sm:$0xf]
        %v504 = vld [vmem:[#allocation6 + $0x3e4] sm:$0xff]
        %v505 = vld [vmem:[#allocation6 + $0x3ec] sm:$0xf]
        %v506 = vld [vmem:[#allocation6 + $0x3f0] sm:$0xff]
        %v507 = vld [vmem:[#allocation6 + $0x3f8] sm:$0xf]
        %v508 = vld [vmem:[#allocation6 + $0x3fc] sm:$0xff]
        %v509 = vld [vmem:[#allocation6 + $0x404] sm:$0xf]
        %v510 = vld [vmem:[#allocation6 + $0x408] sm:$0xff]
        %v511 = vld [vmem:[#allocation6 + $0x410] sm:$0xf]
        %v512 = vld [vmem:[#allocation6 + $0x414] sm:$0xff]
        %v513 = vld [vmem:[#allocation6 + $0x41c] sm:$0xf]
        %v514 = vld [vmem:[#allocation6 + $0x420] sm:$0xff]
        %v515 = vld [vmem:[#allocation6 + $0x428] sm:$0xf]
        %v516 = vld [vmem:[#allocation6 + $0x42c] sm:$0xff]
        %v517 = vld [vmem:[#allocation6 + $0x434] sm:$0xf]
        %v518 = vld [vmem:[#allocation6 + $0x438] sm:$0xff]
        %v519 = vld [vmem:[#allocation6 + $0x440] sm:$0xf]
        %v520 = vld [vmem:[#allocation6 + $0x444] sm:$0xff]
        %v521 = vld [vmem:[#allocation6 + $0x44c] sm:$0xf]
        %v522 = vld [vmem:[#allocation6 + $0x450] sm:$0xff]
        %v523 = vld [vmem:[#allocation6 + $0x458] sm:$0xf]
        %v524 = vld [vmem:[#allocation6 + $0x45c] sm:$0xff]
        %v525 = vld [vmem:[#allocation6 + $0x464] sm:$0xf]
        %v526 = vld [vmem:[#allocation6 + $0x468] sm:$0xff]
        %v527 = vld [vmem:[#allocation6 + $0x470] sm:$0xf]
        %v528 = vld [vmem:[#allocation6 + $0x474] sm:$0xff]
        %v529 = vld [vmem:[#allocation6 + $0x47c] sm:$0xf]
        %v530 = vld [vmem:[#allocation6 + $0x480] sm:$0xff]
        %v531 = vld [vmem:[#allocation6 + $0x488] sm:$0xf]
        %v532 = vld [vmem:[#allocation6 + $0x48c] sm:$0xff]
        %v533 = vld [vmem:[#allocation6 + $0x494] sm:$0xf]
        %v534 = vld [vmem:[#allocation6 + $0x498] sm:$0xff]
        %v535 = vld [vmem:[#allocation6 + $0x4a0] sm:$0xf]
        %v536 = vld [vmem:[#allocation6 + $0x4a4] sm:$0xff]
        %v537 = vld [vmem:[#allocation6 + $0x4ac] sm:$0xf]
        %v538 = vld [vmem:[#allocation6 + $0x4b0] sm:$0xff]
        %v539 = vld [vmem:[#allocation6 + $0x4b8] sm:$0xf]
        %v540 = vld [vmem:[#allocation6 + $0x4bc] sm:$0xff]
        %v541 = vld [vmem:[#allocation6 + $0x4c4] sm:$0xf]
        %v542 = vld [vmem:[#allocation6 + $0x4c8] sm:$0xff]
        %v543 = vld [vmem:[#allocation6 + $0x4d0] sm:$0xf]
        %v544 = vld [vmem:[#allocation6 + $0x4d4] sm:$0xff]
        %v545 = vld [vmem:[#allocation6 + $0x4dc] sm:$0xf]
        %v546 = vld [vmem:[#allocation6 + $0x4e0] sm:$0xff]
        %v547 = vld [vmem:[#allocation6 + $0x4e8] sm:$0xf]
        %v548 = vld [vmem:[#allocation6 + $0x4ec] sm:$0xff]
        %v549 = vld [vmem:[#allocation6 + $0x4f4] sm:$0xf]
        %v550 = vld [vmem:[#allocation6 + $0x4f8] sm:$0xff]
        %v551 = vld [vmem:[#allocation6 + $0x500] sm:$0xf]
        %v552 = vld [vmem:[#allocation6 + $0x504] sm:$0xff]
        %v553 = vld [vmem:[#allocation6 + $0x50c] sm:$0xf]
        %v554 = vld [vmem:[#allocation6 + $0x510] sm:$0xff]
        %v555 = vld [vmem:[#allocation6 + $0x518] sm:$0xf]
        %v556 = vld [vmem:[#allocation6 + $0x51c] sm:$0xff]
        %v557 = vld [vmem:[#allocation6 + $0x524] sm:$0xf]
        %v558 = vld [vmem:[#allocation6 + $0x528] sm:$0xff]
        %v559 = vld [vmem:[#allocation6 + $0x530] sm:$0xf]
        %v560 = vld [vmem:[#allocation6 + $0x534] sm:$0xff]
        %v561 = vld [vmem:[#allocation6 + $0x53c] sm:$0xf]
        %v562 = vld [vmem:[#allocation6 + $0x540] sm:$0xff]
        %v563 = vld [vmem:[#allocation6 + $0x548] sm:$0xf]
        %v564 = vld [vmem:[#allocation6 + $0x54c] sm:$0xff]
        %v565 = vld [vmem:[#allocation6 + $0x554] sm:$0xf]
        %v566 = vld [vmem:[#allocation6 + $0x558] sm:$0xff]
        %v567 = vld [vmem:[#allocation6 + $0x560] sm:$0xf]
        %v568 = vld [vmem:[#allocation6 + $0x564] sm:$0xff]
        %v569 = vld [vmem:[#allocation6 + $0x56c] sm:$0xf]
        %v570 = vld [vmem:[#allocation6 + $0x570] sm:$0xff]
        %v571 = vld [vmem:[#allocation6 + $0x578] sm:$0xf]
        %v572 = vld [vmem:[#allocation6 + $0x57c] sm:$0xff]
        %v573 = vld [vmem:[#allocation6 + $0x584] sm:$0xf]
        %v574 = vld [vmem:[#allocation6 + $0x588] sm:$0xff]
        %v575 = vld [vmem:[#allocation6 + $0x590] sm:$0xf]
        %v576 = vld [vmem:[#allocation6 + $0x594] sm:$0xff]
        %v577 = vld [vmem:[#allocation6 + $0x59c] sm:$0xf]
        %v578 = vld [vmem:[#allocation6 + $0x5a0] sm:$0xff]
        %v579 = vld [vmem:[#allocation6 + $0x5a8] sm:$0xf]
        %v580 = vld [vmem:[#allocation6 + $0x5ac] sm:$0xff]
        %v581 = vld [vmem:[#allocation6 + $0x5b4] sm:$0xf]
        %v582 = vld [vmem:[#allocation6 + $0x5b8] sm:$0xff]
        %v583 = vld [vmem:[#allocation6 + $0x5c0] sm:$0xf]
        %v584 = vld [vmem:[#allocation6 + $0x5c4] sm:$0xff]
        %v585 = vld [vmem:[#allocation6 + $0x5cc] sm:$0xf]
        %v586 = vld [vmem:[#allocation6 + $0x5d0] sm:$0xff]
        %v587 = vld [vmem:[#allocation6 + $0x5d8] sm:$0xf]
        %v588 = vld [vmem:[#allocation6 + $0x5dc] sm:$0xff]
        %v589 = vld [vmem:[#allocation6 + $0x5e4] sm:$0xf]
        %v590 = vld [vmem:[#allocation6 + $0x5e8] sm:$0xff]
        %v591 = vld [vmem:[#allocation6 + $0x5f0] sm:$0xf]
        %v592 = vld [vmem:[#allocation6 + $0x5f4] sm:$0xff]
        %v593 = vld [vmem:[#allocation6 + $0x5fc] sm:$0xf]
        %v606 = vunpack.c.l.b16 %v326
        %v607 = vunpack.c.h.b16 %v326
        %v608 = vunpack.c.l.b16 %v327
        %v609 = vunpack.c.h.b16 %v327
        %v610 = vunpack.c.l.b16 %v328
        %v611 = vunpack.c.h.b16 %v328
        %v612 = vunpack.c.l.b16 %v329
        %v613 = vunpack.c.h.b16 %v329
        %v614 = vunpack.c.l.b16 %v330
        %v615 = vunpack.c.h.b16 %v330
        %v616 = vunpack.c.l.b16 %v331
        %v617 = vunpack.c.h.b16 %v331
        %v618 = vunpack.c.l.b16 %v332
        %v619 = vunpack.c.h.b16 %v332
        %v620 = vunpack.c.l.b16 %v333
        %v621 = vunpack.c.h.b16 %v333
        %v622 = vunpack.c.l.b16 %v334
        %v623 = vunpack.c.h.b16 %v334
        %v624 = vunpack.c.l.b16 %v335
        %v625 = vunpack.c.h.b16 %v335
        %v626 = vunpack.c.l.b16 %v336
        %v627 = vunpack.c.h.b16 %v336
        %v628 = vunpack.c.l.b16 %v337
        %v629 = vunpack.c.h.b16 %v337
        %v630 = vpack.c.b16 %v614, %v606
        %v631 = vpack.c.b16 %v615, %v607
        %v632 = vpack.c.b16 %v616, %v608
        %v633 = vpack.c.b16 %v617, %v609
        %v634 = vpack.c.b16 %v618, %v610
        %v635 = vpack.c.b16 %v619, %v611
        %v636 = vpack.c.b16 %v620, %v612
        %v637 = vpack.c.b16 %v621, %v613
        %v638 = vpack.c.b16 %v622, %v622
        %v639 = vpack.c.b16 %v623, %v623
        %v640 = vpack.c.b16 %v624, %v624
        %v641 = vpack.c.b16 %v625, %v625
        %v642 = vpack.c.b16 %v626, %v626
        %v643 = vpack.c.b16 %v627, %v627
        %v644 = vpack.c.b16 %v628, %v628
        %v645 = vpack.c.b16 %v629, %v629
        %v918 = vunpack.c.l.b16 %v338
        %v919 = vunpack.c.h.b16 %v338
        %v920 = vunpack.c.l.b16 %v339
        %v921 = vunpack.c.l.b16 %v340
        %v922 = vunpack.c.h.b16 %v340
        %v923 = vunpack.c.l.b16 %v341
        %v924 = vunpack.c.l.b16 %v342
        %v925 = vunpack.c.h.b16 %v342
        %v926 = vunpack.c.l.b16 %v343
        %v927 = vunpack.c.l.b16 %v344
        %v928 = vunpack.c.h.b16 %v344
        %v929 = vunpack.c.l.b16 %v345
        %v930 = vunpack.c.l.b16 %v346
        %v931 = vunpack.c.h.b16 %v346
        %v932 = vunpack.c.l.b16 %v347
        %v933 = vunpack.c.l.b16 %v348
        %v934 = vunpack.c.h.b16 %v348
        %v935 = vunpack.c.l.b16 %v349
        %v936 = vunpack.c.l.b16 %v350
        %v937 = vunpack.c.h.b16 %v350
        %v938 = vunpack.c.l.b16 %v351
        %v939 = vunpack.c.l.b16 %v352
        %v940 = vunpack.c.h.b16 %v352
        %v941 = vunpack.c.l.b16 %v353
        %v942 = vunpack.c.l.b16 %v354
        %v943 = vunpack.c.h.b16 %v354
        %v944 = vunpack.c.l.b16 %v355
        %v945 = vunpack.c.l.b16 %v356
        %v946 = vunpack.c.h.b16 %v356
        %v947 = vunpack.c.l.b16 %v357
        %v948 = vunpack.c.l.b16 %v358
        %v949 = vunpack.c.h.b16 %v358
        %v950 = vunpack.c.l.b16 %v359
        %v951 = vunpack.c.l.b16 %v360
        %v952 = vunpack.c.h.b16 %v360
        %v953 = vunpack.c.l.b16 %v361
        %v954 = vunpack.c.l.b16 %v362
        %v955 = vunpack.c.h.b16 %v362
        %v956 = vunpack.c.l.b16 %v363
        %v957 = vunpack.c.l.b16 %v364
        %v958 = vunpack.c.h.b16 %v364
        %v959 = vunpack.c.l.b16 %v365
        %v960 = vunpack.c.l.b16 %v366
        %v961 = vunpack.c.h.b16 %v366
        %v962 = vunpack.c.l.b16 %v367
        %v963 = vunpack.c.l.b16 %v368
        %v964 = vunpack.c.h.b16 %v368
        %v965 = vunpack.c.l.b16 %v369
        %v966 = vunpack.c.l.b16 %v370
        %v967 = vunpack.c.h.b16 %v370
        %v968 = vunpack.c.l.b16 %v371
        %v969 = vunpack.c.l.b16 %v372
        %v970 = vunpack.c.h.b16 %v372
        %v971 = vunpack.c.l.b16 %v373
        %v972 = vunpack.c.l.b16 %v374
        %v973 = vunpack.c.h.b16 %v374
        %v974 = vunpack.c.l.b16 %v375
        %v975 = vunpack.c.l.b16 %v376
        %v976 = vunpack.c.h.b16 %v376
        %v977 = vunpack.c.l.b16 %v377
        %v978 = vunpack.c.l.b16 %v378
        %v979 = vunpack.c.h.b16 %v378
        %v980 = vunpack.c.l.b16 %v379
        %v981 = vunpack.c.l.b16 %v380
        %v982 = vunpack.c.h.b16 %v380
        %v983 = vunpack.c.l.b16 %v381
        %v984 = vunpack.c.l.b16 %v382
        %v985 = vunpack.c.h.b16 %v382
        %v986 = vunpack.c.l.b16 %v383
        %v987 = vunpack.c.l.b16 %v384
        %v988 = vunpack.c.h.b16 %v384
        %v989 = vunpack.c.l.b16 %v385
        %v990 = vunpack.c.l.b16 %v386
        %v991 = vunpack.c.h.b16 %v386
        %v992 = vunpack.c.l.b16 %v387
        %v993 = vunpack.c.l.b16 %v388
        %v994 = vunpack.c.h.b16 %v388
        %v995 = vunpack.c.l.b16 %v389
        %v996 = vunpack.c.l.b16 %v390
        %v997 = vunpack.c.h.b16 %v390
        %v998 = vunpack.c.l.b16 %v391
        %v999 = vunpack.c.l.b16 %v392
        %v1000 = vunpack.c.h.b16 %v392
        %v1001 = vunpack.c.l.b16 %v393
        %v1002 = vunpack.c.l.b16 %v394
        %v1003 = vunpack.c.h.b16 %v394
        %v1004 = vunpack.c.l.b16 %v395
        %v1005 = vunpack.c.l.b16 %v396
        %v1006 = vunpack.c.h.b16 %v396
        %v1007 = vunpack.c.l.b16 %v397
        %v1008 = vunpack.c.l.b16 %v398
        %v1009 = vunpack.c.h.b16 %v398
        %v1010 = vunpack.c.l.b16 %v399
        %v1011 = vunpack.c.l.b16 %v400
        %v1012 = vunpack.c.h.b16 %v400
        %v1013 = vunpack.c.l.b16 %v401
        %v1014 = vunpack.c.l.b16 %v402
        %v1015 = vunpack.c.h.b16 %v402
        %v1016 = vunpack.c.l.b16 %v403
        %v1017 = vunpack.c.l.b16 %v404
        %v1018 = vunpack.c.h.b16 %v404
        %v1019 = vunpack.c.l.b16 %v405
        %v1020 = vunpack.c.l.b16 %v406
        %v1021 = vunpack.c.h.b16 %v406
        %v1022 = vunpack.c.l.b16 %v407
        %v1023 = vunpack.c.l.b16 %v408
        %v1024 = vunpack.c.h.b16 %v408
        %v1025 = vunpack.c.l.b16 %v409
        %v1026 = vunpack.c.l.b16 %v410
        %v1027 = vunpack.c.h.b16 %v410
        %v1028 = vunpack.c.l.b16 %v411
        %v1029 = vunpack.c.l.b16 %v412
        %v1030 = vunpack.c.h.b16 %v412
        %v1031 = vunpack.c.l.b16 %v413
        %v1032 = vunpack.c.l.b16 %v414
        %v1033 = vunpack.c.h.b16 %v414
        %v1034 = vunpack.c.l.b16 %v415
        %v1035 = vunpack.c.l.b16 %v416
        %v1036 = vunpack.c.h.b16 %v416
        %v1037 = vunpack.c.l.b16 %v417
        %v1038 = vunpack.c.l.b16 %v418
        %v1039 = vunpack.c.h.b16 %v418
        %v1040 = vunpack.c.l.b16 %v419
        %v1041 = vunpack.c.l.b16 %v420
        %v1042 = vunpack.c.h.b16 %v420
        %v1043 = vunpack.c.l.b16 %v421
        %v1044 = vunpack.c.l.b16 %v422
        %v1045 = vunpack.c.h.b16 %v422
        %v1046 = vunpack.c.l.b16 %v423
        %v1047 = vunpack.c.l.b16 %v424
        %v1048 = vunpack.c.h.b16 %v424
        %v1049 = vunpack.c.l.b16 %v425
        %v1050 = vunpack.c.l.b16 %v426
        %v1051 = vunpack.c.h.b16 %v426
        %v1052 = vunpack.c.l.b16 %v427
        %v1053 = vunpack.c.l.b16 %v428
        %v1054 = vunpack.c.h.b16 %v428
        %v1055 = vunpack.c.l.b16 %v429
        %v1056 = vunpack.c.l.b16 %v430
        %v1057 = vunpack.c.h.b16 %v430
        %v1058 = vunpack.c.l.b16 %v431
        %v1059 = vunpack.c.l.b16 %v432
        %v1060 = vunpack.c.h.b16 %v432
        %v1061 = vunpack.c.l.b16 %v433
        %v1062 = vunpack.c.l.b16 %v434
        %v1063 = vunpack.c.h.b16 %v434
        %v1064 = vunpack.c.l.b16 %v435
        %v1065 = vunpack.c.l.b16 %v436
        %v1066 = vunpack.c.h.b16 %v436
        %v1067 = vunpack.c.l.b16 %v437
        %v1068 = vunpack.c.l.b16 %v438
        %v1069 = vunpack.c.h.b16 %v438
        %v1070 = vunpack.c.l.b16 %v439
        %v1071 = vunpack.c.l.b16 %v440
        %v1072 = vunpack.c.h.b16 %v440
        %v1073 = vunpack.c.l.b16 %v441
        %v1074 = vunpack.c.l.b16 %v442
        %v1075 = vunpack.c.h.b16 %v442
        %v1076 = vunpack.c.l.b16 %v443
        %v1077 = vunpack.c.l.b16 %v444
        %v1078 = vunpack.c.h.b16 %v444
        %v1079 = vunpack.c.l.b16 %v445
        %v1080 = vunpack.c.l.b16 %v446
        %v1081 = vunpack.c.h.b16 %v446
        %v1082 = vunpack.c.l.b16 %v447
        %v1083 = vunpack.c.l.b16 %v448
        %v1084 = vunpack.c.h.b16 %v448
        %v1085 = vunpack.c.l.b16 %v449
        %v1086 = vunpack.c.l.b16 %v450
        %v1087 = vunpack.c.h.b16 %v450
        %v1088 = vunpack.c.l.b16 %v451
        %v1089 = vunpack.c.l.b16 %v452
        %v1090 = vunpack.c.h.b16 %v452
        %v1091 = vunpack.c.l.b16 %v453
        %v1092 = vunpack.c.l.b16 %v454
        %v1093 = vunpack.c.h.b16 %v454
        %v1094 = vunpack.c.l.b16 %v455
        %v1095 = vunpack.c.l.b16 %v456
        %v1096 = vunpack.c.h.b16 %v456
        %v1097 = vunpack.c.l.b16 %v457
        %v1098 = vunpack.c.l.b16 %v458
        %v1099 = vunpack.c.h.b16 %v458
        %v1100 = vunpack.c.l.b16 %v459
        %v1101 = vunpack.c.l.b16 %v460
        %v1102 = vunpack.c.h.b16 %v460
        %v1103 = vunpack.c.l.b16 %v461
        %v1104 = vunpack.c.l.b16 %v462
        %v1105 = vunpack.c.h.b16 %v462
        %v1106 = vunpack.c.l.b16 %v463
        %v1107 = vunpack.c.l.b16 %v464
        %v1108 = vunpack.c.h.b16 %v464
        %v1109 = vunpack.c.l.b16 %v465
        %v1110 = vunpack.c.l.b16 %v466
        %v1111 = vunpack.c.h.b16 %v466
        %v1112 = vunpack.c.l.b16 %v467
        %v1113 = vunpack.c.l.b16 %v468
        %v1114 = vunpack.c.h.b16 %v468
        %v1115 = vunpack.c.l.b16 %v469
        %v1116 = vunpack.c.l.b16 %v470
        %v1117 = vunpack.c.h.b16 %v470
        %v1118 = vunpack.c.l.b16 %v471
        %v1119 = vunpack.c.l.b16 %v472
        %v1120 = vunpack.c.h.b16 %v472
        %v1121 = vunpack.c.l.b16 %v473
        %v1122 = vunpack.c.l.b16 %v474
        %v1123 = vunpack.c.h.b16 %v474
        %v1124 = vunpack.c.l.b16 %v475
        %v1125 = vunpack.c.l.b16 %v476
        %v1126 = vunpack.c.h.b16 %v476
        %v1127 = vunpack.c.l.b16 %v477
        %v1128 = vunpack.c.l.b16 %v478
        %v1129 = vunpack.c.h.b16 %v478
        %v1130 = vunpack.c.l.b16 %v479
        %v1131 = vunpack.c.l.b16 %v480
        %v1132 = vunpack.c.h.b16 %v480
        %v1133 = vunpack.c.l.b16 %v481
        %v1134 = vunpack.c.l.b16 %v482
        %v1135 = vunpack.c.h.b16 %v482
        %v1136 = vunpack.c.l.b16 %v483
        %v1137 = vunpack.c.l.b16 %v484
        %v1138 = vunpack.c.h.b16 %v484
        %v1139 = vunpack.c.l.b16 %v485
        %v1140 = vunpack.c.l.b16 %v486
        %v1141 = vunpack.c.h.b16 %v486
        %v1142 = vunpack.c.l.b16 %v487
        %v1143 = vunpack.c.l.b16 %v488
        %v1144 = vunpack.c.h.b16 %v488
        %v1145 = vunpack.c.l.b16 %v489
        %v1146 = vunpack.c.l.b16 %v490
        %v1147 = vunpack.c.h.b16 %v490
        %v1148 = vunpack.c.l.b16 %v491
        %v1149 = vunpack.c.l.b16 %v492
        %v1150 = vunpack.c.h.b16 %v492
        %v1151 = vunpack.c.l.b16 %v493
        %v1152 = vunpack.c.l.b16 %v494
        %v1153 = vunpack.c.h.b16 %v494
        %v1154 = vunpack.c.l.b16 %v495
        %v1155 = vunpack.c.l.b16 %v496
        %v1156 = vunpack.c.h.b16 %v496
        %v1157 = vunpack.c.l.b16 %v497
        %v1158 = vunpack.c.l.b16 %v498
        %v1159 = vunpack.c.h.b16 %v498
        %v1160 = vunpack.c.l.b16 %v499
        %v1161 = vunpack.c.l.b16 %v500
        %v1162 = vunpack.c.h.b16 %v500
        %v1163 = vunpack.c.l.b16 %v501
        %v1164 = vunpack.c.l.b16 %v502
        %v1165 = vunpack.c.h.b16 %v502
        %v1166 = vunpack.c.l.b16 %v503
        %v1167 = vunpack.c.l.b16 %v504
        %v1168 = vunpack.c.h.b16 %v504
        %v1169 = vunpack.c.l.b16 %v505
        %v1170 = vunpack.c.l.b16 %v506
        %v1171 = vunpack.c.h.b16 %v506
        %v1172 = vunpack.c.l.b16 %v507
        %v1173 = vunpack.c.l.b16 %v508
        %v1174 = vunpack.c.h.b16 %v508
        %v1175 = vunpack.c.l.b16 %v509
        %v1176 = vunpack.c.l.b16 %v510
        %v1177 = vunpack.c.h.b16 %v510
        %v1178 = vunpack.c.l.b16 %v511
        %v1179 = vunpack.c.l.b16 %v512
        %v1180 = vunpack.c.h.b16 %v512
        %v1181 = vunpack.c.l.b16 %v513
        %v1182 = vunpack.c.l.b16 %v514
        %v1183 = vunpack.c.h.b16 %v514
        %v1184 = vunpack.c.l.b16 %v515
        %v1185 = vunpack.c.l.b16 %v516
        %v1186 = vunpack.c.h.b16 %v516
        %v1187 = vunpack.c.l.b16 %v517
        %v1188 = vunpack.c.l.b16 %v518
        %v1189 = vunpack.c.h.b16 %v518
        %v1190 = vunpack.c.l.b16 %v519
        %v1191 = vunpack.c.l.b16 %v520
        %v1192 = vunpack.c.h.b16 %v520
        %v1193 = vunpack.c.l.b16 %v521
        %v1194 = vunpack.c.l.b16 %v522
        %v1195 = vunpack.c.h.b16 %v522
        %v1196 = vunpack.c.l.b16 %v523
        %v1197 = vunpack.c.l.b16 %v524
        %v1198 = vunpack.c.h.b16 %v524
        %v1199 = vunpack.c.l.b16 %v525
        %v1200 = vunpack.c.l.b16 %v526
        %v1201 = vunpack.c.h.b16 %v526
        %v1202 = vunpack.c.l.b16 %v527
        %v1203 = vunpack.c.l.b16 %v528
        %v1204 = vunpack.c.h.b16 %v528
        %v1205 = vunpack.c.l.b16 %v529
        %v1206 = vunpack.c.l.b16 %v530
        %v1207 = vunpack.c.h.b16 %v530
        %v1208 = vunpack.c.l.b16 %v531
        %v1209 = vunpack.c.l.b16 %v532
        %v1210 = vunpack.c.h.b16 %v532
        %v1211 = vunpack.c.l.b16 %v533
        %v1212 = vunpack.c.l.b16 %v534
        %v1213 = vunpack.c.h.b16 %v534
        %v1214 = vunpack.c.l.b16 %v535
        %v1215 = vunpack.c.l.b16 %v536
        %v1216 = vunpack.c.h.b16 %v536
        %v1217 = vunpack.c.l.b16 %v537
        %v1218 = vunpack.c.l.b16 %v538
        %v1219 = vunpack.c.h.b16 %v538
        %v1220 = vunpack.c.l.b16 %v539
        %v1221 = vunpack.c.l.b16 %v540
        %v1222 = vunpack.c.h.b16 %v540
        %v1223 = vunpack.c.l.b16 %v541
        %v1224 = vunpack.c.l.b16 %v542
        %v1225 = vunpack.c.h.b16 %v542
        %v1226 = vunpack.c.l.b16 %v543
        %v1227 = vunpack.c.l.b16 %v544
        %v1228 = vunpack.c.h.b16 %v544
        %v1229 = vunpack.c.l.b16 %v545
        %v1230 = vunpack.c.l.b16 %v546
        %v1231 = vunpack.c.h.b16 %v546
        %v1232 = vunpack.c.l.b16 %v547
        %v1233 = vunpack.c.l.b16 %v548
        %v1234 = vunpack.c.h.b16 %v548
        %v1235 = vunpack.c.l.b16 %v549
        %v1236 = vunpack.c.l.b16 %v550
        %v1237 = vunpack.c.h.b16 %v550
        %v1238 = vunpack.c.l.b16 %v551
        %v1239 = vunpack.c.l.b16 %v552
        %v1240 = vunpack.c.h.b16 %v552
        %v1241 = vunpack.c.l.b16 %v553
        %v1242 = vunpack.c.l.b16 %v554
        %v1243 = vunpack.c.h.b16 %v554
        %v1244 = vunpack.c.l.b16 %v555
        %v1245 = vunpack.c.l.b16 %v556
        %v1246 = vunpack.c.h.b16 %v556
        %v1247 = vunpack.c.l.b16 %v557
        %v1248 = vunpack.c.l.b16 %v558
        %v1249 = vunpack.c.h.b16 %v558
        %v1250 = vunpack.c.l.b16 %v559
        %v1251 = vunpack.c.l.b16 %v560
        %v1252 = vunpack.c.h.b16 %v560
        %v1253 = vunpack.c.l.b16 %v561
        %v1254 = vunpack.c.l.b16 %v562
        %v1255 = vunpack.c.h.b16 %v562
        %v1256 = vunpack.c.l.b16 %v563
        %v1257 = vunpack.c.l.b16 %v564
        %v1258 = vunpack.c.h.b16 %v564
        %v1259 = vunpack.c.l.b16 %v565
        %v1260 = vunpack.c.l.b16 %v566
        %v1261 = vunpack.c.h.b16 %v566
        %v1262 = vunpack.c.l.b16 %v567
        %v1263 = vunpack.c.l.b16 %v568
        %v1264 = vunpack.c.h.b16 %v568
        %v1265 = vunpack.c.l.b16 %v569
        %v1266 = vunpack.c.l.b16 %v570
        %v1267 = vunpack.c.h.b16 %v570
        %v1268 = vunpack.c.l.b16 %v571
        %v1269 = vunpack.c.l.b16 %v572
        %v1270 = vunpack.c.h.b16 %v572
        %v1271 = vunpack.c.l.b16 %v573
        %v1272 = vunpack.c.l.b16 %v574
        %v1273 = vunpack.c.h.b16 %v574
        %v1274 = vunpack.c.l.b16 %v575
        %v1275 = vunpack.c.l.b16 %v576
        %v1276 = vunpack.c.h.b16 %v576
        %v1277 = vunpack.c.l.b16 %v577
        %v1278 = vunpack.c.l.b16 %v578
        %v1279 = vunpack.c.h.b16 %v578
        %v1280 = vunpack.c.l.b16 %v579
        %v1281 = vunpack.c.l.b16 %v580
        %v1282 = vunpack.c.h.b16 %v580
        %v1283 = vunpack.c.l.b16 %v581
        %v1284 = vunpack.c.l.b16 %v582
        %v1285 = vunpack.c.h.b16 %v582
        %v1286 = vunpack.c.l.b16 %v583
        %v1287 = vunpack.c.l.b16 %v584
        %v1288 = vunpack.c.h.b16 %v584
        %v1289 = vunpack.c.l.b16 %v585
        %v1290 = vunpack.c.l.b16 %v586
        %v1291 = vunpack.c.h.b16 %v586
        %v1292 = vunpack.c.l.b16 %v587
        %v1293 = vunpack.c.l.b16 %v588
        %v1294 = vunpack.c.h.b16 %v588
        %v1295 = vunpack.c.l.b16 %v589
        %v1296 = vunpack.c.l.b16 %v590
        %v1297 = vunpack.c.h.b16 %v590
        %v1298 = vunpack.c.l.b16 %v591
        %v1299 = vunpack.c.l.b16 %v592
        %v1300 = vunpack.c.h.b16 %v592
        %v1301 = vunpack.c.l.b16 %v593
        %v1302 = vpack.c.b16 %v921, %v918
        %v1303 = vpack.c.b16 %v922, %v919
        %v1304 = vpack.c.b16 %v923, %v920
        %v1305 = vpack.c.b16 %v927, %v924
        %v1306 = vpack.c.b16 %v928, %v925
        %v1307 = vpack.c.b16 %v929, %v926
        %v1308 = vpack.c.b16 %v933, %v930
        %v1309 = vpack.c.b16 %v934, %v931
        %v1310 = vpack.c.b16 %v935, %v932
        %v1311 = vpack.c.b16 %v939, %v936
        %v1312 = vpack.c.b16 %v940, %v937
        %v1313 = vpack.c.b16 %v941, %v938
        %v1314 = vpack.c.b16 %v945, %v942
        %v1315 = vpack.c.b16 %v946, %v943
        %v1316 = vpack.c.b16 %v947, %v944
        %v1317 = vpack.c.b16 %v951, %v948
        %v1318 = vpack.c.b16 %v952, %v949
        %v1319 = vpack.c.b16 %v953, %v950
        %v1320 = vpack.c.b16 %v957, %v954
        %v1321 = vpack.c.b16 %v958, %v955
        %v1322 = vpack.c.b16 %v959, %v956
        %v1323 = vpack.c.b16 %v963, %v960
        %v1324 = vpack.c.b16 %v964, %v961
        %v1325 = vpack.c.b16 %v965, %v962
        %v1326 = vpack.c.b16 %v969, %v966
        %v1327 = vpack.c.b16 %v970, %v967
        %v1328 = vpack.c.b16 %v971, %v968
        %v1329 = vpack.c.b16 %v975, %v972
        %v1330 = vpack.c.b16 %v976, %v973
        %v1331 = vpack.c.b16 %v977, %v974
        %v1332 = vpack.c.b16 %v981, %v978
        %v1333 = vpack.c.b16 %v982, %v979
        %v1334 = vpack.c.b16 %v983, %v980
        %v1335 = vpack.c.b16 %v987, %v984
        %v1336 = vpack.c.b16 %v988, %v985
        %v1337 = vpack.c.b16 %v989, %v986
        %v1338 = vpack.c.b16 %v993, %v990
        %v1339 = vpack.c.b16 %v994, %v991
        %v1340 = vpack.c.b16 %v995, %v992
        %v1341 = vpack.c.b16 %v999, %v996
        %v1342 = vpack.c.b16 %v1000, %v997
        %v1343 = vpack.c.b16 %v1001, %v998
        %v1344 = vpack.c.b16 %v1005, %v1002
        %v1345 = vpack.c.b16 %v1006, %v1003
        %v1346 = vpack.c.b16 %v1007, %v1004
        %v1347 = vpack.c.b16 %v1011, %v1008
        %v1348 = vpack.c.b16 %v1012, %v1009
        %v1349 = vpack.c.b16 %v1013, %v1010
        %v1350 = vpack.c.b16 %v1017, %v1014
        %v1351 = vpack.c.b16 %v1018, %v1015
        %v1352 = vpack.c.b16 %v1019, %v1016
        %v1353 = vpack.c.b16 %v1023, %v1020
        %v1354 = vpack.c.b16 %v1024, %v1021
        %v1355 = vpack.c.b16 %v1025, %v1022
        %v1356 = vpack.c.b16 %v1029, %v1026
        %v1357 = vpack.c.b16 %v1030, %v1027
        %v1358 = vpack.c.b16 %v1031, %v1028
        %v1359 = vpack.c.b16 %v1035, %v1032
        %v1360 = vpack.c.b16 %v1036, %v1033
        %v1361 = vpack.c.b16 %v1037, %v1034
        %v1362 = vpack.c.b16 %v1041, %v1038
        %v1363 = vpack.c.b16 %v1042, %v1039
        %v1364 = vpack.c.b16 %v1043, %v1040
        %v1365 = vpack.c.b16 %v1047, %v1044
        %v1366 = vpack.c.b16 %v1048, %v1045
        %v1367 = vpack.c.b16 %v1049, %v1046
        %v1368 = vpack.c.b16 %v1053, %v1050
        %v1369 = vpack.c.b16 %v1054, %v1051
        %v1370 = vpack.c.b16 %v1055, %v1052
        %v1371 = vpack.c.b16 %v1059, %v1056
        %v1372 = vpack.c.b16 %v1060, %v1057
        %v1373 = vpack.c.b16 %v1061, %v1058
        %v1374 = vpack.c.b16 %v1065, %v1062
        %v1375 = vpack.c.b16 %v1066, %v1063
        %v1376 = vpack.c.b16 %v1067, %v1064
        %v1377 = vpack.c.b16 %v1071, %v1068
        %v1378 = vpack.c.b16 %v1072, %v1069
        %v1379 = vpack.c.b16 %v1073, %v1070
        %v1380 = vpack.c.b16 %v1077, %v1074
        %v1381 = vpack.c.b16 %v1078, %v1075
        %v1382 = vpack.c.b16 %v1079, %v1076
        %v1383 = vpack.c.b16 %v1083, %v1080
        %v1384 = vpack.c.b16 %v1084, %v1081
        %v1385 = vpack.c.b16 %v1085, %v1082
        %v1386 = vpack.c.b16 %v1089, %v1086
        %v1387 = vpack.c.b16 %v1090, %v1087
        %v1388 = vpack.c.b16 %v1091, %v1088
        %v1389 = vpack.c.b16 %v1095, %v1092
        %v1390 = vpack.c.b16 %v1096, %v1093
        %v1391 = vpack.c.b16 %v1097, %v1094
        %v1392 = vpack.c.b16 %v1101, %v1098
        %v1393 = vpack.c.b16 %v1102, %v1099
        %v1394 = vpack.c.b16 %v1103, %v1100
        %v1395 = vpack.c.b16 %v1107, %v1104
        %v1396 = vpack.c.b16 %v1108, %v1105
        %v1397 = vpack.c.b16 %v1109, %v1106
        %v1398 = vpack.c.b16 %v1113, %v1110
        %v1399 = vpack.c.b16 %v1114, %v1111
        %v1400 = vpack.c.b16 %v1115, %v1112
        %v1401 = vpack.c.b16 %v1119, %v1116
        %v1402 = vpack.c.b16 %v1120, %v1117
        %v1403 = vpack.c.b16 %v1121, %v1118
        %v1404 = vpack.c.b16 %v1125, %v1122
        %v1405 = vpack.c.b16 %v1126, %v1123
        %v1406 = vpack.c.b16 %v1127, %v1124
        %v1407 = vpack.c.b16 %v1131, %v1128
        %v1408 = vpack.c.b16 %v1132, %v1129
        %v1409 = vpack.c.b16 %v1133, %v1130
        %v1410 = vpack.c.b16 %v1137, %v1134
        %v1411 = vpack.c.b16 %v1138, %v1135
        %v1412 = vpack.c.b16 %v1139, %v1136
        %v1413 = vpack.c.b16 %v1143, %v1140
        %v1414 = vpack.c.b16 %v1144, %v1141
        %v1415 = vpack.c.b16 %v1145, %v1142
        %v1416 = vpack.c.b16 %v1149, %v1146
        %v1417 = vpack.c.b16 %v1150, %v1147
        %v1418 = vpack.c.b16 %v1151, %v1148
        %v1419 = vpack.c.b16 %v1155, %v1152
        %v1420 = vpack.c.b16 %v1156, %v1153
        %v1421 = vpack.c.b16 %v1157, %v1154
        %v1422 = vpack.c.b16 %v1161, %v1158
        %v1423 = vpack.c.b16 %v1162, %v1159
        %v1424 = vpack.c.b16 %v1163, %v1160
        %v1425 = vpack.c.b16 %v1167, %v1164
        %v1426 = vpack.c.b16 %v1168, %v1165
        %v1427 = vpack.c.b16 %v1169, %v1166
        %v1428 = vpack.c.b16 %v1173, %v1170
        %v1429 = vpack.c.b16 %v1174, %v1171
        %v1430 = vpack.c.b16 %v1175, %v1172
        %v1431 = vpack.c.b16 %v1179, %v1176
        %v1432 = vpack.c.b16 %v1180, %v1177
        %v1433 = vpack.c.b16 %v1181, %v1178
        %v1434 = vpack.c.b16 %v1185, %v1182
        %v1435 = vpack.c.b16 %v1186, %v1183
        %v1436 = vpack.c.b16 %v1187, %v1184
        %v1437 = vpack.c.b16 %v1191, %v1188
        %v1438 = vpack.c.b16 %v1192, %v1189
        %v1439 = vpack.c.b16 %v1193, %v1190
        %v1440 = vpack.c.b16 %v1197, %v1194
        %v1441 = vpack.c.b16 %v1198, %v1195
        %v1442 = vpack.c.b16 %v1199, %v1196
        %v1443 = vpack.c.b16 %v1203, %v1200
        %v1444 = vpack.c.b16 %v1204, %v1201
        %v1445 = vpack.c.b16 %v1205, %v1202
        %v1446 = vpack.c.b16 %v1209, %v1206
        %v1447 = vpack.c.b16 %v1210, %v1207
        %v1448 = vpack.c.b16 %v1211, %v1208
        %v1449 = vpack.c.b16 %v1215, %v1212
        %v1450 = vpack.c.b16 %v1216, %v1213
        %v1451 = vpack.c.b16 %v1217, %v1214
        %v1452 = vpack.c.b16 %v1221, %v1218
        %v1453 = vpack.c.b16 %v1222, %v1219
        %v1454 = vpack.c.b16 %v1223, %v1220
        %v1455 = vpack.c.b16 %v1227, %v1224
        %v1456 = vpack.c.b16 %v1228, %v1225
        %v1457 = vpack.c.b16 %v1229, %v1226
        %v1458 = vpack.c.b16 %v1233, %v1230
        %v1459 = vpack.c.b16 %v1234, %v1231
        %v1460 = vpack.c.b16 %v1235, %v1232
        %v1461 = vpack.c.b16 %v1239, %v1236
        %v1462 = vpack.c.b16 %v1240, %v1237
        %v1463 = vpack.c.b16 %v1241, %v1238
        %v1464 = vpack.c.b16 %v1245, %v1242
        %v1465 = vpack.c.b16 %v1246, %v1243
        %v1466 = vpack.c.b16 %v1247, %v1244
        %v1467 = vpack.c.b16 %v1251, %v1248
        %v1468 = vpack.c.b16 %v1252, %v1249
        %v1469 = vpack.c.b16 %v1253, %v1250
        %v1470 = vpack.c.b16 %v1257, %v1254
        %v1471 = vpack.c.b16 %v1258, %v1255
        %v1472 = vpack.c.b16 %v1259, %v1256
        %v1473 = vpack.c.b16 %v1263, %v1260
        %v1474 = vpack.c.b16 %v1264, %v1261
        %v1475 = vpack.c.b16 %v1265, %v1262
        %v1476 = vpack.c.b16 %v1269, %v1266
        %v1477 = vpack.c.b16 %v1270, %v1267
        %v1478 = vpack.c.b16 %v1271, %v1268
        %v1479 = vpack.c.b16 %v1275, %v1272
        %v1480 = vpack.c.b16 %v1276, %v1273
        %v1481 = vpack.c.b16 %v1277, %v1274
        %v1482 = vpack.c.b16 %v1281, %v1278
        %v1483 = vpack.c.b16 %v1282, %v1279
        %v1484 = vpack.c.b16 %v1283, %v1280
        %v1485 = vpack.c.b16 %v1287, %v1284
        %v1486 = vpack.c.b16 %v1288, %v1285
        %v1487 = vpack.c.b16 %v1289, %v1286
        %v1488 = vpack.c.b16 %v1293, %v1290
        %v1489 = vpack.c.b16 %v1294, %v1291
        %v1490 = vpack.c.b16 %v1295, %v1292
        %v1491 = vpack.c.b16 %v1299, %v1296
        %v1492 = vpack.c.b16 %v1300, %v1297
        %v1493 = vpack.c.b16 %v1301, %v1298
        %1686 = vmatpush.bf16.msra.mxu0 %v1323
        %1687 = vmatpush.bf16.msra.mxu0 %v1320
        %1688 = vmatpush.bf16.msra.mxu0 %v1317
        %1689 = vmatpush.bf16.msra.mxu0 %v1314
        %1690 = vmatpush.bf16.msra.mxu0 %v1311
        %1691 = vmatpush.bf16.msra.mxu0 %v1308
        %1692 = vmatpush.bf16.msra.mxu0 %v1305
        %1693 = vmatpush.bf16.msra.mxu0 %v1302
        %1694 = vmatmul.bf16.gmra.mxu0 %v630
        %v1695 = vpop.f32.mrf.mxu0
        %v1696 = vadd.f32 0.0, %v1695
        %v1697 = vpop.f32.mrf.mxu0
        %v1698 = vadd.f32 0.0, %v1697
        %1699 = vmatmul.bf16.gmra.mxu0 %v638
        %v1700 = vpop.f32.mrf.mxu0
        %v1701 = vpop.f32.mrf.mxu0
        %1702 = vdwg.mxu0
        %1703 = vmatpush.bf16.msra.mxu0 %v1347
        %1704 = vmatpush.bf16.msra.mxu0 %v1344
        %1705 = vmatpush.bf16.msra.mxu0 %v1341
        %1706 = vmatpush.bf16.msra.mxu0 %v1338
        %1707 = vmatpush.bf16.msra.mxu0 %v1335
        %1708 = vmatpush.bf16.msra.mxu0 %v1332
        %1709 = vmatpush.bf16.msra.mxu0 %v1329
        %1710 = vmatpush.bf16.msra.mxu0 %v1326
        %1711 = vmatmul.bf16.gmra.mxu0 %v631
        %v1712 = vpop.f32.mrf.mxu0
        %v1713 = vadd.f32 %v1696, %v1712
        %v1714 = vpop.f32.mrf.mxu0
        %v1715 = vadd.f32 %v1698, %v1714
        %1716 = vmatmul.bf16.gmra.mxu0 %v639
        %v1717 = vpop.f32.mrf.mxu0
        %v1718 = vpop.f32.mrf.mxu0
        %1719 = vdwg.mxu0
        %1720 = vmatpush.bf16.msra.mxu0 %v1371
        %1721 = vmatpush.bf16.msra.mxu0 %v1368
        %1722 = vmatpush.bf16.msra.mxu0 %v1365
        %1723 = vmatpush.bf16.msra.mxu0 %v1362
        %1724 = vmatpush.bf16.msra.mxu0 %v1359
        %1725 = vmatpush.bf16.msra.mxu0 %v1356
        %1726 = vmatpush.bf16.msra.mxu0 %v1353
        %1727 = vmatpush.bf16.msra.mxu0 %v1350
        %1728 = vmatmul.bf16.gmra.mxu0 %v632
        %v1729 = vpop.f32.mrf.mxu0
        %v1730 = vadd.f32 %v1713, %v1729
        %v1731 = vpop.f32.mrf.mxu0
        %v1732 = vadd.f32 %v1715, %v1731
        %1733 = vmatmul.bf16.gmra.mxu0 %v640
        %v1734 = vpop.f32.mrf.mxu0
        %v1735 = vpop.f32.mrf.mxu0
        %1736 = vdwg.mxu0
        %1737 = vmatpush.bf16.msra.mxu0 %v1395
        %1738 = vmatpush.bf16.msra.mxu0 %v1392
        %1739 = vmatpush.bf16.msra.mxu0 %v1389
        %1740 = vmatpush.bf16.msra.mxu0 %v1386
        %1741 = vmatpush.bf16.msra.mxu0 %v1383
        %1742 = vmatpush.bf16.msra.mxu0 %v1380
        %1743 = vmatpush.bf16.msra.mxu0 %v1377
        %1744 = vmatpush.bf16.msra.mxu0 %v1374
        %1745 = vmatmul.bf16.gmra.mxu0 %v633
        %v1746 = vpop.f32.mrf.mxu0
        %v1747 = vadd.f32 %v1730, %v1746
        %v1748 = vpop.f32.mrf.mxu0
        %v1749 = vadd.f32 %v1732, %v1748
        %1750 = vmatmul.bf16.gmra.mxu0 %v641
        %v1751 = vpop.f32.mrf.mxu0
        %v1752 = vpop.f32.mrf.mxu0
        %1753 = vdwg.mxu0
        %1754 = vmatpush.bf16.msra.mxu0 %v1419
        %1755 = vmatpush.bf16.msra.mxu0 %v1416
        %1756 = vmatpush.bf16.msra.mxu0 %v1413
        %1757 = vmatpush.bf16.msra.mxu0 %v1410
        %1758 = vmatpush.bf16.msra.mxu0 %v1407
        %1759 = vmatpush.bf16.msra.mxu0 %v1404
        %1760 = vmatpush.bf16.msra.mxu0 %v1401
        %1761 = vmatpush.bf16.msra.mxu0 %v1398
        %1762 = vmatmul.bf16.gmra.mxu0 %v634
        %v1763 = vpop.f32.mrf.mxu0
        %v1764 = vadd.f32 %v1747, %v1763
        %v1765 = vpop.f32.mrf.mxu0
        %v1766 = vadd.f32 %v1749, %v1765
        %1767 = vmatmul.bf16.gmra.mxu0 %v642
        %v1768 = vpop.f32.mrf.mxu0
        %v1769 = vpop.f32.mrf.mxu0
        %1770 = vdwg.mxu0
        %1771 = vmatpush.bf16.msra.mxu0 %v1443
        %1772 = vmatpush.bf16.msra.mxu0 %v1440
        %1773 = vmatpush.bf16.msra.mxu0 %v1437
        %1774 = vmatpush.bf16.msra.mxu0 %v1434
        %1775 = vmatpush.bf16.msra.mxu0 %v1431
        %1776 = vmatpush.bf16.msra.mxu0 %v1428
        %1777 = vmatpush.bf16.msra.mxu0 %v1425
        %1778 = vmatpush.bf16.msra.mxu0 %v1422
        %1779 = vmatmul.bf16.gmra.mxu0 %v635
        %v1780 = vpop.f32.mrf.mxu0
        %v1781 = vadd.f32 %v1764, %v1780
        %v1782 = vpop.f32.mrf.mxu0
        %v1783 = vadd.f32 %v1766, %v1782
        %1784 = vmatmul.bf16.gmra.mxu0 %v643
        %v1785 = vpop.f32.mrf.mxu0
        %v1786 = vpop.f32.mrf.mxu0
        %1787 = vdwg.mxu0
        %1788 = vmatpush.bf16.msra.mxu0 %v1467
        %1789 = vmatpush.bf16.msra.mxu0 %v1464
        %1790 = vmatpush.bf16.msra.mxu0 %v1461
        %1791 = vmatpush.bf16.msra.mxu0 %v1458
        %1792 = vmatpush.bf16.msra.mxu0 %v1455
        %1793 = vmatpush.bf16.msra.mxu0 %v1452
        %1794 = vmatpush.bf16.msra.mxu0 %v1449
        %1795 = vmatpush.bf16.msra.mxu0 %v1446
        %1796 = vmatmul.bf16.gmra.mxu0 %v636
        %v1797 = vpop.f32.mrf.mxu0
        %v1798 = vadd.f32 %v1781, %v1797
        %v1799 = vpop.f32.mrf.mxu0
        %v1800 = vadd.f32 %v1783, %v1799
        %1801 = vmatmul.bf16.gmra.mxu0 %v644
        %v1802 = vpop.f32.mrf.mxu0
        %v1803 = vpop.f32.mrf.mxu0
        %1804 = vdwg.mxu0
        %1805 = vmatpush.bf16.msra.mxu0 %v1491
        %1806 = vmatpush.bf16.msra.mxu0 %v1488
        %1807 = vmatpush.bf16.msra.mxu0 %v1485
        %1808 = vmatpush.bf16.msra.mxu0 %v1482
        %1809 = vmatpush.bf16.msra.mxu0 %v1479
        %1810 = vmatpush.bf16.msra.mxu0 %v1476
        %1811 = vmatpush.bf16.msra.mxu0 %v1473
        %1812 = vmatpush.bf16.msra.mxu0 %v1470
        %1813 = vmatmul.bf16.gmra.mxu0 %v637
        %v1814 = vpop.f32.mrf.mxu0
        %v1815 = vadd.f32 %v1798, %v1814
        %v1816 = vpop.f32.mrf.mxu0
        %v1817 = vadd.f32 %v1800, %v1816
        %1818 = vmatmul.bf16.gmra.mxu0 %v645
        %v1819 = vpop.f32.mrf.mxu0
        %v1820 = vpop.f32.mrf.mxu0
        %1821 = vdwg.mxu0
        %1822 = vmatpush.bf16.msra.mxu0 %v1324
        %1823 = vmatpush.bf16.msra.mxu0 %v1321
        %1824 = vmatpush.bf16.msra.mxu0 %v1318
        %1825 = vmatpush.bf16.msra.mxu0 %v1315
        %1826 = vmatpush.bf16.msra.mxu0 %v1312
        %1827 = vmatpush.bf16.msra.mxu0 %v1309
        %1828 = vmatpush.bf16.msra.mxu0 %v1306
        %1829 = vmatpush.bf16.msra.mxu0 %v1303
        %1830 = vmatmul.bf16.gmra.mxu0 %v630
        %v1831 = vpop.f32.mrf.mxu0
        %v1832 = vadd.f32 0.0, %v1831
        %v1833 = vpop.f32.mrf.mxu0
        %v1834 = vadd.f32 0.0, %v1833
        %1835 = vmatmul.bf16.gmra.mxu0 %v638
        %v1836 = vpop.f32.mrf.mxu0
        %v1837 = vadd.f32 0.0, %v1836
        %v1838 = vpop.f32.mrf.mxu0
        %1839 = vdwg.mxu0
        %1840 = vmatpush.bf16.msra.mxu0 %v1348
        %1841 = vmatpush.bf16.msra.mxu0 %v1345
        %1842 = vmatpush.bf16.msra.mxu0 %v1342
        %1843 = vmatpush.bf16.msra.mxu0 %v1339
        %1844 = vmatpush.bf16.msra.mxu0 %v1336
        %1845 = vmatpush.bf16.msra.mxu0 %v1333
        %1846 = vmatpush.bf16.msra.mxu0 %v1330
        %1847 = vmatpush.bf16.msra.mxu0 %v1327
        %1848 = vmatmul.bf16.gmra.mxu0 %v631
        %v1849 = vpop.f32.mrf.mxu0
        %v1850 = vadd.f32 %v1832, %v1849
        %v1851 = vpop.f32.mrf.mxu0
        %v1852 = vadd.f32 %v1834, %v1851
        %1853 = vmatmul.bf16.gmra.mxu0 %v639
        %v1854 = vpop.f32.mrf.mxu0
        %v1855 = vadd.f32 %v1837, %v1854
        %v1856 = vpop.f32.mrf.mxu0
        %1857 = vdwg.mxu0
        %1858 = vmatpush.bf16.msra.mxu0 %v1372
        %1859 = vmatpush.bf16.msra.mxu0 %v1369
        %1860 = vmatpush.bf16.msra.mxu0 %v1366
        %1861 = vmatpush.bf16.msra.mxu0 %v1363
        %1862 = vmatpush.bf16.msra.mxu0 %v1360
        %1863 = vmatpush.bf16.msra.mxu0 %v1357
        %1864 = vmatpush.bf16.msra.mxu0 %v1354
        %1865 = vmatpush.bf16.msra.mxu0 %v1351
        %1866 = vmatmul.bf16.gmra.mxu0 %v632
        %v1867 = vpop.f32.mrf.mxu0
        %v1868 = vadd.f32 %v1850, %v1867
        %v1869 = vpop.f32.mrf.mxu0
        %v1870 = vadd.f32 %v1852, %v1869
        %1871 = vmatmul.bf16.gmra.mxu0 %v640
        %v1872 = vpop.f32.mrf.mxu0
        %v1873 = vadd.f32 %v1855, %v1872
        %v1874 = vpop.f32.mrf.mxu0
        %1875 = vdwg.mxu0
        %1876 = vmatpush.bf16.msra.mxu0 %v1396
        %1877 = vmatpush.bf16.msra.mxu0 %v1393
        %1878 = vmatpush.bf16.msra.mxu0 %v1390
        %1879 = vmatpush.bf16.msra.mxu0 %v1387
        %1880 = vmatpush.bf16.msra.mxu0 %v1384
        %1881 = vmatpush.bf16.msra.mxu0 %v1381
        %1882 = vmatpush.bf16.msra.mxu0 %v1378
        %1883 = vmatpush.bf16.msra.mxu0 %v1375
        %1884 = vmatmul.bf16.gmra.mxu0 %v633
        %v1885 = vpop.f32.mrf.mxu0
        %v1886 = vadd.f32 %v1868, %v1885
        %v1887 = vpop.f32.mrf.mxu0
        %v1888 = vadd.f32 %v1870, %v1887
        %1889 = vmatmul.bf16.gmra.mxu0 %v641
        %v1890 = vpop.f32.mrf.mxu0
        %v1891 = vadd.f32 %v1873, %v1890
        %v1892 = vpop.f32.mrf.mxu0
        %1893 = vdwg.mxu0
        %1894 = vmatpush.bf16.msra.mxu0 %v1420
        %1895 = vmatpush.bf16.msra.mxu0 %v1417
        %1896 = vmatpush.bf16.msra.mxu0 %v1414
        %1897 = vmatpush.bf16.msra.mxu0 %v1411
        %1898 = vmatpush.bf16.msra.mxu0 %v1408
        %1899 = vmatpush.bf16.msra.mxu0 %v1405
        %1900 = vmatpush.bf16.msra.mxu0 %v1402
        %1901 = vmatpush.bf16.msra.mxu0 %v1399
        %1902 = vmatmul.bf16.gmra.mxu0 %v634
        %v1903 = vpop.f32.mrf.mxu0
        %v1904 = vadd.f32 %v1886, %v1903
        %v1905 = vpop.f32.mrf.mxu0
        %v1906 = vadd.f32 %v1888, %v1905
        %1907 = vmatmul.bf16.gmra.mxu0 %v642
        %v1908 = vpop.f32.mrf.mxu0
        %v1909 = vadd.f32 %v1891, %v1908
        %v1910 = vpop.f32.mrf.mxu0
        %1911 = vdwg.mxu0
        %1912 = vmatpush.bf16.msra.mxu0 %v1444
        %1913 = vmatpush.bf16.msra.mxu0 %v1441
        %1914 = vmatpush.bf16.msra.mxu0 %v1438
        %1915 = vmatpush.bf16.msra.mxu0 %v1435
        %1916 = vmatpush.bf16.msra.mxu0 %v1432
        %1917 = vmatpush.bf16.msra.mxu0 %v1429
        %1918 = vmatpush.bf16.msra.mxu0 %v1426
        %1919 = vmatpush.bf16.msra.mxu0 %v1423
        %1920 = vmatmul.bf16.gmra.mxu0 %v635
        %v1921 = vpop.f32.mrf.mxu0
        %v1922 = vadd.f32 %v1904, %v1921
        %v1923 = vpop.f32.mrf.mxu0
        %v1924 = vadd.f32 %v1906, %v1923
        %1925 = vmatmul.bf16.gmra.mxu0 %v643
        %v1926 = vpop.f32.mrf.mxu0
        %v1927 = vadd.f32 %v1909, %v1926
        %v1928 = vpop.f32.mrf.mxu0
        %1929 = vdwg.mxu0
        %1930 = vmatpush.bf16.msra.mxu0 %v1468
        %1931 = vmatpush.bf16.msra.mxu0 %v1465
        %1932 = vmatpush.bf16.msra.mxu0 %v1462
        %1933 = vmatpush.bf16.msra.mxu0 %v1459
        %1934 = vmatpush.bf16.msra.mxu0 %v1456
        %1935 = vmatpush.bf16.msra.mxu0 %v1453
        %1936 = vmatpush.bf16.msra.mxu0 %v1450
        %1937 = vmatpush.bf16.msra.mxu0 %v1447
        %1938 = vmatmul.bf16.gmra.mxu0 %v636
        %v1939 = vpop.f32.mrf.mxu0
        %v1940 = vadd.f32 %v1922, %v1939
        %v1941 = vpop.f32.mrf.mxu0
        %v1942 = vadd.f32 %v1924, %v1941
        %1943 = vmatmul.bf16.gmra.mxu0 %v644
        %v1944 = vpop.f32.mrf.mxu0
        %v1945 = vadd.f32 %v1927, %v1944
        %v1946 = vpop.f32.mrf.mxu0
        %1947 = vdwg.mxu0
        %1948 = vmatpush.bf16.msra.mxu0 %v1492
        %1949 = vmatpush.bf16.msra.mxu0 %v1489
        %1950 = vmatpush.bf16.msra.mxu0 %v1486
        %1951 = vmatpush.bf16.msra.mxu0 %v1483
        %1952 = vmatpush.bf16.msra.mxu0 %v1480
        %1953 = vmatpush.bf16.msra.mxu0 %v1477
        %1954 = vmatpush.bf16.msra.mxu0 %v1474
        %1955 = vmatpush.bf16.msra.mxu0 %v1471
        %1956 = vmatmul.bf16.gmra.mxu0 %v637
        %v1957 = vpop.f32.mrf.mxu0
        %v1958 = vadd.f32 %v1940, %v1957
        %v1959 = vpop.f32.mrf.mxu0
        %v1960 = vadd.f32 %v1942, %v1959
        %1961 = vmatmul.bf16.gmra.mxu0 %v645
        %v1962 = vpop.f32.mrf.mxu0
        %v1963 = vadd.f32 %v1945, %v1962
        %v1964 = vpop.f32.mrf.mxu0
        %1965 = vdwg.mxu0
        %1966 = vmatpush.bf16.msra.mxu0 %v1325
        %1967 = vmatpush.bf16.msra.mxu0 %v1322
        %1968 = vmatpush.bf16.msra.mxu0 %v1319
        %1969 = vmatpush.bf16.msra.mxu0 %v1316
        %1970 = vmatpush.bf16.msra.mxu0 %v1313
        %1971 = vmatpush.bf16.msra.mxu0 %v1310
        %1972 = vmatpush.bf16.msra.mxu0 %v1307
        %1973 = vmatpush.bf16.msra.mxu0 %v1304
        %1974 = vmatmul.bf16.gmra.mxu0 %v630
        %v1975 = vpop.f32.mrf.mxu0
        %v1976 = vadd.f32 0.0, %v1975
        %v1977 = vpop.f32.mrf.mxu0
        %v1978 = vadd.f32 0.0, %v1977
        %1979 = vmatmul.bf16.gmra.mxu0 %v638
        %v1980 = vpop.f32.mrf.mxu0
        %v1981 = vadd.f32 0.0, %v1980
        %v1982 = vpop.f32.mrf.mxu0
        %1983 = vdwg.mxu0
        %1984 = vmatpush.bf16.msra.mxu0 %v1349
        %1985 = vmatpush.bf16.msra.mxu0 %v1346
        %1986 = vmatpush.bf16.msra.mxu0 %v1343
        %1987 = vmatpush.bf16.msra.mxu0 %v1340
        %1988 = vmatpush.bf16.msra.mxu0 %v1337
        %1989 = vmatpush.bf16.msra.mxu0 %v1334
        %1990 = vmatpush.bf16.msra.mxu0 %v1331
        %1991 = vmatpush.bf16.msra.mxu0 %v1328
        %1992 = vmatmul.bf16.gmra.mxu0 %v631
        %v1993 = vpop.f32.mrf.mxu0
        %v1994 = vadd.f32 %v1976, %v1993
        %v1995 = vpop.f32.mrf.mxu0
        %v1996 = vadd.f32 %v1978, %v1995
        %1997 = vmatmul.bf16.gmra.mxu0 %v639
        %v1998 = vpop.f32.mrf.mxu0
        %v1999 = vadd.f32 %v1981, %v1998
        %v2000 = vpop.f32.mrf.mxu0
        %2001 = vdwg.mxu0
        %2002 = vmatpush.bf16.msra.mxu0 %v1373
        %2003 = vmatpush.bf16.msra.mxu0 %v1370
        %2004 = vmatpush.bf16.msra.mxu0 %v1367
        %2005 = vmatpush.bf16.msra.mxu0 %v1364
        %2006 = vmatpush.bf16.msra.mxu0 %v1361
        %2007 = vmatpush.bf16.msra.mxu0 %v1358
        %2008 = vmatpush.bf16.msra.mxu0 %v1355
        %2009 = vmatpush.bf16.msra.mxu0 %v1352
        %2010 = vmatmul.bf16.gmra.mxu0 %v632
        %v2011 = vpop.f32.mrf.mxu0
        %v2012 = vadd.f32 %v1994, %v2011
        %v2013 = vpop.f32.mrf.mxu0
        %v2014 = vadd.f32 %v1996, %v2013
        %2015 = vmatmul.bf16.gmra.mxu0 %v640
        %v2016 = vpop.f32.mrf.mxu0
        %v2017 = vadd.f32 %v1999, %v2016
        %v2018 = vpop.f32.mrf.mxu0
        %2019 = vdwg.mxu0
        %2020 = vmatpush.bf16.msra.mxu0 %v1397
        %2021 = vmatpush.bf16.msra.mxu0 %v1394
        %2022 = vmatpush.bf16.msra.mxu0 %v1391
        %2023 = vmatpush.bf16.msra.mxu0 %v1388
        %2024 = vmatpush.bf16.msra.mxu0 %v1385
        %2025 = vmatpush.bf16.msra.mxu0 %v1382
        %2026 = vmatpush.bf16.msra.mxu0 %v1379
        %2027 = vmatpush.bf16.msra.mxu0 %v1376
        %2028 = vmatmul.bf16.gmra.mxu0 %v633
        %v2029 = vpop.f32.mrf.mxu0
        %v2030 = vadd.f32 %v2012, %v2029
        %v2031 = vpop.f32.mrf.mxu0
        %v2032 = vadd.f32 %v2014, %v2031
        %2033 = vmatmul.bf16.gmra.mxu0 %v641
        %v2034 = vpop.f32.mrf.mxu0
        %v2035 = vadd.f32 %v2017, %v2034
        %v2036 = vpop.f32.mrf.mxu0
        %2037 = vdwg.mxu0
        %2038 = vmatpush.bf16.msra.mxu0 %v1421
        %2039 = vmatpush.bf16.msra.mxu0 %v1418
        %2040 = vmatpush.bf16.msra.mxu0 %v1415
        %2041 = vmatpush.bf16.msra.mxu0 %v1412
        %2042 = vmatpush.bf16.msra.mxu0 %v1409
        %2043 = vmatpush.bf16.msra.mxu0 %v1406
        %2044 = vmatpush.bf16.msra.mxu0 %v1403
        %2045 = vmatpush.bf16.msra.mxu0 %v1400
        %2046 = vmatmul.bf16.gmra.mxu0 %v634
        %v2047 = vpop.f32.mrf.mxu0
        %v2048 = vadd.f32 %v2030, %v2047
        %v2049 = vpop.f32.mrf.mxu0
        %v2050 = vadd.f32 %v2032, %v2049
        %2051 = vmatmul.bf16.gmra.mxu0 %v642
        %v2052 = vpop.f32.mrf.mxu0
        %v2053 = vadd.f32 %v2035, %v2052
        %v2054 = vpop.f32.mrf.mxu0
        %2055 = vdwg.mxu0
        %2056 = vmatpush.bf16.msra.mxu0 %v1445
        %2057 = vmatpush.bf16.msra.mxu0 %v1442
        %2058 = vmatpush.bf16.msra.mxu0 %v1439
        %2059 = vmatpush.bf16.msra.mxu0 %v1436
        %2060 = vmatpush.bf16.msra.mxu0 %v1433
        %2061 = vmatpush.bf16.msra.mxu0 %v1430
        %2062 = vmatpush.bf16.msra.mxu0 %v1427
        %2063 = vmatpush.bf16.msra.mxu0 %v1424
        %2064 = vmatmul.bf16.gmra.mxu0 %v635
        %v2065 = vpop.f32.mrf.mxu0
        %v2066 = vadd.f32 %v2048, %v2065
        %v2067 = vpop.f32.mrf.mxu0
        %v2068 = vadd.f32 %v2050, %v2067
        %2069 = vmatmul.bf16.gmra.mxu0 %v643
        %v2070 = vpop.f32.mrf.mxu0
        %v2071 = vadd.f32 %v2053, %v2070
        %v2072 = vpop.f32.mrf.mxu0
        %2073 = vdwg.mxu0
        %2074 = vmatpush.bf16.msra.mxu0 %v1469
        %2075 = vmatpush.bf16.msra.mxu0 %v1466
        %2076 = vmatpush.bf16.msra.mxu0 %v1463
        %2077 = vmatpush.bf16.msra.mxu0 %v1460
        %2078 = vmatpush.bf16.msra.mxu0 %v1457
        %2079 = vmatpush.bf16.msra.mxu0 %v1454
        %2080 = vmatpush.bf16.msra.mxu0 %v1451
        %2081 = vmatpush.bf16.msra.mxu0 %v1448
        %2082 = vmatmul.bf16.gmra.mxu0 %v636
        %v2083 = vpop.f32.mrf.mxu0
        %v2084 = vadd.f32 %v2066, %v2083
        %v2085 = vpop.f32.mrf.mxu0
        %v2086 = vadd.f32 %v2068, %v2085
        %2087 = vmatmul.bf16.gmra.mxu0 %v644
        %v2088 = vpop.f32.mrf.mxu0
        %v2089 = vadd.f32 %v2071, %v2088
        %v2090 = vpop.f32.mrf.mxu0
        %2091 = vdwg.mxu0
        %2092 = vmatpush.bf16.msra.mxu0 %v1493
        %2093 = vmatpush.bf16.msra.mxu0 %v1490
        %2094 = vmatpush.bf16.msra.mxu0 %v1487
        %2095 = vmatpush.bf16.msra.mxu0 %v1484
        %2096 = vmatpush.bf16.msra.mxu0 %v1481
        %2097 = vmatpush.bf16.msra.mxu0 %v1478
        %2098 = vmatpush.bf16.msra.mxu0 %v1475
        %2099 = vmatpush.bf16.msra.mxu0 %v1472
        %2100 = vmatmul.bf16.gmra.mxu0 %v637
        %v2101 = vpop.f32.mrf.mxu0
        %v2102 = vadd.f32 %v2084, %v2101
        %v2103 = vpop.f32.mrf.mxu0
        %v2104 = vadd.f32 %v2086, %v2103
        %2105 = vmatmul.bf16.gmra.mxu0 %v645
        %v2106 = vpop.f32.mrf.mxu0
        %v2107 = vadd.f32 %v2089, %v2106
        %v2108 = vpop.f32.mrf.mxu0
        %2109 = vdwg.mxu0
        %vm2113 = vcmask 1046528
        %v2114 = vrot.slane %v1958, 1
        %v2115 = vrot.slane %v1960, 1
        %v2116 = vsel %vm2113, %v2114, %v2115
        %v2117 = vrot.slane %v1963, 1
        %v2118 = vsel %vm2113, %v2115, %v2117
        %v2121 = vadd.f32 %v1815, %v2116
        %v2122 = vadd.f32 %v1817, %v2118
        %vm2126 = vcmask 1045504
        %v2127 = vrot.slane %v2102, 2
        %v2128 = vrot.slane %v2104, 2
        %v2129 = vsel %vm2126, %v2127, %v2128
        %v2130 = vrot.slane %v2107, 2
        %v2131 = vsel %vm2126, %v2128, %v2130
        %v2134 = vadd.f32 %v2121, %v2129
        %v2135 = vadd.f32 %v2122, %v2131
        %v2137 = vperm.slane %v325, 0
        %v2139 = vadd.f32 %v2134, %v2137
        %v2140 = vadd.f32 %v2135, %v2137
        %v2141 = vmax.f32 %v2139, 0.0
        %v2142 = vmax.f32 %v2140, 0.0
        %v2143 = vmin.f32 %v2141, 6.0
        %v2144 = vmin.f32 %v2142, 6.0
        %v2145 = vperm.slane %v2143, 0
        %v2146 = vlaneseq
        %v2147 = vshrl.u32 %v2146, 7
        %2149 = vset.pattern.permute.xlu0 %v2147
        %2150 = vperm.xlu0 %2149, %v2145
        %v2151 = vpop.permute.xlu0 %2150
        %v2152 = vlaneseq
        %v2153 = vshrl.u32 %v2152, 7
        %v2154 = vadd.s32 %v2153, 8
        %2155 = vset.pattern.permute.xlu0 %v2154
        %2156 = vperm.xlu0 %2155, %v2145
        %v2157 = vpop.permute.xlu0 %2156
        %v2158 = vperm.slane %v2143, 1
        %v2159 = vlaneseq
        %v2160 = vshrl.u32 %v2159, 7
        %2162 = vset.pattern.permute.xlu0 %v2160
        %2163 = vperm.xlu0 %2162, %v2158
        %v2164 = vpop.permute.xlu0 %2163
        %v2165 = vlaneseq
        %v2166 = vshrl.u32 %v2165, 7
        %v2167 = vadd.s32 %v2166, 8
        %2168 = vset.pattern.permute.xlu0 %v2167
        %2169 = vperm.xlu0 %2168, %v2158
        %v2170 = vpop.permute.xlu0 %2169
        %v2171 = vperm.slane %v2143, 2
        %v2172 = vlaneseq
        %v2173 = vshrl.u32 %v2172, 7
        %2175 = vset.pattern.permute.xlu0 %v2173
        %2176 = vperm.xlu0 %2175, %v2171
        %v2177 = vpop.permute.xlu0 %2176
        %v2178 = vlaneseq
        %v2179 = vshrl.u32 %v2178, 7
        %v2180 = vadd.s32 %v2179, 8
        %2181 = vset.pattern.permute.xlu0 %v2180
        %2182 = vperm.xlu0 %2181, %v2171
        %v2183 = vpop.permute.xlu0 %2182
        %v2184 = vperm.slane %v2143, 3
        %v2185 = vlaneseq
        %v2186 = vshrl.u32 %v2185, 7
        %2188 = vset.pattern.permute.xlu0 %v2186
        %2189 = vperm.xlu0 %2188, %v2184
        %v2190 = vpop.permute.xlu0 %2189
        %v2191 = vlaneseq
        %v2192 = vshrl.u32 %v2191, 7
        %v2193 = vadd.s32 %v2192, 8
        %2194 = vset.pattern.permute.xlu0 %v2193
        %2195 = vperm.xlu0 %2194, %v2184
        %v2196 = vpop.permute.xlu0 %2195
        %v2197 = vperm.slane %v2143, 4
        %v2198 = vlaneseq
        %v2199 = vshrl.u32 %v2198, 7
        %2201 = vset.pattern.permute.xlu0 %v2199
        %2202 = vperm.xlu0 %2201, %v2197
        %v2203 = vpop.permute.xlu0 %2202
        %v2204 = vlaneseq
        %v2205 = vshrl.u32 %v2204, 7
        %v2206 = vadd.s32 %v2205, 8
        %2207 = vset.pattern.permute.xlu0 %v2206
        %2208 = vperm.xlu0 %2207, %v2197
        %v2209 = vpop.permute.xlu0 %2208
        %v2210 = vperm.slane %v2143, 5
        %v2211 = vlaneseq
        %v2212 = vshrl.u32 %v2211, 7
        %2214 = vset.pattern.permute.xlu0 %v2212
        %2215 = vperm.xlu0 %2214, %v2210
        %v2216 = vpop.permute.xlu0 %2215
        %v2217 = vlaneseq
        %v2218 = vshrl.u32 %v2217, 7
        %v2219 = vadd.s32 %v2218, 8
        %2220 = vset.pattern.permute.xlu0 %v2219
        %2221 = vperm.xlu0 %2220, %v2210
        %v2222 = vpop.permute.xlu0 %2221
        %v2223 = vperm.slane %v2143, 6
        %v2224 = vlaneseq
        %v2225 = vshrl.u32 %v2224, 7
        %2227 = vset.pattern.permute.xlu0 %v2225
        %2228 = vperm.xlu0 %2227, %v2223
        %v2229 = vpop.permute.xlu0 %2228
        %v2230 = vlaneseq
        %v2231 = vshrl.u32 %v2230, 7
        %v2232 = vadd.s32 %v2231, 8
        %2233 = vset.pattern.permute.xlu0 %v2232
        %2234 = vperm.xlu0 %2233, %v2223
        %v2235 = vpop.permute.xlu0 %2234
        %v2236 = vperm.slane %v2143, 7
        %v2237 = vlaneseq
        %v2238 = vshrl.u32 %v2237, 7
        %2240 = vset.pattern.permute.xlu0 %v2238
        %2241 = vperm.xlu0 %2240, %v2236
        %v2242 = vpop.permute.xlu0 %2241
        %v2243 = vlaneseq
        %v2244 = vshrl.u32 %v2243, 7
        %v2245 = vadd.s32 %v2244, 8
        %2246 = vset.pattern.permute.xlu0 %v2245
        %2247 = vperm.xlu0 %2246, %v2236
        %v2248 = vpop.permute.xlu0 %2247
        %v2250 = vrot.slane %v323, 1
        %v2251 = vrot.slane %v323, 2
        %v2252 = vrot.slane %v323, 3
        %v2253 = vrot.slane %v323, 4
        %v2254 = vrot.slane %v323, 5
        %v2255 = vrot.slane %v323, 6
        %v2256 = vrot.slane %v323, 7
        %v2257 = vperm.slane %v323, 0
        %v2258 = vperm.slane %v2250, 0
        %v2259 = vperm.slane %v2251, 0
        %v2260 = vperm.slane %v2252, 0
        %v2261 = vperm.slane %v2253, 0
        %v2262 = vperm.slane %v2254, 0
        %v2263 = vperm.slane %v2255, 0
        %v2264 = vperm.slane %v2256, 0
        %v2273 = vadd.f32 %v2151, %v2257
        %v2274 = vadd.f32 %v2157, %v2257
        %v2275 = vadd.f32 %v2164, %v2258
        %v2276 = vadd.f32 %v2170, %v2258
        %v2277 = vadd.f32 %v2177, %v2259
        %v2278 = vadd.f32 %v2183, %v2259
        %v2279 = vadd.f32 %v2190, %v2260
        %v2280 = vadd.f32 %v2196, %v2260
        %v2281 = vadd.f32 %v2203, %v2261
        %v2282 = vadd.f32 %v2209, %v2261
        %v2283 = vadd.f32 %v2216, %v2262
        %v2284 = vadd.f32 %v2222, %v2262
        %v2285 = vadd.f32 %v2229, %v2263
        %v2286 = vadd.f32 %v2235, %v2263
        %v2287 = vadd.f32 %v2242, %v2264
        %v2288 = vadd.f32 %v2248, %v2264
        %v2289 = vmax.f32 %v2273, %v2277
        %v2290 = vmax.f32 %v2275, %v2279
        %v2291 = vmax.f32 %v2289, %v2281
        %v2292 = vmax.f32 %v2290, %v2283
        %v2293 = vmax.f32 %v2291, %v2285
        %v2294 = vmax.f32 %v2292, %v2287
        %v2295 = vmax.f32 %v2293, %v2294
        %v2296 = vmax.f32 %v2274, %v2278
        %v2297 = vmax.f32 %v2276, %v2280
        %v2298 = vmax.f32 %v2296, %v2282
        %v2299 = vmax.f32 %v2297, %v2284
        %v2300 = vmax.f32 %v2298, %v2286
        %v2301 = vmax.f32 %v2299, %v2288
        %v2302 = vmax.f32 %v2300, %v2301
        %v2303 = vmax.f32 %v2295, -1e+30
        %v2304 = vmax.f32 %v2302, -1e+30
        %v2305 = vperm.slane %v2144, 0
        %v2306 = vlaneseq
        %v2307 = vshrl.u32 %v2306, 7
        %2309 = vset.pattern.permute.xlu0 %v2307
        %2310 = vperm.xlu0 %2309, %v2305
        %v2311 = vpop.permute.xlu0 %2310
        %v2312 = vlaneseq
        %v2313 = vshrl.u32 %v2312, 7
        %v2314 = vadd.s32 %v2313, 8
        %2315 = vset.pattern.permute.xlu0 %v2314
        %2316 = vperm.xlu0 %2315, %v2305
        %v2317 = vpop.permute.xlu0 %2316
        %v2318 = vperm.slane %v2144, 1
        %v2319 = vlaneseq
        %v2320 = vshrl.u32 %v2319, 7
        %2322 = vset.pattern.permute.xlu0 %v2320
        %2323 = vperm.xlu0 %2322, %v2318
        %v2324 = vpop.permute.xlu0 %2323
        %v2325 = vlaneseq
        %v2326 = vshrl.u32 %v2325, 7
        %v2327 = vadd.s32 %v2326, 8
        %2328 = vset.pattern.permute.xlu0 %v2327
        %2329 = vperm.xlu0 %2328, %v2318
        %v2330 = vpop.permute.xlu0 %2329
        %v2331 = vperm.slane %v2144, 2
        %v2332 = vlaneseq
        %v2333 = vshrl.u32 %v2332, 7
        %2335 = vset.pattern.permute.xlu0 %v2333
        %2336 = vperm.xlu0 %2335, %v2331
        %v2337 = vpop.permute.xlu0 %2336
        %v2338 = vlaneseq
        %v2339 = vshrl.u32 %v2338, 7
        %v2340 = vadd.s32 %v2339, 8
        %2341 = vset.pattern.permute.xlu0 %v2340
        %2342 = vperm.xlu0 %2341, %v2331
        %v2343 = vpop.permute.xlu0 %2342
        %v2344 = vperm.slane %v2144, 3
        %v2345 = vlaneseq
        %v2346 = vshrl.u32 %v2345, 7
        %2348 = vset.pattern.permute.xlu0 %v2346
        %2349 = vperm.xlu0 %2348, %v2344
        %v2350 = vpop.permute.xlu0 %2349
        %v2351 = vlaneseq
        %v2352 = vshrl.u32 %v2351, 7
        %v2353 = vadd.s32 %v2352, 8
        %2354 = vset.pattern.permute.xlu0 %v2353
        %2355 = vperm.xlu0 %2354, %v2344
        %v2356 = vpop.permute.xlu0 %2355
        %v2357 = vperm.slane %v2144, 4
        %v2358 = vlaneseq
        %v2359 = vshrl.u32 %v2358, 7
        %2361 = vset.pattern.permute.xlu0 %v2359
        %2362 = vperm.xlu0 %2361, %v2357
        %v2363 = vpop.permute.xlu0 %2362
        %v2364 = vlaneseq
        %v2365 = vshrl.u32 %v2364, 7
        %v2366 = vadd.s32 %v2365, 8
        %2367 = vset.pattern.permute.xlu0 %v2366
        %2368 = vperm.xlu0 %2367, %v2357
        %v2369 = vpop.permute.xlu0 %2368
        %v2370 = vperm.slane %v2144, 5
        %v2371 = vlaneseq
        %v2372 = vshrl.u32 %v2371, 7
        %2374 = vset.pattern.permute.xlu0 %v2372
        %2375 = vperm.xlu0 %2374, %v2370
        %v2376 = vpop.permute.xlu0 %2375
        %v2377 = vlaneseq
        %v2378 = vshrl.u32 %v2377, 7
        %v2379 = vadd.s32 %v2378, 8
        %2380 = vset.pattern.permute.xlu0 %v2379
        %2381 = vperm.xlu0 %2380, %v2370
        %v2382 = vpop.permute.xlu0 %2381
        %v2383 = vperm.slane %v2144, 6
        %v2384 = vlaneseq
        %v2385 = vshrl.u32 %v2384, 7
        %2387 = vset.pattern.permute.xlu0 %v2385
        %2388 = vperm.xlu0 %2387, %v2383
        %v2389 = vpop.permute.xlu0 %2388
        %v2390 = vlaneseq
        %v2391 = vshrl.u32 %v2390, 7
        %v2392 = vadd.s32 %v2391, 8
        %2393 = vset.pattern.permute.xlu0 %v2392
        %2394 = vperm.xlu0 %2393, %v2383
        %v2395 = vpop.permute.xlu0 %2394
        %v2396 = vperm.slane %v2144, 7
        %v2397 = vlaneseq
        %v2398 = vshrl.u32 %v2397, 7
        %2400 = vset.pattern.permute.xlu0 %v2398
        %2401 = vperm.xlu0 %2400, %v2396
        %v2402 = vpop.permute.xlu0 %2401
        %v2403 = vlaneseq
        %v2404 = vshrl.u32 %v2403, 7
        %v2405 = vadd.s32 %v2404, 8
        %2406 = vset.pattern.permute.xlu0 %v2405
        %2407 = vperm.xlu0 %2406, %v2396
        %v2408 = vpop.permute.xlu0 %2407
        %v2410 = vrot.slane %v324, 1
        %v2411 = vrot.slane %v324, 2
        %v2412 = vrot.slane %v324, 3
        %v2413 = vrot.slane %v324, 4
        %v2414 = vrot.slane %v324, 5
        %v2415 = vrot.slane %v324, 6
        %v2416 = vrot.slane %v324, 7
        %v2417 = vperm.slane %v324, 0
        %v2418 = vperm.slane %v2410, 0
        %v2419 = vperm.slane %v2411, 0
        %v2420 = vperm.slane %v2412, 0
        %v2421 = vperm.slane %v2413, 0
        %v2422 = vperm.slane %v2414, 0
        %v2423 = vperm.slane %v2415, 0
        %v2424 = vperm.slane %v2416, 0
        %v2433 = vadd.f32 %v2311, %v2417
        %v2434 = vadd.f32 %v2317, %v2417
        %v2435 = vadd.f32 %v2324, %v2418
        %v2436 = vadd.f32 %v2330, %v2418
        %v2437 = vadd.f32 %v2337, %v2419
        %v2438 = vadd.f32 %v2343, %v2419
        %v2439 = vadd.f32 %v2350, %v2420
        %v2440 = vadd.f32 %v2356, %v2420
        %v2441 = vadd.f32 %v2363, %v2421
        %v2442 = vadd.f32 %v2369, %v2421
        %v2443 = vadd.f32 %v2376, %v2422
        %v2444 = vadd.f32 %v2382, %v2422
        %v2445 = vadd.f32 %v2389, %v2423
        %v2446 = vadd.f32 %v2395, %v2423
        %v2447 = vadd.f32 %v2402, %v2424
        %v2448 = vadd.f32 %v2408, %v2424
        %v2449 = vmax.f32 %v2433, %v2437
        %v2450 = vmax.f32 %v2435, %v2439
        %v2451 = vmax.f32 %v2449, %v2441
        %v2452 = vmax.f32 %v2450, %v2443
        %v2453 = vmax.f32 %v2451, %v2445
        %v2454 = vmax.f32 %v2452, %v2447
        %v2455 = vmax.f32 %v2453, %v2454
        %v2456 = vmax.f32 %v2434, %v2438
        %v2457 = vmax.f32 %v2436, %v2440
        %v2458 = vmax.f32 %v2456, %v2442
        %v2459 = vmax.f32 %v2457, %v2444
        %v2460 = vmax.f32 %v2458, %v2446
        %v2461 = vmax.f32 %v2459, %v2448
        %v2462 = vmax.f32 %v2460, %v2461
        %v2463 = vmax.f32 %v2303, %v2455
        %v2464 = vmax.f32 %v2304, %v2462
        %v2467 = vrot.slane %v2463, 1
        %v2468 = vrot.slane %v2463, 2
        %v2469 = vrot.slane %v2463, 3
        %v2470 = vrot.slane %v2463, 4
        %v2471 = vrot.slane %v2463, 5
        %v2472 = vrot.slane %v2463, 6
        %v2473 = vrot.slane %v2463, 7
        %v2474 = vrot.slane %v2464, 1
        %v2475 = vrot.slane %v2464, 2
        %v2476 = vrot.slane %v2464, 3
        %v2477 = vrot.slane %v2464, 4
        %v2478 = vrot.slane %v2464, 5
        %v2479 = vrot.slane %v2464, 6
        %v2480 = vrot.slane %v2464, 7
        %2495 = vst [vmem:[#allocation2] sm:$0x1] %v2463
        %2496 = vst [vmem:[#allocation2 + $0x1] sm:$0x1] %v2467
        %2497 = vst [vmem:[#allocation2 + $0x2] sm:$0x1] %v2468
        %2498 = vst [vmem:[#allocation2 + $0x3] sm:$0x1] %v2469
        %2499 = vst [vmem:[#allocation2 + $0x4] sm:$0x1] %v2470
        %2500 = vst [vmem:[#allocation2 + $0x5] sm:$0x1] %v2471
        %2501 = vst [vmem:[#allocation2 + $0x6] sm:$0x1] %v2472
        %2502 = vst [vmem:[#allocation2 + $0x7] sm:$0x1] %v2473
        %2503 = vst [vmem:[#allocation2 + $0x8] sm:$0x1] %v2464
        %2504 = vst [vmem:[#allocation2 + $0x9] sm:$0x1] %v2474
        %2505 = vst [vmem:[#allocation2 + $0xa] sm:$0x1] %v2475
        %2506 = vst [vmem:[#allocation2 + $0xb] sm:$0x1] %v2476
        %2507 = vst [vmem:[#allocation2 + $0xc] sm:$0x1] %v2477
        %2508 = vst [vmem:[#allocation2 + $0xd] sm:$0x1] %v2478
        %2509 = vst [vmem:[#allocation2 + $0xe] sm:$0x1] %v2479
        %2510 = vst [vmem:[#allocation2 + $0xf] sm:$0x1] %v2480
        %v2511 = vld [vmem:[#allocation2] sm:$0x1]
        %v2512 = vld [vmem:[#allocation9] sm:$0xff]
        %v2513 = vld [vmem:[#allocation9 + $0x8] sm:$0xff]
        %v2514 = vld [vmem:[#allocation9 + $0x10] sm:$0xff]
        %v2515 = vld [vmem:[#allocation9 + $0x18] sm:$0xff]
        %v2516 = vld [vmem:[#allocation9 + $0x20] sm:$0xff]
        %v2517 = vld [vmem:[#allocation9 + $0x28] sm:$0xff]
        %v2518 = vld [vmem:[#allocation9 + $0x30] sm:$0xff]
        %v2519 = vld [vmem:[#allocation9 + $0x38] sm:$0xff]
        %v2520 = vld [vmem:[#allocation9 + $0x40] sm:$0xff]
        %v2521 = vld [vmem:[#allocation9 + $0x48] sm:$0xff]
        %v2522 = vld [vmem:[#allocation9 + $0x50] sm:$0xff]
        %v2523 = vld [vmem:[#allocation9 + $0x58] sm:$0xff]
        %v2524 = vld [vmem:[#allocation9 + $0x60] sm:$0xff]
        %v2525 = vld [vmem:[#allocation9 + $0x68] sm:$0xff]
        %v2526 = vld [vmem:[#allocation9 + $0x70] sm:$0xff]
        %v2527 = vld [vmem:[#allocation9 + $0x78] sm:$0xff]
        %s2528 = scalar_lea.vmem [#allocation2], 1
        %v2529 = vld [vmem:[%s2528] sm:$0x1]
        %s2530 = scalar_lea.vmem [#allocation9], 128
        %v2531 = vld [vmem:[%s2530] sm:$0xff]
        %v2532 = vld [vmem:[%s2530 + $0x8] sm:$0xff]
        %v2533 = vld [vmem:[%s2530 + $0x10] sm:$0xff]
        %v2534 = vld [vmem:[%s2530 + $0x18] sm:$0xff]
        %v2535 = vld [vmem:[%s2530 + $0x20] sm:$0xff]
        %v2536 = vld [vmem:[%s2530 + $0x28] sm:$0xff]
        %v2537 = vld [vmem:[%s2530 + $0x30] sm:$0xff]
        %v2538 = vld [vmem:[%s2530 + $0x38] sm:$0xff]
        %v2539 = vld [vmem:[%s2530 + $0x40] sm:$0xff]
        %v2540 = vld [vmem:[%s2530 + $0x48] sm:$0xff]
        %v2541 = vld [vmem:[%s2530 + $0x50] sm:$0xff]
        %v2542 = vld [vmem:[%s2530 + $0x58] sm:$0xff]
        %v2543 = vld [vmem:[%s2530 + $0x60] sm:$0xff]
        %v2544 = vld [vmem:[%s2530 + $0x68] sm:$0xff]
        %v2545 = vld [vmem:[%s2530 + $0x70] sm:$0xff]
        %v2546 = vld [vmem:[%s2530 + $0x78] sm:$0xff]
        %2547 = vmatpush.msra.mxu0 %v2546
        %2548 = vmatpush.msra.mxu0 %v2545
        %2549 = vmatpush.msra.mxu0 %v2544
        %2550 = vmatpush.msra.mxu0 %v2543
        %2551 = vmatpush.msra.mxu0 %v2542
        %2552 = vmatpush.msra.mxu0 %v2541
        %2553 = vmatpush.msra.mxu0 %v2540
        %2554 = vmatpush.msra.mxu0 %v2539
        %2555 = vmatpush.msra.mxu0 %v2538
        %2556 = vmatpush.msra.mxu0 %v2537
        %2557 = vmatpush.msra.mxu0 %v2536
        %2558 = vmatpush.msra.mxu0 %v2535
        %2559 = vmatpush.msra.mxu0 %v2534
        %2560 = vmatpush.msra.mxu0 %v2533
        %2561 = vmatpush.msra.mxu0 %v2532
        %2562 = vmatpush.msra.mxu0 %v2531
        %2563 = vmatmul.f32.gmra.mxu0 %v2529
        %v2564 = vpop.f32.mrf.mxu0
        %v2565 = vadd.f32 0.0, %v2564
        %2566 = vdwg.mxu0
        %2567 = vmatpush.msra.mxu0 %v2527
        %2568 = vmatpush.msra.mxu0 %v2526
        %2569 = vmatpush.msra.mxu0 %v2525
        %2570 = vmatpush.msra.mxu0 %v2524
        %2571 = vmatpush.msra.mxu0 %v2523
        %2572 = vmatpush.msra.mxu0 %v2522
        %2573 = vmatpush.msra.mxu0 %v2521
        %2574 = vmatpush.msra.mxu0 %v2520
        %2575 = vmatpush.msra.mxu0 %v2519
        %2576 = vmatpush.msra.mxu0 %v2518
        %2577 = vmatpush.msra.mxu0 %v2517
        %2578 = vmatpush.msra.mxu0 %v2516
        %2579 = vmatpush.msra.mxu0 %v2515
        %2580 = vmatpush.msra.mxu0 %v2514
        %2581 = vmatpush.msra.mxu0 %v2513
        %2582 = vmatpush.msra.mxu0 %v2512
        %2583 = vmatmul.f32.gmra.mxu0 %v2511
        %v2584 = vpop.f32.mrf.mxu0
        %v2585 = vadd.f32 %v2565, %v2584
        %2586 = vdwg.mxu0
        %s2587 = scalar_lea.vmem [#allocation2], 2
        %v2588 = vld [vmem:[%s2587] sm:$0x1]
        %s2589 = scalar_lea.vmem [#allocation9], 256
        %v2590 = vld [vmem:[%s2589] sm:$0xff]
        %v2591 = vld [vmem:[%s2589 + $0x8] sm:$0xff]
        %v2592 = vld [vmem:[%s2589 + $0x10] sm:$0xff]
        %v2593 = vld [vmem:[%s2589 + $0x18] sm:$0xff]
        %v2594 = vld [vmem:[%s2589 + $0x20] sm:$0xff]
        %v2595 = vld [vmem:[%s2589 + $0x28] sm:$0xff]
        %v2596 = vld [vmem:[%s2589 + $0x30] sm:$0xff]
        %v2597 = vld [vmem:[%s2589 + $0x38] sm:$0xff]
        %v2598 = vld [vmem:[%s2589 + $0x40] sm:$0xff]
        %v2599 = vld [vmem:[%s2589 + $0x48] sm:$0xff]
        %v2600 = vld [vmem:[%s2589 + $0x50] sm:$0xff]
        %v2601 = vld [vmem:[%s2589 + $0x58] sm:$0xff]
        %v2602 = vld [vmem:[%s2589 + $0x60] sm:$0xff]
        %v2603 = vld [vmem:[%s2589 + $0x68] sm:$0xff]
        %v2604 = vld [vmem:[%s2589 + $0x70] sm:$0xff]
        %v2605 = vld [vmem:[%s2589 + $0x78] sm:$0xff]
        %2606 = vmatpush.msra.mxu0 %v2605
        %2607 = vmatpush.msra.mxu0 %v2604
        %2608 = vmatpush.msra.mxu0 %v2603
        %2609 = vmatpush.msra.mxu0 %v2602
        %2610 = vmatpush.msra.mxu0 %v2601
        %2611 = vmatpush.msra.mxu0 %v2600
        %2612 = vmatpush.msra.mxu0 %v2599
        %2613 = vmatpush.msra.mxu0 %v2598
        %2614 = vmatpush.msra.mxu0 %v2597
        %2615 = vmatpush.msra.mxu0 %v2596
        %2616 = vmatpush.msra.mxu0 %v2595
        %2617 = vmatpush.msra.mxu0 %v2594
        %2618 = vmatpush.msra.mxu0 %v2593
        %2619 = vmatpush.msra.mxu0 %v2592
        %2620 = vmatpush.msra.mxu0 %v2591
        %2621 = vmatpush.msra.mxu0 %v2590
        %2622 = vmatmul.f32.gmra.mxu0 %v2588
        %v2623 = vpop.f32.mrf.mxu0
        %v2624 = vadd.f32 0.0, %v2623
        %2625 = vdwg.mxu0
        %v2626 = vadd.f32 %v2585, %v2624
        %s2627 = scalar_lea.vmem [#allocation2], 3
        %v2628 = vld [vmem:[%s2627] sm:$0x1]
        %s2629 = scalar_lea.vmem [#allocation9], 384
        %v2630 = vld [vmem:[%s2629] sm:$0xff]
        %v2631 = vld [vmem:[%s2629 + $0x8] sm:$0xff]
        %v2632 = vld [vmem:[%s2629 + $0x10] sm:$0xff]
        %v2633 = vld [vmem:[%s2629 + $0x18] sm:$0xff]
        %v2634 = vld [vmem:[%s2629 + $0x20] sm:$0xff]
        %v2635 = vld [vmem:[%s2629 + $0x28] sm:$0xff]
        %v2636 = vld [vmem:[%s2629 + $0x30] sm:$0xff]
        %v2637 = vld [vmem:[%s2629 + $0x38] sm:$0xff]
        %v2638 = vld [vmem:[%s2629 + $0x40] sm:$0xff]
        %v2639 = vld [vmem:[%s2629 + $0x48] sm:$0xff]
        %v2640 = vld [vmem:[%s2629 + $0x50] sm:$0xff]
        %v2641 = vld [vmem:[%s2629 + $0x58] sm:$0xff]
        %v2642 = vld [vmem:[%s2629 + $0x60] sm:$0xff]
        %v2643 = vld [vmem:[%s2629 + $0x68] sm:$0xff]
        %v2644 = vld [vmem:[%s2629 + $0x70] sm:$0xff]
        %v2645 = vld [vmem:[%s2629 + $0x78] sm:$0xff]
        %2646 = vmatpush.msra.mxu0 %v2645
        %2647 = vmatpush.msra.mxu0 %v2644
        %2648 = vmatpush.msra.mxu0 %v2643
        %2649 = vmatpush.msra.mxu0 %v2642
        %2650 = vmatpush.msra.mxu0 %v2641
        %2651 = vmatpush.msra.mxu0 %v2640
        %2652 = vmatpush.msra.mxu0 %v2639
        %2653 = vmatpush.msra.mxu0 %v2638
        %2654 = vmatpush.msra.mxu0 %v2637
        %2655 = vmatpush.msra.mxu0 %v2636
        %2656 = vmatpush.msra.mxu0 %v2635
        %2657 = vmatpush.msra.mxu0 %v2634
        %2658 = vmatpush.msra.mxu0 %v2633
        %2659 = vmatpush.msra.mxu0 %v2632
        %2660 = vmatpush.msra.mxu0 %v2631
        %2661 = vmatpush.msra.mxu0 %v2630
        %2662 = vmatmul.f32.gmra.mxu0 %v2628
        %v2663 = vpop.f32.mrf.mxu0
        %v2664 = vadd.f32 0.0, %v2663
        %2665 = vdwg.mxu0
        %v2666 = vadd.f32 %v2626, %v2664
        %s2667 = scalar_lea.vmem [#allocation2], 4
        %v2668 = vld [vmem:[%s2667] sm:$0x1]
        %s2669 = scalar_lea.vmem [#allocation9], 512
        %v2670 = vld [vmem:[%s2669] sm:$0xff]
        %v2671 = vld [vmem:[%s2669 + $0x8] sm:$0xff]
        %v2672 = vld [vmem:[%s2669 + $0x10] sm:$0xff]
        %v2673 = vld [vmem:[%s2669 + $0x18] sm:$0xff]
        %v2674 = vld [vmem:[%s2669 + $0x20] sm:$0xff]
        %v2675 = vld [vmem:[%s2669 + $0x28] sm:$0xff]
        %v2676 = vld [vmem:[%s2669 + $0x30] sm:$0xff]
        %v2677 = vld [vmem:[%s2669 + $0x38] sm:$0xff]
        %v2678 = vld [vmem:[%s2669 + $0x40] sm:$0xff]
        %v2679 = vld [vmem:[%s2669 + $0x48] sm:$0xff]
        %v2680 = vld [vmem:[%s2669 + $0x50] sm:$0xff]
        %v2681 = vld [vmem:[%s2669 + $0x58] sm:$0xff]
        %v2682 = vld [vmem:[%s2669 + $0x60] sm:$0xff]
        %v2683 = vld [vmem:[%s2669 + $0x68] sm:$0xff]
        %v2684 = vld [vmem:[%s2669 + $0x70] sm:$0xff]
        %v2685 = vld [vmem:[%s2669 + $0x78] sm:$0xff]
        %2686 = vmatpush.msra.mxu0 %v2685
        %2687 = vmatpush.msra.mxu0 %v2684
        %2688 = vmatpush.msra.mxu0 %v2683
        %2689 = vmatpush.msra.mxu0 %v2682
        %2690 = vmatpush.msra.mxu0 %v2681
        %2691 = vmatpush.msra.mxu0 %v2680
        %2692 = vmatpush.msra.mxu0 %v2679
        %2693 = vmatpush.msra.mxu0 %v2678
        %2694 = vmatpush.msra.mxu0 %v2677
        %2695 = vmatpush.msra.mxu0 %v2676
        %2696 = vmatpush.msra.mxu0 %v2675
        %2697 = vmatpush.msra.mxu0 %v2674
        %2698 = vmatpush.msra.mxu0 %v2673
        %2699 = vmatpush.msra.mxu0 %v2672
        %2700 = vmatpush.msra.mxu0 %v2671
        %2701 = vmatpush.msra.mxu0 %v2670
        %2702 = vmatmul.f32.gmra.mxu0 %v2668
        %v2703 = vpop.f32.mrf.mxu0
        %v2704 = vadd.f32 0.0, %v2703
        %2705 = vdwg.mxu0
        %v2706 = vadd.f32 %v2666, %v2704
        %s2707 = scalar_lea.vmem [#allocation2], 5
        %v2708 = vld [vmem:[%s2707] sm:$0x1]
        %s2709 = scalar_lea.vmem [#allocation9], 640
        %v2710 = vld [vmem:[%s2709] sm:$0xff]
        %v2711 = vld [vmem:[%s2709 + $0x8] sm:$0xff]
        %v2712 = vld [vmem:[%s2709 + $0x10] sm:$0xff]
        %v2713 = vld [vmem:[%s2709 + $0x18] sm:$0xff]
        %v2714 = vld [vmem:[%s2709 + $0x20] sm:$0xff]
        %v2715 = vld [vmem:[%s2709 + $0x28] sm:$0xff]
        %v2716 = vld [vmem:[%s2709 + $0x30] sm:$0xff]
        %v2717 = vld [vmem:[%s2709 + $0x38] sm:$0xff]
        %v2718 = vld [vmem:[%s2709 + $0x40] sm:$0xff]
        %v2719 = vld [vmem:[%s2709 + $0x48] sm:$0xff]
        %v2720 = vld [vmem:[%s2709 + $0x50] sm:$0xff]
        %v2721 = vld [vmem:[%s2709 + $0x58] sm:$0xff]
        %v2722 = vld [vmem:[%s2709 + $0x60] sm:$0xff]
        %v2723 = vld [vmem:[%s2709 + $0x68] sm:$0xff]
        %v2724 = vld [vmem:[%s2709 + $0x70] sm:$0xff]
        %v2725 = vld [vmem:[%s2709 + $0x78] sm:$0xff]
        %2726 = vmatpush.msra.mxu0 %v2725
        %2727 = vmatpush.msra.mxu0 %v2724
        %2728 = vmatpush.msra.mxu0 %v2723
        %2729 = vmatpush.msra.mxu0 %v2722
        %2730 = vmatpush.msra.mxu0 %v2721
        %2731 = vmatpush.msra.mxu0 %v2720
        %2732 = vmatpush.msra.mxu0 %v2719
        %2733 = vmatpush.msra.mxu0 %v2718
        %2734 = vmatpush.msra.mxu0 %v2717
        %2735 = vmatpush.msra.mxu0 %v2716
        %2736 = vmatpush.msra.mxu0 %v2715
        %2737 = vmatpush.msra.mxu0 %v2714
        %2738 = vmatpush.msra.mxu0 %v2713
        %2739 = vmatpush.msra.mxu0 %v2712
        %2740 = vmatpush.msra.mxu0 %v2711
        %2741 = vmatpush.msra.mxu0 %v2710
        %2742 = vmatmul.f32.gmra.mxu0 %v2708
        %v2743 = vpop.f32.mrf.mxu0
        %v2744 = vadd.f32 0.0, %v2743
        %2745 = vdwg.mxu0
        %v2746 = vadd.f32 %v2706, %v2744
        %s2747 = scalar_lea.vmem [#allocation2], 6
        %v2748 = vld [vmem:[%s2747] sm:$0x1]
        %s2749 = scalar_lea.vmem [#allocation9], 768
        %v2750 = vld [vmem:[%s2749] sm:$0xff]
        %v2751 = vld [vmem:[%s2749 + $0x8] sm:$0xff]
        %v2752 = vld [vmem:[%s2749 + $0x10] sm:$0xff]
        %v2753 = vld [vmem:[%s2749 + $0x18] sm:$0xff]
        %v2754 = vld [vmem:[%s2749 + $0x20] sm:$0xff]
        %v2755 = vld [vmem:[%s2749 + $0x28] sm:$0xff]
        %v2756 = vld [vmem:[%s2749 + $0x30] sm:$0xff]
        %v2757 = vld [vmem:[%s2749 + $0x38] sm:$0xff]
        %v2758 = vld [vmem:[%s2749 + $0x40] sm:$0xff]
        %v2759 = vld [vmem:[%s2749 + $0x48] sm:$0xff]
        %v2760 = vld [vmem:[%s2749 + $0x50] sm:$0xff]
        %v2761 = vld [vmem:[%s2749 + $0x58] sm:$0xff]
        %v2762 = vld [vmem:[%s2749 + $0x60] sm:$0xff]
        %v2763 = vld [vmem:[%s2749 + $0x68] sm:$0xff]
        %v2764 = vld [vmem:[%s2749 + $0x70] sm:$0xff]
        %v2765 = vld [vmem:[%s2749 + $0x78] sm:$0xff]
        %2766 = vmatpush.msra.mxu0 %v2765
        %2767 = vmatpush.msra.mxu0 %v2764
        %2768 = vmatpush.msra.mxu0 %v2763
        %2769 = vmatpush.msra.mxu0 %v2762
        %2770 = vmatpush.msra.mxu0 %v2761
        %2771 = vmatpush.msra.mxu0 %v2760
        %2772 = vmatpush.msra.mxu0 %v2759
        %2773 = vmatpush.msra.mxu0 %v2758
        %2774 = vmatpush.msra.mxu0 %v2757
        %2775 = vmatpush.msra.mxu0 %v2756
        %2776 = vmatpush.msra.mxu0 %v2755
        %2777 = vmatpush.msra.mxu0 %v2754
        %2778 = vmatpush.msra.mxu0 %v2753
        %2779 = vmatpush.msra.mxu0 %v2752
        %2780 = vmatpush.msra.mxu0 %v2751
        %2781 = vmatpush.msra.mxu0 %v2750
        %2782 = vmatmul.f32.gmra.mxu0 %v2748
        %v2783 = vpop.f32.mrf.mxu0
        %v2784 = vadd.f32 0.0, %v2783
        %2785 = vdwg.mxu0
        %v2786 = vadd.f32 %v2746, %v2784
        %s2787 = scalar_lea.vmem [#allocation2], 7
        %v2788 = vld [vmem:[%s2787] sm:$0x1]
        %s2789 = scalar_lea.vmem [#allocation9], 896
        %v2790 = vld [vmem:[%s2789] sm:$0xff]
        %v2791 = vld [vmem:[%s2789 + $0x8] sm:$0xff]
        %v2792 = vld [vmem:[%s2789 + $0x10] sm:$0xff]
        %v2793 = vld [vmem:[%s2789 + $0x18] sm:$0xff]
        %v2794 = vld [vmem:[%s2789 + $0x20] sm:$0xff]
        %v2795 = vld [vmem:[%s2789 + $0x28] sm:$0xff]
        %v2796 = vld [vmem:[%s2789 + $0x30] sm:$0xff]
        %v2797 = vld [vmem:[%s2789 + $0x38] sm:$0xff]
        %v2798 = vld [vmem:[%s2789 + $0x40] sm:$0xff]
        %v2799 = vld [vmem:[%s2789 + $0x48] sm:$0xff]
        %v2800 = vld [vmem:[%s2789 + $0x50] sm:$0xff]
        %v2801 = vld [vmem:[%s2789 + $0x58] sm:$0xff]
        %v2802 = vld [vmem:[%s2789 + $0x60] sm:$0xff]
        %v2803 = vld [vmem:[%s2789 + $0x68] sm:$0xff]
        %v2804 = vld [vmem:[%s2789 + $0x70] sm:$0xff]
        %v2805 = vld [vmem:[%s2789 + $0x78] sm:$0xff]
        %2806 = vmatpush.msra.mxu0 %v2805
        %2807 = vmatpush.msra.mxu0 %v2804
        %2808 = vmatpush.msra.mxu0 %v2803
        %2809 = vmatpush.msra.mxu0 %v2802
        %2810 = vmatpush.msra.mxu0 %v2801
        %2811 = vmatpush.msra.mxu0 %v2800
        %2812 = vmatpush.msra.mxu0 %v2799
        %2813 = vmatpush.msra.mxu0 %v2798
        %2814 = vmatpush.msra.mxu0 %v2797
        %2815 = vmatpush.msra.mxu0 %v2796
        %2816 = vmatpush.msra.mxu0 %v2795
        %2817 = vmatpush.msra.mxu0 %v2794
        %2818 = vmatpush.msra.mxu0 %v2793
        %2819 = vmatpush.msra.mxu0 %v2792
        %2820 = vmatpush.msra.mxu0 %v2791
        %2821 = vmatpush.msra.mxu0 %v2790
        %2822 = vmatmul.f32.gmra.mxu0 %v2788
        %v2823 = vpop.f32.mrf.mxu0
        %v2824 = vadd.f32 0.0, %v2823
        %2825 = vdwg.mxu0
        %v2826 = vadd.f32 %v2786, %v2824
        %s2827 = scalar_lea.vmem [#allocation2], 8
        %v2828 = vld [vmem:[%s2827] sm:$0x1]
        %s2829 = scalar_lea.vmem [#allocation9], 1024
        %v2830 = vld [vmem:[%s2829] sm:$0xff]
        %v2831 = vld [vmem:[%s2829 + $0x8] sm:$0xff]
        %v2832 = vld [vmem:[%s2829 + $0x10] sm:$0xff]
        %v2833 = vld [vmem:[%s2829 + $0x18] sm:$0xff]
        %v2834 = vld [vmem:[%s2829 + $0x20] sm:$0xff]
        %v2835 = vld [vmem:[%s2829 + $0x28] sm:$0xff]
        %v2836 = vld [vmem:[%s2829 + $0x30] sm:$0xff]
        %v2837 = vld [vmem:[%s2829 + $0x38] sm:$0xff]
        %v2838 = vld [vmem:[%s2829 + $0x40] sm:$0xff]
        %v2839 = vld [vmem:[%s2829 + $0x48] sm:$0xff]
        %v2840 = vld [vmem:[%s2829 + $0x50] sm:$0xff]
        %v2841 = vld [vmem:[%s2829 + $0x58] sm:$0xff]
        %v2842 = vld [vmem:[%s2829 + $0x60] sm:$0xff]
        %v2843 = vld [vmem:[%s2829 + $0x68] sm:$0xff]
        %v2844 = vld [vmem:[%s2829 + $0x70] sm:$0xff]
        %v2845 = vld [vmem:[%s2829 + $0x78] sm:$0xff]
        %2846 = vmatpush.msra.mxu0 %v2845
        %2847 = vmatpush.msra.mxu0 %v2844
        %2848 = vmatpush.msra.mxu0 %v2843
        %2849 = vmatpush.msra.mxu0 %v2842
        %2850 = vmatpush.msra.mxu0 %v2841
        %2851 = vmatpush.msra.mxu0 %v2840
        %2852 = vmatpush.msra.mxu0 %v2839
        %2853 = vmatpush.msra.mxu0 %v2838
        %2854 = vmatpush.msra.mxu0 %v2837
        %2855 = vmatpush.msra.mxu0 %v2836
        %2856 = vmatpush.msra.mxu0 %v2835
        %2857 = vmatpush.msra.mxu0 %v2834
        %2858 = vmatpush.msra.mxu0 %v2833
        %2859 = vmatpush.msra.mxu0 %v2832
        %2860 = vmatpush.msra.mxu0 %v2831
        %2861 = vmatpush.msra.mxu0 %v2830
        %2862 = vmatmul.f32.gmra.mxu0 %v2828
        %v2863 = vpop.f32.mrf.mxu0
        %v2864 = vadd.f32 0.0, %v2863
        %2865 = vdwg.mxu0
        %v2866 = vadd.f32 %v2826, %v2864
        %s2867 = scalar_lea.vmem [#allocation2], 9
        %v2868 = vld [vmem:[%s2867] sm:$0x1]
        %s2869 = scalar_lea.vmem [#allocation9], 1152
        %v2870 = vld [vmem:[%s2869] sm:$0xff]
        %v2871 = vld [vmem:[%s2869 + $0x8] sm:$0xff]
        %v2872 = vld [vmem:[%s2869 + $0x10] sm:$0xff]
        %v2873 = vld [vmem:[%s2869 + $0x18] sm:$0xff]
        %v2874 = vld [vmem:[%s2869 + $0x20] sm:$0xff]
        %v2875 = vld [vmem:[%s2869 + $0x28] sm:$0xff]
        %v2876 = vld [vmem:[%s2869 + $0x30] sm:$0xff]
        %v2877 = vld [vmem:[%s2869 + $0x38] sm:$0xff]
        %v2878 = vld [vmem:[%s2869 + $0x40] sm:$0xff]
        %v2879 = vld [vmem:[%s2869 + $0x48] sm:$0xff]
        %v2880 = vld [vmem:[%s2869 + $0x50] sm:$0xff]
        %v2881 = vld [vmem:[%s2869 + $0x58] sm:$0xff]
        %v2882 = vld [vmem:[%s2869 + $0x60] sm:$0xff]
        %v2883 = vld [vmem:[%s2869 + $0x68] sm:$0xff]
        %v2884 = vld [vmem:[%s2869 + $0x70] sm:$0xff]
        %v2885 = vld [vmem:[%s2869 + $0x78] sm:$0xff]
        %2886 = vmatpush.msra.mxu0 %v2885
        %2887 = vmatpush.msra.mxu0 %v2884
        %2888 = vmatpush.msra.mxu0 %v2883
        %2889 = vmatpush.msra.mxu0 %v2882
        %2890 = vmatpush.msra.mxu0 %v2881
        %2891 = vmatpush.msra.mxu0 %v2880
        %2892 = vmatpush.msra.mxu0 %v2879
        %2893 = vmatpush.msra.mxu0 %v2878
        %2894 = vmatpush.msra.mxu0 %v2877
        %2895 = vmatpush.msra.mxu0 %v2876
        %2896 = vmatpush.msra.mxu0 %v2875
        %2897 = vmatpush.msra.mxu0 %v2874
        %2898 = vmatpush.msra.mxu0 %v2873
        %2899 = vmatpush.msra.mxu0 %v2872
        %2900 = vmatpush.msra.mxu0 %v2871
        %2901 = vmatpush.msra.mxu0 %v2870
        %2902 = vmatmul.f32.gmra.mxu0 %v2868
        %v2903 = vpop.f32.mrf.mxu0
        %v2904 = vadd.f32 0.0, %v2903
        %2905 = vdwg.mxu0
        %v2906 = vadd.f32 %v2866, %v2904
        %s2907 = scalar_lea.vmem [#allocation2], 10
        %v2908 = vld [vmem:[%s2907] sm:$0x1]
        %s2909 = scalar_lea.vmem [#allocation9], 1280
        %v2910 = vld [vmem:[%s2909] sm:$0xff]
        %v2911 = vld [vmem:[%s2909 + $0x8] sm:$0xff]
        %v2912 = vld [vmem:[%s2909 + $0x10] sm:$0xff]
        %v2913 = vld [vmem:[%s2909 + $0x18] sm:$0xff]
        %v2914 = vld [vmem:[%s2909 + $0x20] sm:$0xff]
        %v2915 = vld [vmem:[%s2909 + $0x28] sm:$0xff]
        %v2916 = vld [vmem:[%s2909 + $0x30] sm:$0xff]
        %v2917 = vld [vmem:[%s2909 + $0x38] sm:$0xff]
        %v2918 = vld [vmem:[%s2909 + $0x40] sm:$0xff]
        %v2919 = vld [vmem:[%s2909 + $0x48] sm:$0xff]
        %v2920 = vld [vmem:[%s2909 + $0x50] sm:$0xff]
        %v2921 = vld [vmem:[%s2909 + $0x58] sm:$0xff]
        %v2922 = vld [vmem:[%s2909 + $0x60] sm:$0xff]
        %v2923 = vld [vmem:[%s2909 + $0x68] sm:$0xff]
        %v2924 = vld [vmem:[%s2909 + $0x70] sm:$0xff]
        %v2925 = vld [vmem:[%s2909 + $0x78] sm:$0xff]
        %2926 = vmatpush.msra.mxu0 %v2925
        %2927 = vmatpush.msra.mxu0 %v2924
        %2928 = vmatpush.msra.mxu0 %v2923
        %2929 = vmatpush.msra.mxu0 %v2922
        %2930 = vmatpush.msra.mxu0 %v2921
        %2931 = vmatpush.msra.mxu0 %v2920
        %2932 = vmatpush.msra.mxu0 %v2919
        %2933 = vmatpush.msra.mxu0 %v2918
        %2934 = vmatpush.msra.mxu0 %v2917
        %2935 = vmatpush.msra.mxu0 %v2916
        %2936 = vmatpush.msra.mxu0 %v2915
        %2937 = vmatpush.msra.mxu0 %v2914
        %2938 = vmatpush.msra.mxu0 %v2913
        %2939 = vmatpush.msra.mxu0 %v2912
        %2940 = vmatpush.msra.mxu0 %v2911
        %2941 = vmatpush.msra.mxu0 %v2910
        %2942 = vmatmul.f32.gmra.mxu0 %v2908
        %v2943 = vpop.f32.mrf.mxu0
        %v2944 = vadd.f32 0.0, %v2943
        %2945 = vdwg.mxu0
        %v2946 = vadd.f32 %v2906, %v2944
        %s2947 = scalar_lea.vmem [#allocation2], 11
        %v2948 = vld [vmem:[%s2947] sm:$0x1]
        %s2949 = scalar_lea.vmem [#allocation9], 1408
        %v2950 = vld [vmem:[%s2949] sm:$0xff]
        %v2951 = vld [vmem:[%s2949 + $0x8] sm:$0xff]
        %v2952 = vld [vmem:[%s2949 + $0x10] sm:$0xff]
        %v2953 = vld [vmem:[%s2949 + $0x18] sm:$0xff]
        %v2954 = vld [vmem:[%s2949 + $0x20] sm:$0xff]
        %v2955 = vld [vmem:[%s2949 + $0x28] sm:$0xff]
        %v2956 = vld [vmem:[%s2949 + $0x30] sm:$0xff]
        %v2957 = vld [vmem:[%s2949 + $0x38] sm:$0xff]
        %v2958 = vld [vmem:[%s2949 + $0x40] sm:$0xff]
        %v2959 = vld [vmem:[%s2949 + $0x48] sm:$0xff]
        %v2960 = vld [vmem:[%s2949 + $0x50] sm:$0xff]
        %v2961 = vld [vmem:[%s2949 + $0x58] sm:$0xff]
        %v2962 = vld [vmem:[%s2949 + $0x60] sm:$0xff]
        %v2963 = vld [vmem:[%s2949 + $0x68] sm:$0xff]
        %v2964 = vld [vmem:[%s2949 + $0x70] sm:$0xff]
        %v2965 = vld [vmem:[%s2949 + $0x78] sm:$0xff]
        %2966 = vmatpush.msra.mxu0 %v2965
        %2967 = vmatpush.msra.mxu0 %v2964
        %2968 = vmatpush.msra.mxu0 %v2963
        %2969 = vmatpush.msra.mxu0 %v2962
        %2970 = vmatpush.msra.mxu0 %v2961
        %2971 = vmatpush.msra.mxu0 %v2960
        %2972 = vmatpush.msra.mxu0 %v2959
        %2973 = vmatpush.msra.mxu0 %v2958
        %2974 = vmatpush.msra.mxu0 %v2957
        %2975 = vmatpush.msra.mxu0 %v2956
        %2976 = vmatpush.msra.mxu0 %v2955
        %2977 = vmatpush.msra.mxu0 %v2954
        %2978 = vmatpush.msra.mxu0 %v2953
        %2979 = vmatpush.msra.mxu0 %v2952
        %2980 = vmatpush.msra.mxu0 %v2951
        %2981 = vmatpush.msra.mxu0 %v2950
        %2982 = vmatmul.f32.gmra.mxu0 %v2948
        %v2983 = vpop.f32.mrf.mxu0
        %v2984 = vadd.f32 0.0, %v2983
        %2985 = vdwg.mxu0
        %v2986 = vadd.f32 %v2946, %v2984
        %s2987 = scalar_lea.vmem [#allocation2], 12
        %v2988 = vld [vmem:[%s2987] sm:$0x1]
        %s2989 = scalar_lea.vmem [#allocation9], 1536
        %v2990 = vld [vmem:[%s2989] sm:$0xff]
        %v2991 = vld [vmem:[%s2989 + $0x8] sm:$0xff]
        %v2992 = vld [vmem:[%s2989 + $0x10] sm:$0xff]
        %v2993 = vld [vmem:[%s2989 + $0x18] sm:$0xff]
        %v2994 = vld [vmem:[%s2989 + $0x20] sm:$0xff]
        %v2995 = vld [vmem:[%s2989 + $0x28] sm:$0xff]
        %v2996 = vld [vmem:[%s2989 + $0x30] sm:$0xff]
        %v2997 = vld [vmem:[%s2989 + $0x38] sm:$0xff]
        %v2998 = vld [vmem:[%s2989 + $0x40] sm:$0xff]
        %v2999 = vld [vmem:[%s2989 + $0x48] sm:$0xff]
        %v3000 = vld [vmem:[%s2989 + $0x50] sm:$0xff]
        %v3001 = vld [vmem:[%s2989 + $0x58] sm:$0xff]
        %v3002 = vld [vmem:[%s2989 + $0x60] sm:$0xff]
        %v3003 = vld [vmem:[%s2989 + $0x68] sm:$0xff]
        %v3004 = vld [vmem:[%s2989 + $0x70] sm:$0xff]
        %v3005 = vld [vmem:[%s2989 + $0x78] sm:$0xff]
        %3006 = vmatpush.msra.mxu0 %v3005
        %3007 = vmatpush.msra.mxu0 %v3004
        %3008 = vmatpush.msra.mxu0 %v3003
        %3009 = vmatpush.msra.mxu0 %v3002
        %3010 = vmatpush.msra.mxu0 %v3001
        %3011 = vmatpush.msra.mxu0 %v3000
        %3012 = vmatpush.msra.mxu0 %v2999
        %3013 = vmatpush.msra.mxu0 %v2998
        %3014 = vmatpush.msra.mxu0 %v2997
        %3015 = vmatpush.msra.mxu0 %v2996
        %3016 = vmatpush.msra.mxu0 %v2995
        %3017 = vmatpush.msra.mxu0 %v2994
        %3018 = vmatpush.msra.mxu0 %v2993
        %3019 = vmatpush.msra.mxu0 %v2992
        %3020 = vmatpush.msra.mxu0 %v2991
        %3021 = vmatpush.msra.mxu0 %v2990
        %3022 = vmatmul.f32.gmra.mxu0 %v2988
        %v3023 = vpop.f32.mrf.mxu0
        %v3024 = vadd.f32 0.0, %v3023
        %3025 = vdwg.mxu0
        %v3026 = vadd.f32 %v2986, %v3024
        %s3027 = scalar_lea.vmem [#allocation2], 13
        %v3028 = vld [vmem:[%s3027] sm:$0x1]
        %s3029 = scalar_lea.vmem [#allocation9], 1664
        %v3030 = vld [vmem:[%s3029] sm:$0xff]
        %v3031 = vld [vmem:[%s3029 + $0x8] sm:$0xff]
        %v3032 = vld [vmem:[%s3029 + $0x10] sm:$0xff]
        %v3033 = vld [vmem:[%s3029 + $0x18] sm:$0xff]
        %v3034 = vld [vmem:[%s3029 + $0x20] sm:$0xff]
        %v3035 = vld [vmem:[%s3029 + $0x28] sm:$0xff]
        %v3036 = vld [vmem:[%s3029 + $0x30] sm:$0xff]
        %v3037 = vld [vmem:[%s3029 + $0x38] sm:$0xff]
        %v3038 = vld [vmem:[%s3029 + $0x40] sm:$0xff]
        %v3039 = vld [vmem:[%s3029 + $0x48] sm:$0xff]
        %v3040 = vld [vmem:[%s3029 + $0x50] sm:$0xff]
        %v3041 = vld [vmem:[%s3029 + $0x58] sm:$0xff]
        %v3042 = vld [vmem:[%s3029 + $0x60] sm:$0xff]
        %v3043 = vld [vmem:[%s3029 + $0x68] sm:$0xff]
        %v3044 = vld [vmem:[%s3029 + $0x70] sm:$0xff]
        %v3045 = vld [vmem:[%s3029 + $0x78] sm:$0xff]
        %3046 = vmatpush.msra.mxu0 %v3045
        %3047 = vmatpush.msra.mxu0 %v3044
        %3048 = vmatpush.msra.mxu0 %v3043
        %3049 = vmatpush.msra.mxu0 %v3042
        %3050 = vmatpush.msra.mxu0 %v3041
        %3051 = vmatpush.msra.mxu0 %v3040
        %3052 = vmatpush.msra.mxu0 %v3039
        %3053 = vmatpush.msra.mxu0 %v3038
        %3054 = vmatpush.msra.mxu0 %v3037
        %3055 = vmatpush.msra.mxu0 %v3036
        %3056 = vmatpush.msra.mxu0 %v3035
        %3057 = vmatpush.msra.mxu0 %v3034
        %3058 = vmatpush.msra.mxu0 %v3033
        %3059 = vmatpush.msra.mxu0 %v3032
        %3060 = vmatpush.msra.mxu0 %v3031
        %3061 = vmatpush.msra.mxu0 %v3030
        %3062 = vmatmul.f32.gmra.mxu0 %v3028
        %v3063 = vpop.f32.mrf.mxu0
        %v3064 = vadd.f32 0.0, %v3063
        %3065 = vdwg.mxu0
        %v3066 = vadd.f32 %v3026, %v3064
        %s3067 = scalar_lea.vmem [#allocation2], 14
        %v3068 = vld [vmem:[%s3067] sm:$0x1]
        %s3069 = scalar_lea.vmem [#allocation9], 1792
        %v3070 = vld [vmem:[%s3069] sm:$0xff]
        %v3071 = vld [vmem:[%s3069 + $0x8] sm:$0xff]
        %v3072 = vld [vmem:[%s3069 + $0x10] sm:$0xff]
        %v3073 = vld [vmem:[%s3069 + $0x18] sm:$0xff]
        %v3074 = vld [vmem:[%s3069 + $0x20] sm:$0xff]
        %v3075 = vld [vmem:[%s3069 + $0x28] sm:$0xff]
        %v3076 = vld [vmem:[%s3069 + $0x30] sm:$0xff]
        %v3077 = vld [vmem:[%s3069 + $0x38] sm:$0xff]
        %v3078 = vld [vmem:[%s3069 + $0x40] sm:$0xff]
        %v3079 = vld [vmem:[%s3069 + $0x48] sm:$0xff]
        %v3080 = vld [vmem:[%s3069 + $0x50] sm:$0xff]
        %v3081 = vld [vmem:[%s3069 + $0x58] sm:$0xff]
        %v3082 = vld [vmem:[%s3069 + $0x60] sm:$0xff]
        %v3083 = vld [vmem:[%s3069 + $0x68] sm:$0xff]
        %v3084 = vld [vmem:[%s3069 + $0x70] sm:$0xff]
        %v3085 = vld [vmem:[%s3069 + $0x78] sm:$0xff]
        %3086 = vmatpush.msra.mxu0 %v3085
        %3087 = vmatpush.msra.mxu0 %v3084
        %3088 = vmatpush.msra.mxu0 %v3083
        %3089 = vmatpush.msra.mxu0 %v3082
        %3090 = vmatpush.msra.mxu0 %v3081
        %3091 = vmatpush.msra.mxu0 %v3080
        %3092 = vmatpush.msra.mxu0 %v3079
        %3093 = vmatpush.msra.mxu0 %v3078
        %3094 = vmatpush.msra.mxu0 %v3077
        %3095 = vmatpush.msra.mxu0 %v3076
        %3096 = vmatpush.msra.mxu0 %v3075
        %3097 = vmatpush.msra.mxu0 %v3074
        %3098 = vmatpush.msra.mxu0 %v3073
        %3099 = vmatpush.msra.mxu0 %v3072
        %3100 = vmatpush.msra.mxu0 %v3071
        %3101 = vmatpush.msra.mxu0 %v3070
        %3102 = vmatmul.f32.gmra.mxu0 %v3068
        %v3103 = vpop.f32.mrf.mxu0
        %v3104 = vadd.f32 0.0, %v3103
        %3105 = vdwg.mxu0
        %v3106 = vadd.f32 %v3066, %v3104
        %s3107 = scalar_lea.vmem [#allocation2], 15
        %v3108 = vld [vmem:[%s3107] sm:$0x1]
        %s3109 = scalar_lea.vmem [#allocation9], 1920
        %v3110 = vld [vmem:[%s3109] sm:$0xff]
        %v3111 = vld [vmem:[%s3109 + $0x8] sm:$0xff]
        %v3112 = vld [vmem:[%s3109 + $0x10] sm:$0xff]
        %v3113 = vld [vmem:[%s3109 + $0x18] sm:$0xff]
        %v3114 = vld [vmem:[%s3109 + $0x20] sm:$0xff]
        %v3115 = vld [vmem:[%s3109 + $0x28] sm:$0xff]
        %v3116 = vld [vmem:[%s3109 + $0x30] sm:$0xff]
        %v3117 = vld [vmem:[%s3109 + $0x38] sm:$0xff]
        %v3118 = vld [vmem:[%s3109 + $0x40] sm:$0xff]
        %v3119 = vld [vmem:[%s3109 + $0x48] sm:$0xff]
        %v3120 = vld [vmem:[%s3109 + $0x50] sm:$0xff]
        %v3121 = vld [vmem:[%s3109 + $0x58] sm:$0xff]
        %v3122 = vld [vmem:[%s3109 + $0x60] sm:$0xff]
        %v3123 = vld [vmem:[%s3109 + $0x68] sm:$0xff]
        %v3124 = vld [vmem:[%s3109 + $0x70] sm:$0xff]
        %v3125 = vld [vmem:[%s3109 + $0x78] sm:$0xff]
        %3126 = vmatpush.msra.mxu0 %v3125
        %3127 = vmatpush.msra.mxu0 %v3124
        %3128 = vmatpush.msra.mxu0 %v3123
        %3129 = vmatpush.msra.mxu0 %v3122
        %3130 = vmatpush.msra.mxu0 %v3121
        %3131 = vmatpush.msra.mxu0 %v3120
        %3132 = vmatpush.msra.mxu0 %v3119
        %3133 = vmatpush.msra.mxu0 %v3118
        %3134 = vmatpush.msra.mxu0 %v3117
        %3135 = vmatpush.msra.mxu0 %v3116
        %3136 = vmatpush.msra.mxu0 %v3115
        %3137 = vmatpush.msra.mxu0 %v3114
        %3138 = vmatpush.msra.mxu0 %v3113
        %3139 = vmatpush.msra.mxu0 %v3112
        %3140 = vmatpush.msra.mxu0 %v3111
        %3141 = vmatpush.msra.mxu0 %v3110
        %3142 = vmatmul.f32.gmra.mxu0 %v3108
        %v3143 = vpop.f32.mrf.mxu0
        %v3144 = vadd.f32 0.0, %v3143
        %3145 = vdwg.mxu0
        %v3146 = vadd.f32 %v3106, %v3144
        %v3147 = vld [vmem:[%s5] sm:$0x1]
        %v3148 = vadd.f32 %v3146, %v3147
        %3149 = vst [vmem:[%s321] sm:$0x1] %v3148
        %s3150 = sand.u32 %s164, 1
        %s3151 = scalar_lea.sflag [#allocation5], %s3150
        %s3152 = sand.u32 %s164, 1
        %s3153 = scalar_lea.vmem [#allocation11], %s3152
        // Predicated region
        $region61: #{tpu_custom_call.1} parent=43 // pred_check
          %p3154 = pneg %p174
        $region62: #{tpu_custom_call.1} parent=43 // pred_check_branch
          %3156 = sbr.rel (%p3154) target = $region64
        $region63: #{tpu_custom_call.1} parent=43 // pred_region
          %3158 = vsyncadd %s3151, 0
          %s3159 = scalar_lea.hbm %s6, %s25
          %s3161 = sshll.u32 %s3153, 4
          %s3162 = int_to_ptr.vmem [resolvable:$true] %s3161
          %s3163 = sshll.u32 %s3159, 4
          %s3164 = int_to_ptr.hbm [resolvable:$true] %s3163
          %3166 = dma.vmem_to_hbm [thread:$0]  %s3162, 16, %s3164, %s3151
        $region64: #{tpu_custom_call.1} parent=43 // pred_fallthru
          _
      $region44: #{tpu_custom_call.1} parent=5 // pred_fallthru
        _
      %p3167 = scmp.le.s32.totalorder 2, %s20
      // Predicated region
      $region65: #{tpu_custom_call.1} parent=5 // pred_check
        %p3168 = pneg %p3167
      $region66: #{tpu_custom_call.1} parent=5 // pred_check_branch
        %3170 = sbr.rel (%p3168) target = $region68
      $region67: #{tpu_custom_call.1} parent=5 // pred_region
        %s3171 = ssub.s32 %s20, 2
        // Predicated region
        $region69: #{tpu_custom_call.1} parent=67 // pred_check
          %p3172 = pneg %p180
        $region70: #{tpu_custom_call.1} parent=67 // pred_check_branch
          %3174 = sbr.rel (%p3172) target = $region72
        $region71: #{tpu_custom_call.1} parent=67 // pred_region
          %s3175 = sand.u32 %s165, 1
          %s3176 = scalar_lea.sflag [#allocation5], %s3175
          %s3177 = sand.u32 %s165, 1
          %s3178 = scalar_lea.vmem [#allocation11], %s3177
          %3180 = dma.done %s3176, 16
        $region72: #{tpu_custom_call.1} parent=67 // pred_fallthru
          _
      $region68: #{tpu_custom_call.1} parent=5 // pred_fallthru
        _
    $region6: #{tpu_custom_call.1} parent=1 // loop_footer
      %s24 = sadd.s32 1, %s20
    $region7: #{tpu_custom_call.1} parent=1 // loop_footer_branch
      %19 = sbr.rel target = $region3
    $region8: #{tpu_custom_call.1} parent=1 // loop_exit
      _
    %3181 = vsyncpa [#allocation4], 1
    %s3182 = scalar_lea.sflag [#allocation4], 1
    %3183 = vsyncpa %s3182, 1
    %3184 = vsyncpa [#allocation7], 1
    %3185 = vsyncpa [#allocation10], 1
    %3186 = vsyncpa [#allocation5], 1
    %s3187 = scalar_lea.sflag [#allocation5], 1
    %3188 = vsyncpa %s3187, 1

</llo_original>
